<compile_context>
chip_gen: v6e
topology: v6e:2x2x1
jax: 0.10.0
libtpu: 0.0.40
codegen_flags: <defaults>
</compile_context>

<pallas_src>
import numpy as np

import jax
import jax.numpy as jnp
from jax.experimental import pallas as pl
from jax.experimental.pallas import tpu as pltpu

LANES = 128


# ----------------------------------------------------------------------------
# Fused forward kernel: one grid step == one image.
# ----------------------------------------------------------------------------
def _lenet_kernel(x_ref, w1_ref, w2_ref, wf1_ref, wf2_ref, wf3_ref,
                  sel_ref, b_ref, out_ref, p1_ref):
    f32 = jnp.float32
    bf16 = jnp.bfloat16

    # Pre-packed 0/1 pooling selection matrices (exact, f32).
    she = sel_ref[0:16, 0:28]     # pooled row ip <- conv1 row 2*ip   (rows>=14 zero)
    sho = sel_ref[16:32, 0:28]    # pooled row ip <- conv1 row 2*ip+1
    s2e = sel_ref[32:40, 0:10]    # pooled row ip <- conv2 row 2*ip   (rows>=5 zero)
    s2o = sel_ref[40:48, 0:10]

    b1 = b_ref[0:1, :]            # conv1 bias, scanline lanes 6*jp+c (pad lanes 0)
    b2 = b_ref[1:2, :]            # conv2 bias, scanline lanes 16*jp+c
    bf1 = b_ref[2:3, :]
    bf2 = b_ref[3:4, :]
    bf3 = b_ref[4:5, :]

    # ---- conv1 (3->6, 5x5 valid) + 2x2 max-pool + bias + ReLU ---------------
    # x_ref: (32,128) f32, row = image row i, lane = 3*j + c (96 real lanes).
    # Output tile t covers conv1 output columns jo in [14*t, 14*t+13]; the
    # block-Toeplitz weight folds all 5 dj taps and all channels into one
    # matmul per (di, tile).
    p1 = None
    for t in range(2):
        acc = None
        for di in range(5):
            lhs = x_ref[pl.ds(di, 28), :].astype(bf16)                 # (28,128)
            rhs = w1_ref[pl.ds((di * 2 + t) * LANES, LANES), :]        # (128,128) bf16
            d = jnp.dot(lhs, rhs, preferred_element_type=f32)
            acc = d if acc is None else acc + d                        # (28,128) f32
        # H-row pair max (selector rows 14/15 are zero -> pooled rows 14/15 = 0).
        m = jnp.maximum(jnp.dot(she, acc, preferred_element_type=f32),
                        jnp.dot(sho, acc, preferred_element_type=f32))  # (16,128)
        # adjacent-column max: lane l vs l+6   (shift 122 == -6 mod 128, XLU).
        mc = jnp.maximum(m, pltpu.roll(m, shift=122, axis=1))
        # select even columns, scatter to pooled scanline lanes 6*(jp + 7t) + c.
        csel = sel_ref[pl.ds(48 + t * LANES, LANES), :]                 # (128,128)
        part = jnp.dot(mc, csel, preferred_element_type=f32)            # (16,128)
        p1 = part if p1 is None else p1 + part
    # bias + ReLU commute with max-pool.  Pad lanes stay exactly 0 (weights and
    # bias zero-padded); rows 14/15 hold relu(bias) but conv2 only reads rows 0..13.
    p1_ref[...] = jnp.maximum(p1 + b1, 0.0)

    # ---- conv2 (6->16, 5x5 valid) + 2x2 max-pool + bias + ReLU --------------
    # p1_ref: (16,128) f32, row = pooled row ip, lane = 6*jp + c (84 real).
    # Tile 0 = conv2 output columns 0..5, tile 1 = columns 6..9, chosen so the
    # 2x2 pooling column pairs never straddle a tile.
    p2 = None
    for t in range(2):
        acc = None
        for di in range(5):
            lhs = p1_ref[pl.ds(di, 10), :].astype(bf16)                # (10,128)
            rhs = w2_ref[pl.ds((di * 2 + t) * LANES, LANES), :]
            d = jnp.dot(lhs, rhs, preferred_element_type=f32)
            acc = d if acc is None else acc + d                        # (10,128)
        m = jnp.maximum(jnp.dot(s2e, acc, preferred_element_type=f32),
                        jnp.dot(s2o, acc, preferred_element_type=f32))  # (8,128)
        mc = jnp.maximum(m, pltpu.roll(m, shift=112, axis=1))           # l vs l+16
        csel = sel_ref[pl.ds(304 + t * LANES, LANES), :]
        part = jnp.dot(mc, csel, preferred_element_type=f32)            # (8,128)
        p2 = part if p2 is None else p2 + part
    p2 = jnp.maximum(p2 + b2, 0.0)        # rows 0..4 real, lane = 16*jp + c (80 real)

    # ---- fc1: 16*5*5 -> 120 (one (1,128)x(128,128) matmul per pooled row) ---
    acc = None
    for i in range(5):
        lhs = p2[i:i + 1, :].astype(bf16)                              # (1,128)
        rhs = wf1_ref[pl.ds(i * LANES, LANES), :]
        d = jnp.dot(lhs, rhs, preferred_element_type=f32)
        acc = d if acc is None else acc + d
    h1 = jnp.maximum(acc + bf1, 0.0).astype(bf16)                      # (1,128)

    # ---- fc2 / fc3 -----------------------------------------------------------
    h2 = jnp.maximum(
        jnp.dot(h1, wf2_ref[...], preferred_element_type=f32) + bf2, 0.0
    ).astype(bf16)
    h3 = jnp.dot(h2, wf3_ref[...], preferred_element_type=f32) + bf3   # (1,128)

    # lane-dense full-block store; logits live in row 0, lanes 0..9.
    out_ref[0] = jnp.broadcast_to(h3, (8, LANES))


# ----------------------------------------------------------------------------
# Wrapper: per-image grid, weights/selectors DMA'd once per core.
# ----------------------------------------------------------------------------
def _lenet_pallas(xs, w, B):
    return pl.pallas_call(
        _lenet_kernel,
        out_shape=jax.ShapeDtypeStruct((B, 8, LANES), jnp.float32),
        grid=(B,),
        in_specs=[
            pl.BlockSpec((32, LANES), lambda b: (b, 0)),            # x (per image)
            pl.BlockSpec((10 * LANES, LANES), lambda b: (0, 0)),    # conv1 weights
            pl.BlockSpec((10 * LANES, LANES), lambda b: (0, 0)),    # conv2 weights
            pl.BlockSpec((5 * LANES, LANES), lambda b: (0, 0)),     # fc1 weights
            pl.BlockSpec((LANES, LANES), lambda b: (0, 0)),         # fc2 weights
            pl.BlockSpec((LANES, LANES), lambda b: (0, 0)),         # fc3 weights
            pl.BlockSpec((560, LANES), lambda b: (0, 0)),           # pool selectors
            pl.BlockSpec((8, LANES), lambda b: (0, 0)),             # biases
        ],
        out_specs=pl.BlockSpec((1, 8, LANES), lambda b: (b, 0, 0)),
        scratch_shapes=[pltpu.VMEM((16, LANES), jnp.float32)],      # pool1 output
        compiler_params=pltpu.CompilerParams(
            dimension_semantics=("parallel",),
        ),
    )(xs, w["w1"], w["w2"], w["wf1"], w["wf2"], w["wf3"], w["sel"], w["biases"])


def net_forward(x, prepped):
    """x: (B, 3, 32, 32) NCHW float32; prepped = prepare_params(init_params(...))."""
    B = x.shape[0]
    assert x.shape[1:] == (3, 32, 32), x.shape
    # NCHW -> scanline: row = b*32 + i, lane = 3*j + c (96 real lanes, pad to 128).
    xs = jnp.transpose(x, (0, 2, 3, 1)).reshape(B * 32, 96)
    xs = jnp.pad(xs, ((0, 0), (0, LANES - 96))).astype(jnp.float32)
    out = _lenet_pallas(xs, prepped, B)
    return out[:, 0, :10]


# ----------------------------------------------------------------------------
# Parameters: torch-layout init + one-time lane-dense repacking.
# ----------------------------------------------------------------------------
def init_params(key):
    def uinit(k, shape, fan_in):
        bound = 1.0 / jnp.sqrt(fan_in)
        return jax.random.uniform(k, shape, jnp.float32, -bound, bound)

    keys = jax.random.split(key, 10)
    p = {}
    p["w1"] = uinit(keys[0], (6, 3, 5, 5), 3 * 5 * 5)
    p["b1"] = uinit(keys[1], (6,), 3 * 5 * 5)
    p["w2"] = uinit(keys[2], (16, 6, 5, 5), 6 * 5 * 5)
    p["b2"] = uinit(keys[3], (16,), 6 * 5 * 5)
    p["fc1_w"] = uinit(keys[4], (120, 400), 400)   # torch Linear: (out, in)
    p["fc1_b"] = uinit(keys[5], (120,), 400)
    p["fc2_w"] = uinit(keys[6], (84, 120), 120)
    p["fc2_b"] = uinit(keys[7], (84,), 120)
    p["fc3_w"] = uinit(keys[8], (10, 84), 84)
    p["fc3_b"] = uinit(keys[9], (10,), 84)
    return p


def _conv_toeplitz_blocks(w, in_cols, out_cols, tiles):
    """Pack a torch-layout conv weight (Cout, Cin, 5, 5) into per-(di, column
    tile) block-Toeplitz scanline matmul weights.

    Block [di, t][j*Cin + c, (jo - tiles[t][0])*Cout + co] = w[co, c, di, j - jo]
    (zero when j - jo is outside 0..4).  Returns (5 * len(tiles) * 128, 128)."""
    cout, cin, kh, kw = w.shape
    j = np.arange(in_cols)
    jo = np.arange(out_cols)
    dj = j[:, None] - jo[None, :]                       # (in_cols, out_cols)
    valid = jnp.asarray((dj >= 0) & (dj < kw), w.dtype)
    djc = np.clip(dj, 0, kw - 1)
    wt = jnp.transpose(w, (2, 1, 0, 3))                 # (di, c, co, dj)
    g = wt[:, :, :, djc] * valid[None, None, None]      # (di, c, co, j, jo)
    big = jnp.transpose(g, (0, 3, 1, 4, 2))             # (di, j, c, jo, co)
    big = big.reshape(kh, in_cols * cin, out_cols * cout)
    blocks = []
    for c0, cn in tiles:
        blk = big[:, :, c0 * cout:(c0 + cn) * cout]
        blk = jnp.pad(blk, ((0, 0),
                            (0, LANES - in_cols * cin),
                            (0, LANES - cn * cout)))
        blocks.append(blk)
    out = jnp.stack(blocks, axis=1)                     # (5, n_tiles, 128, 128)
    return out.reshape(kh * len(tiles) * LANES, LANES)


def _pool_selectors():
    """All max-pool row/column 0/1 selection matrices packed into (560,128) f32."""
    S = np.zeros((560, LANES), np.float32)
    # pool1 H-row selectors (16,28): even / odd conv1 rows.
    for ip in range(14):
        S[ip, 2 * ip] = 1.0
        S[16 + ip, 2 * ip + 1] = 1.0
    # pool2 H-row selectors (8,10).
    for ip in range(5):
        S[32 + ip, 2 * ip] = 1.0
        S[40 + ip, 2 * ip + 1] = 1.0
    # pool1 column selectors (per conv1 tile): after the lane roll, lane
    # 12*jp + c holds max(cols 2jp, 2jp+1); route it to pooled lane 6*(jp+7t)+c.
    for t in range(2):
        for jp in range(7):
            for c in range(6):
                S[48 + t * LANES + 12 * jp + c, 6 * (jp + 7 * t) + c] = 1.0
    # pool2 column selectors: tile0 (conv cols 0..5 -> pooled 0..2),
    # tile1 (conv cols 6..9 -> pooled 3..4); lane 32*k + c -> pooled 16*(k+off)+c.
    for k in range(3):
        for c in range(16):
            S[304 + 32 * k + c, 16 * k + c] = 1.0
    for k in range(2):
        for c in range(16):
            S[432 + 32 * k + c, 16 * (k + 3) + c] = 1.0
    return jnp.asarray(S)


def prepare_params(p):
    """One-time repack of torch-layout weights into the kernel's lane-dense,
    bf16, block-Toeplitz scanline layout (plus f32 pooling selectors/biases)."""
    bf16 = jnp.bfloat16
    f32 = jnp.float32

    w1 = _conv_toeplitz_blocks(p["w1"], 32, 28, [(0, 14), (14, 14)]).astype(bf16)
    w2 = _conv_toeplitz_blocks(p["w2"], 14, 10, [(0, 6), (6, 4)]).astype(bf16)

    # fc1: torch (120, 400), input index = co2*25 + i2p*5 + j2p -> per-row blocks.
    wf1 = p["fc1_w"].reshape(120, 16, 5, 5)          # (o, co2, i2p, j2p)
    wf1 = jnp.transpose(wf1, (2, 3, 1, 0))           # (i2p, j2p, co2, o)
    wf1 = wf1.reshape(5, 80, 120)
    wf1 = jnp.pad(wf1, ((0, 0), (0, 48), (0, 8))).reshape(5 * LANES, LANES)
    wf1 = wf1.astype(bf16)

    wf2 = jnp.pad(p["fc2_w"].T, ((0, 8), (0, 44))).astype(bf16)
    wf3 = jnp.pad(p["fc3_w"].T, ((0, 44), (0, 118))).astype(bf16)

    b1 = jnp.pad(jnp.tile(p["b1"], 14), (0, 44))     # lane 6*jp + c  -> b1[c]
    b2 = jnp.pad(jnp.tile(p["b2"], 5), (0, 48))      # lane 16*jp + c -> b2[c]
    bf1 = jnp.pad(p["fc1_b"], (0, 8))
    bf2 = jnp.pad(p["fc2_b"], (0, 44))
    bf3 = jnp.pad(p["fc3_b"], (0, 118))
    z = jnp.zeros((LANES,), f32)
    biases = jnp.stack([b1, b2, bf1, bf2, bf3, z, z, z]).astype(f32)

    return dict(w1=w1, w2=w2, wf1=wf1, wf2=wf2, wf3=wf3,
                sel=_pool_selectors(), biases=biases)


if __name__ == "__main__":
    key = jax.random.PRNGKey(0)
    k_x, k_p = jax.random.split(key)
    x = jax.random.normal(k_x, (2, 3, 32, 32), jnp.float32)
    params = init_params(k_p)
    prepped = prepare_params(params)   # one-time weight repack

    fwd = jax.jit(net_forward)
    out = jax.block_until_ready(fwd(x, prepped))

    assert out.shape == (2, 10), out.shape
    assert bool(jnp.all(jnp.isfinite(out)))
    print("KERNEL_OK")
</pallas_src>

<mosaic_0001>
module attributes {stable_mosaic.version = 11 : i64} {
  func.func @_lenet_kernel(%arg0: i32, %arg1: memref<32x128xf32, #tpu.memory_space<vmem>>, %arg2: memref<1280x128xbf16, #tpu.memory_space<vmem>>, %arg3: memref<1280x128xbf16, #tpu.memory_space<vmem>>, %arg4: memref<640x128xbf16, #tpu.memory_space<vmem>>, %arg5: memref<128x128xbf16, #tpu.memory_space<vmem>>, %arg6: memref<128x128xbf16, #tpu.memory_space<vmem>>, %arg7: memref<560x128xf32, #tpu.memory_space<vmem>>, %arg8: memref<8x128xf32, #tpu.memory_space<vmem>>, %arg9: memref<1x8x128xf32, #tpu.memory_space<vmem>>, %arg10: memref<16x128xf32, #tpu.memory_space<vmem>>) attributes {dimension_semantics = [#tpu.dimension_semantics<parallel>], iteration_bounds = array<i64: 2>, scalar_prefetch = 0 : i64, scratch_operands = 1 : i64, tpu.core_type = #tpu.core_type<tc>, window_params = [{transform_indices = @transform_0, window_bounds = array<i64: 32, 128>}, {pipeline_mode = #tpu.pipeline_mode<synchronous>, transform_indices = @transform_1, window_bounds = array<i64: 1280, 128>}, {pipeline_mode = #tpu.pipeline_mode<synchronous>, transform_indices = @transform_2, window_bounds = array<i64: 1280, 128>}, {pipeline_mode = #tpu.pipeline_mode<synchronous>, transform_indices = @transform_3, window_bounds = array<i64: 640, 128>}, {pipeline_mode = #tpu.pipeline_mode<synchronous>, transform_indices = @transform_4, window_bounds = array<i64: 128, 128>}, {pipeline_mode = #tpu.pipeline_mode<synchronous>, transform_indices = @transform_5, window_bounds = array<i64: 128, 128>}, {pipeline_mode = #tpu.pipeline_mode<synchronous>, transform_indices = @transform_6, window_bounds = array<i64: 560, 128>}, {pipeline_mode = #tpu.pipeline_mode<synchronous>, transform_indices = @transform_7, window_bounds = array<i64: 8, 128>}, {transform_indices = @transform_8, window_bounds = array<i64: 1, 8, 128>}]} {
    %c0 = arith.constant 0 : index
    %c0_0 = arith.constant 0 : index
    %0 = vector.load %arg7[%c0, %c0_0] : memref<560x128xf32, #tpu.memory_space<vmem>>, vector<16x28xf32>
    %c16 = arith.constant 16 : index
    %c0_1 = arith.constant 0 : index
    %1 = vector.load %arg7[%c16, %c0_1] : memref<560x128xf32, #tpu.memory_space<vmem>>, vector<16x28xf32>
    %c32 = arith.constant 32 : index
    %c0_2 = arith.constant 0 : index
    %2 = vector.load %arg7[%c32, %c0_2] : memref<560x128xf32, #tpu.memory_space<vmem>>, vector<8x10xf32>
    %c40 = arith.constant 40 : index
    %c0_3 = arith.constant 0 : index
    %3 = vector.load %arg7[%c40, %c0_3] : memref<560x128xf32, #tpu.memory_space<vmem>>, vector<8x10xf32>
    %c0_4 = arith.constant 0 : index
    %c0_5 = arith.constant 0 : index
    %4 = vector.load %arg8[%c0_4, %c0_5] : memref<8x128xf32, #tpu.memory_space<vmem>>, vector<1x128xf32>
    %c1 = arith.constant 1 : index
    %c0_6 = arith.constant 0 : index
    %5 = vector.load %arg8[%c1, %c0_6] : memref<8x128xf32, #tpu.memory_space<vmem>>, vector<1x128xf32>
    %c2 = arith.constant 2 : index
    %c0_7 = arith.constant 0 : index
    %6 = vector.load %arg8[%c2, %c0_7] : memref<8x128xf32, #tpu.memory_space<vmem>>, vector<1x128xf32>
    %c3 = arith.constant 3 : index
    %c0_8 = arith.constant 0 : index
    %7 = vector.load %arg8[%c3, %c0_8] : memref<8x128xf32, #tpu.memory_space<vmem>>, vector<1x128xf32>
    %c4 = arith.constant 4 : index
    %c0_9 = arith.constant 0 : index
    %8 = vector.load %arg8[%c4, %c0_9] : memref<8x128xf32, #tpu.memory_space<vmem>>, vector<1x128xf32>
    %c0_10 = arith.constant 0 : index
    %c0_11 = arith.constant 0 : index
    %9 = vector.load %arg1[%c0_10, %c0_11] : memref<32x128xf32, #tpu.memory_space<vmem>>, vector<28x128xf32>
    %10 = arith.truncf %9 : vector<28x128xf32> to vector<28x128xbf16>
    %c0_12 = arith.constant 0 : index
    %c0_13 = arith.constant 0 : index
    %11 = vector.load %arg2[%c0_12, %c0_13] : memref<1280x128xbf16, #tpu.memory_space<vmem>>, vector<128x128xbf16>
    %cst = arith.constant dense<0.000000e+00> : vector<28x128xf32>
    %12 = tpu.matmul %10, %11, %cst {dimension_numbers = #tpu.dot_dimension_numbers<[1], [0], [0], [1], [0, 0, 1, 1], [], []>} : vector<28x128xbf16>, vector<128x128xbf16>, vector<28x128xf32> -> vector<28x128xf32>
    %c1_14 = arith.constant 1 : index
    %c0_15 = arith.constant 0 : index
    %13 = vector.load %arg1[%c1_14, %c0_15] : memref<32x128xf32, #tpu.memory_space<vmem>>, vector<28x128xf32>
    %14 = arith.truncf %13 : vector<28x128xf32> to vector<28x128xbf16>
    %c256 = arith.constant 256 : index
    %c0_16 = arith.constant 0 : index
    %15 = vector.load %arg2[%c256, %c0_16] : memref<1280x128xbf16, #tpu.memory_space<vmem>>, vector<128x128xbf16>
    %cst_17 = arith.constant dense<0.000000e+00> : vector<28x128xf32>
    %16 = tpu.matmul %14, %15, %cst_17 {dimension_numbers = #tpu.dot_dimension_numbers<[1], [0], [0], [1], [0, 0, 1, 1], [], []>} : vector<28x128xbf16>, vector<128x128xbf16>, vector<28x128xf32> -> vector<28x128xf32>
    %17 = arith.addf %12, %16 : vector<28x128xf32>
    %c2_18 = arith.constant 2 : index
    %c0_19 = arith.constant 0 : index
    %18 = vector.load %arg1[%c2_18, %c0_19] : memref<32x128xf32, #tpu.memory_space<vmem>>, vector<28x128xf32>
    %19 = arith.truncf %18 : vector<28x128xf32> to vector<28x128xbf16>
    %c512 = arith.constant 512 : index
    %c0_20 = arith.constant 0 : index
    %20 = vector.load %arg2[%c512, %c0_20] : memref<1280x128xbf16, #tpu.memory_space<vmem>>, vector<128x128xbf16>
    %cst_21 = arith.constant dense<0.000000e+00> : vector<28x128xf32>
    %21 = tpu.matmul %19, %20, %cst_21 {dimension_numbers = #tpu.dot_dimension_numbers<[1], [0], [0], [1], [0, 0, 1, 1], [], []>} : vector<28x128xbf16>, vector<128x128xbf16>, vector<28x128xf32> -> vector<28x128xf32>
    %22 = arith.addf %17, %21 : vector<28x128xf32>
    %c3_22 = arith.constant 3 : index
    %c0_23 = arith.constant 0 : index
    %23 = vector.load %arg1[%c3_22, %c0_23] : memref<32x128xf32, #tpu.memory_space<vmem>>, vector<28x128xf32>
    %24 = arith.truncf %23 : vector<28x128xf32> to vector<28x128xbf16>
    %c768 = arith.constant 768 : index
    %c0_24 = arith.constant 0 : index
    %25 = vector.load %arg2[%c768, %c0_24] : memref<1280x128xbf16, #tpu.memory_space<vmem>>, vector<128x128xbf16>
    %cst_25 = arith.constant dense<0.000000e+00> : vector<28x128xf32>
    %26 = tpu.matmul %24, %25, %cst_25 {dimension_numbers = #tpu.dot_dimension_numbers<[1], [0], [0], [1], [0, 0, 1, 1], [], []>} : vector<28x128xbf16>, vector<128x128xbf16>, vector<28x128xf32> -> vector<28x128xf32>
    %27 = arith.addf %22, %26 : vector<28x128xf32>
    %c4_26 = arith.constant 4 : index
    %c0_27 = arith.constant 0 : index
    %28 = vector.load %arg1[%c4_26, %c0_27] : memref<32x128xf32, #tpu.memory_space<vmem>>, vector<28x128xf32>
    %29 = arith.truncf %28 : vector<28x128xf32> to vector<28x128xbf16>
    %c1024 = arith.constant 1024 : index
    %c0_28 = arith.constant 0 : index
    %30 = vector.load %arg2[%c1024, %c0_28] : memref<1280x128xbf16, #tpu.memory_space<vmem>>, vector<128x128xbf16>
    %cst_29 = arith.constant dense<0.000000e+00> : vector<28x128xf32>
    %31 = tpu.matmul %29, %30, %cst_29 {dimension_numbers = #tpu.dot_dimension_numbers<[1], [0], [0], [1], [0, 0, 1, 1], [], []>} : vector<28x128xbf16>, vector<128x128xbf16>, vector<28x128xf32> -> vector<28x128xf32>
    %32 = arith.addf %27, %31 : vector<28x128xf32>
    %cst_30 = arith.constant dense<0.000000e+00> : vector<16x128xf32>
    %33 = tpu.matmul %0, %32, %cst_30 {dimension_numbers = #tpu.dot_dimension_numbers<[1], [0], [0], [1], [0, 0, 1, 1], [], []>} : vector<16x28xf32>, vector<28x128xf32>, vector<16x128xf32> -> vector<16x128xf32>
    %cst_31 = arith.constant dense<0.000000e+00> : vector<16x128xf32>
    %34 = tpu.matmul %1, %32, %cst_31 {dimension_numbers = #tpu.dot_dimension_numbers<[1], [0], [0], [1], [0, 0, 1, 1], [], []>} : vector<16x28xf32>, vector<28x128xf32>, vector<16x128xf32> -> vector<16x128xf32>
    %35 = arith.maximumf %33, %34 : vector<16x128xf32>
    %c122_i32 = arith.constant 122 : i32
    %36 = tpu.dynamic_rotate %35 by %c122_i32 dim 1 : vector<16x128xf32>, i32 -> vector<16x128xf32>
    %37 = arith.maximumf %35, %36 : vector<16x128xf32>
    %c48 = arith.constant 48 : index
    %c0_32 = arith.constant 0 : index
    %38 = vector.load %arg7[%c48, %c0_32] : memref<560x128xf32, #tpu.memory_space<vmem>>, vector<128x128xf32>
    %cst_33 = arith.constant dense<0.000000e+00> : vector<16x128xf32>
    %39 = tpu.matmul %37, %38, %cst_33 {dimension_numbers = #tpu.dot_dimension_numbers<[1], [0], [0], [1], [0, 0, 1, 1], [], []>} : vector<16x128xf32>, vector<128x128xf32>, vector<16x128xf32> -> vector<16x128xf32>
    %c0_34 = arith.constant 0 : index
    %c0_35 = arith.constant 0 : index
    %40 = vector.load %arg1[%c0_34, %c0_35] : memref<32x128xf32, #tpu.memory_space<vmem>>, vector<28x128xf32>
    %41 = arith.truncf %40 : vector<28x128xf32> to vector<28x128xbf16>
    %c128 = arith.constant 128 : index
    %c0_36 = arith.constant 0 : index
    %42 = vector.load %arg2[%c128, %c0_36] : memref<1280x128xbf16, #tpu.memory_space<vmem>>, vector<128x128xbf16>
    %cst_37 = arith.constant dense<0.000000e+00> : vector<28x128xf32>
    %43 = tpu.matmul %41, %42, %cst_37 {dimension_numbers = #tpu.dot_dimension_numbers<[1], [0], [0], [1], [0, 0, 1, 1], [], []>} : vector<28x128xbf16>, vector<128x128xbf16>, vector<28x128xf32> -> vector<28x128xf32>
    %c1_38 = arith.constant 1 : index
    %c0_39 = arith.constant 0 : index
    %44 = vector.load %arg1[%c1_38, %c0_39] : memref<32x128xf32, #tpu.memory_space<vmem>>, vector<28x128xf32>
    %45 = arith.truncf %44 : vector<28x128xf32> to vector<28x128xbf16>
    %c384 = arith.constant 384 : index
    %c0_40 = arith.constant 0 : index
    %46 = vector.load %arg2[%c384, %c0_40] : memref<1280x128xbf16, #tpu.memory_space<vmem>>, vector<128x128xbf16>
    %cst_41 = arith.constant dense<0.000000e+00> : vector<28x128xf32>
    %47 = tpu.matmul %45, %46, %cst_41 {dimension_numbers = #tpu.dot_dimension_numbers<[1], [0], [0], [1], [0, 0, 1, 1], [], []>} : vector<28x128xbf16>, vector<128x128xbf16>, vector<28x128xf32> -> vector<28x128xf32>
    %48 = arith.addf %43, %47 : vector<28x128xf32>
    %c2_42 = arith.constant 2 : index
    %c0_43 = arith.constant 0 : index
    %49 = vector.load %arg1[%c2_42, %c0_43] : memref<32x128xf32, #tpu.memory_space<vmem>>, vector<28x128xf32>
    %50 = arith.truncf %49 : vector<28x128xf32> to vector<28x128xbf16>
    %c640 = arith.constant 640 : index
    %c0_44 = arith.constant 0 : index
    %51 = vector.load %arg2[%c640, %c0_44] : memref<1280x128xbf16, #tpu.memory_space<vmem>>, vector<128x128xbf16>
    %cst_45 = arith.constant dense<0.000000e+00> : vector<28x128xf32>
    %52 = tpu.matmul %50, %51, %cst_45 {dimension_numbers = #tpu.dot_dimension_numbers<[1], [0], [0], [1], [0, 0, 1, 1], [], []>} : vector<28x128xbf16>, vector<128x128xbf16>, vector<28x128xf32> -> vector<28x128xf32>
    %53 = arith.addf %48, %52 : vector<28x128xf32>
    %c3_46 = arith.constant 3 : index
    %c0_47 = arith.constant 0 : index
    %54 = vector.load %arg1[%c3_46, %c0_47] : memref<32x128xf32, #tpu.memory_space<vmem>>, vector<28x128xf32>
    %55 = arith.truncf %54 : vector<28x128xf32> to vector<28x128xbf16>
    %c896 = arith.constant 896 : index
    %c0_48 = arith.constant 0 : index
    %56 = vector.load %arg2[%c896, %c0_48] : memref<1280x128xbf16, #tpu.memory_space<vmem>>, vector<128x128xbf16>
    %cst_49 = arith.constant dense<0.000000e+00> : vector<28x128xf32>
    %57 = tpu.matmul %55, %56, %cst_49 {dimension_numbers = #tpu.dot_dimension_numbers<[1], [0], [0], [1], [0, 0, 1, 1], [], []>} : vector<28x128xbf16>, vector<128x128xbf16>, vector<28x128xf32> -> vector<28x128xf32>
    %58 = arith.addf %53, %57 : vector<28x128xf32>
    %c4_50 = arith.constant 4 : index
    %c0_51 = arith.constant 0 : index
    %59 = vector.load %arg1[%c4_50, %c0_51] : memref<32x128xf32, #tpu.memory_space<vmem>>, vector<28x128xf32>
    %60 = arith.truncf %59 : vector<28x128xf32> to vector<28x128xbf16>
    %c1152 = arith.constant 1152 : index
    %c0_52 = arith.constant 0 : index
    %61 = vector.load %arg2[%c1152, %c0_52] : memref<1280x128xbf16, #tpu.memory_space<vmem>>, vector<128x128xbf16>
    %cst_53 = arith.constant dense<0.000000e+00> : vector<28x128xf32>
    %62 = tpu.matmul %60, %61, %cst_53 {dimension_numbers = #tpu.dot_dimension_numbers<[1], [0], [0], [1], [0, 0, 1, 1], [], []>} : vector<28x128xbf16>, vector<128x128xbf16>, vector<28x128xf32> -> vector<28x128xf32>
    %63 = arith.addf %58, %62 : vector<28x128xf32>
    %cst_54 = arith.constant dense<0.000000e+00> : vector<16x128xf32>
    %64 = tpu.matmul %0, %63, %cst_54 {dimension_numbers = #tpu.dot_dimension_numbers<[1], [0], [0], [1], [0, 0, 1, 1], [], []>} : vector<16x28xf32>, vector<28x128xf32>, vector<16x128xf32> -> vector<16x128xf32>
    %cst_55 = arith.constant dense<0.000000e+00> : vector<16x128xf32>
    %65 = tpu.matmul %1, %63, %cst_55 {dimension_numbers = #tpu.dot_dimension_numbers<[1], [0], [0], [1], [0, 0, 1, 1], [], []>} : vector<16x28xf32>, vector<28x128xf32>, vector<16x128xf32> -> vector<16x128xf32>
    %66 = arith.maximumf %64, %65 : vector<16x128xf32>
    %c122_i32_56 = arith.constant 122 : i32
    %67 = tpu.dynamic_rotate %66 by %c122_i32_56 dim 1 : vector<16x128xf32>, i32 -> vector<16x128xf32>
    %68 = arith.maximumf %66, %67 : vector<16x128xf32>
    %c176 = arith.constant 176 : index
    %c0_57 = arith.constant 0 : index
    %69 = vector.load %arg7[%c176, %c0_57] : memref<560x128xf32, #tpu.memory_space<vmem>>, vector<128x128xf32>
    %cst_58 = arith.constant dense<0.000000e+00> : vector<16x128xf32>
    %70 = tpu.matmul %68, %69, %cst_58 {dimension_numbers = #tpu.dot_dimension_numbers<[1], [0], [0], [1], [0, 0, 1, 1], [], []>} : vector<16x128xf32>, vector<128x128xf32>, vector<16x128xf32> -> vector<16x128xf32>
    %71 = arith.addf %39, %70 : vector<16x128xf32>
    %72 = vector.broadcast %4 : vector<1x128xf32> to vector<16x128xf32>
    %73 = arith.addf %71, %72 : vector<16x128xf32>
    %cst_59 = arith.constant 0.000000e+00 : f32
    %74 = vector.broadcast %cst_59 : f32 to vector<16x128xf32>
    %75 = arith.maximumf %73, %74 : vector<16x128xf32>
    %c0_60 = arith.constant 0 : index
    %c0_61 = arith.constant 0 : index
    %76 = vector.load %arg10[%c0_60, %c0_61] : memref<16x128xf32, #tpu.memory_space<vmem>>, vector<16x128xf32>
    tpu.vector_store %arg10[%c0_60, %c0_61], %75 {strides = array<i32>} : memref<16x128xf32, #tpu.memory_space<vmem>>, vector<16x128xf32>,
    %c0_62 = arith.constant 0 : index
    %c0_63 = arith.constant 0 : index
    %77 = vector.load %arg10[%c0_62, %c0_63] : memref<16x128xf32, #tpu.memory_space<vmem>>, vector<10x128xf32>
    %78 = arith.truncf %77 : vector<10x128xf32> to vector<10x128xbf16>
    %c0_64 = arith.constant 0 : index
    %c0_65 = arith.constant 0 : index
    %79 = vector.load %arg3[%c0_64, %c0_65] : memref<1280x128xbf16, #tpu.memory_space<vmem>>, vector<128x128xbf16>
    %cst_66 = arith.constant dense<0.000000e+00> : vector<10x128xf32>
    %80 = tpu.matmul %78, %79, %cst_66 {dimension_numbers = #tpu.dot_dimension_numbers<[1], [0], [0], [1], [0, 0, 1, 1], [], []>} : vector<10x128xbf16>, vector<128x128xbf16>, vector<10x128xf32> -> vector<10x128xf32>
    %c1_67 = arith.constant 1 : index
    %c0_68 = arith.constant 0 : index
    %81 = vector.load %arg10[%c1_67, %c0_68] : memref<16x128xf32, #tpu.memory_space<vmem>>, vector<10x128xf32>
    %82 = arith.truncf %81 : vector<10x128xf32> to vector<10x128xbf16>
    %c256_69 = arith.constant 256 : index
    %c0_70 = arith.constant 0 : index
    %83 = vector.load %arg3[%c256_69, %c0_70] : memref<1280x128xbf16, #tpu.memory_space<vmem>>, vector<128x128xbf16>
    %cst_71 = arith.constant dense<0.000000e+00> : vector<10x128xf32>
    %84 = tpu.matmul %82, %83, %cst_71 {dimension_numbers = #tpu.dot_dimension_numbers<[1], [0], [0], [1], [0, 0, 1, 1], [], []>} : vector<10x128xbf16>, vector<128x128xbf16>, vector<10x128xf32> -> vector<10x128xf32>
    %85 = arith.addf %80, %84 : vector<10x128xf32>
    %c2_72 = arith.constant 2 : index
    %c0_73 = arith.constant 0 : index
    %86 = vector.load %arg10[%c2_72, %c0_73] : memref<16x128xf32, #tpu.memory_space<vmem>>, vector<10x128xf32>
    %87 = arith.truncf %86 : vector<10x128xf32> to vector<10x128xbf16>
    %c512_74 = arith.constant 512 : index
    %c0_75 = arith.constant 0 : index
    %88 = vector.load %arg3[%c512_74, %c0_75] : memref<1280x128xbf16, #tpu.memory_space<vmem>>, vector<128x128xbf16>
    %cst_76 = arith.constant dense<0.000000e+00> : vector<10x128xf32>
    %89 = tpu.matmul %87, %88, %cst_76 {dimension_numbers = #tpu.dot_dimension_numbers<[1], [0], [0], [1], [0, 0, 1, 1], [], []>} : vector<10x128xbf16>, vector<128x128xbf16>, vector<10x128xf32> -> vector<10x128xf32>
    %90 = arith.addf %85, %89 : vector<10x128xf32>
    %c3_77 = arith.constant 3 : index
    %c0_78 = arith.constant 0 : index
    %91 = vector.load %arg10[%c3_77, %c0_78] : memref<16x128xf32, #tpu.memory_space<vmem>>, vector<10x128xf32>
    %92 = arith.truncf %91 : vector<10x128xf32> to vector<10x128xbf16>
    %c768_79 = arith.constant 768 : index
    %c0_80 = arith.constant 0 : index
    %93 = vector.load %arg3[%c768_79, %c0_80] : memref<1280x128xbf16, #tpu.memory_space<vmem>>, vector<128x128xbf16>
    %cst_81 = arith.constant dense<0.000000e+00> : vector<10x128xf32>
    %94 = tpu.matmul %92, %93, %cst_81 {dimension_numbers = #tpu.dot_dimension_numbers<[1], [0], [0], [1], [0, 0, 1, 1], [], []>} : vector<10x128xbf16>, vector<128x128xbf16>, vector<10x128xf32> -> vector<10x128xf32>
    %95 = arith.addf %90, %94 : vector<10x128xf32>
    %c4_82 = arith.constant 4 : index
    %c0_83 = arith.constant 0 : index
    %96 = vector.load %arg10[%c4_82, %c0_83] : memref<16x128xf32, #tpu.memory_space<vmem>>, vector<10x128xf32>
    %97 = arith.truncf %96 : vector<10x128xf32> to vector<10x128xbf16>
    %c1024_84 = arith.constant 1024 : index
    %c0_85 = arith.constant 0 : index
    %98 = vector.load %arg3[%c1024_84, %c0_85] : memref<1280x128xbf16, #tpu.memory_space<vmem>>, vector<128x128xbf16>
    %cst_86 = arith.constant dense<0.000000e+00> : vector<10x128xf32>
    %99 = tpu.matmul %97, %98, %cst_86 {dimension_numbers = #tpu.dot_dimension_numbers<[1], [0], [0], [1], [0, 0, 1, 1], [], []>} : vector<10x128xbf16>, vector<128x128xbf16>, vector<10x128xf32> -> vector<10x128xf32>
    %100 = arith.addf %95, %99 : vector<10x128xf32>
    %cst_87 = arith.constant dense<0.000000e+00> : vector<8x128xf32>
    %101 = tpu.matmul %2, %100, %cst_87 {dimension_numbers = #tpu.dot_dimension_numbers<[1], [0], [0], [1], [0, 0, 1, 1], [], []>} : vector<8x10xf32>, vector<10x128xf32>, vector<8x128xf32> -> vector<8x128xf32>
    %cst_88 = arith.constant dense<0.000000e+00> : vector<8x128xf32>
    %102 = tpu.matmul %3, %100, %cst_88 {dimension_numbers = #tpu.dot_dimension_numbers<[1], [0], [0], [1], [0, 0, 1, 1], [], []>} : vector<8x10xf32>, vector<10x128xf32>, vector<8x128xf32> -> vector<8x128xf32>
    %103 = arith.maximumf %101, %102 : vector<8x128xf32>
    %c112_i32 = arith.constant 112 : i32
    %104 = tpu.dynamic_rotate %103 by %c112_i32 dim 1 : vector<8x128xf32>, i32 -> vector<8x128xf32>
    %105 = arith.maximumf %103, %104 : vector<8x128xf32>
    %c304 = arith.constant 304 : index
    %c0_89 = arith.constant 0 : index
    %106 = vector.load %arg7[%c304, %c0_89] : memref<560x128xf32, #tpu.memory_space<vmem>>, vector<128x128xf32>
    %cst_90 = arith.constant dense<0.000000e+00> : vector<8x128xf32>
    %107 = tpu.matmul %105, %106, %cst_90 {dimension_numbers = #tpu.dot_dimension_numbers<[1], [0], [0], [1], [0, 0, 1, 1], [], []>} : vector<8x128xf32>, vector<128x128xf32>, vector<8x128xf32> -> vector<8x128xf32>
    %c0_91 = arith.constant 0 : index
    %c0_92 = arith.constant 0 : index
    %108 = vector.load %arg10[%c0_91, %c0_92] : memref<16x128xf32, #tpu.memory_space<vmem>>, vector<10x128xf32>
    %109 = arith.truncf %108 : vector<10x128xf32> to vector<10x128xbf16>
    %c128_93 = arith.constant 128 : index
    %c0_94 = arith.constant 0 : index
    %110 = vector.load %arg3[%c128_93, %c0_94] : memref<1280x128xbf16, #tpu.memory_space<vmem>>, vector<128x128xbf16>
    %cst_95 = arith.constant dense<0.000000e+00> : vector<10x128xf32>
    %111 = tpu.matmul %109, %110, %cst_95 {dimension_numbers = #tpu.dot_dimension_numbers<[1], [0], [0], [1], [0, 0, 1, 1], [], []>} : vector<10x128xbf16>, vector<128x128xbf16>, vector<10x128xf32> -> vector<10x128xf32>
    %c1_96 = arith.constant 1 : index
    %c0_97 = arith.constant 0 : index
    %112 = vector.load %arg10[%c1_96, %c0_97] : memref<16x128xf32, #tpu.memory_space<vmem>>, vector<10x128xf32>
    %113 = arith.truncf %112 : vector<10x128xf32> to vector<10x128xbf16>
    %c384_98 = arith.constant 384 : index
    %c0_99 = arith.constant 0 : index
    %114 = vector.load %arg3[%c384_98, %c0_99] : memref<1280x128xbf16, #tpu.memory_space<vmem>>, vector<128x128xbf16>
    %cst_100 = arith.constant dense<0.000000e+00> : vector<10x128xf32>
    %115 = tpu.matmul %113, %114, %cst_100 {dimension_numbers = #tpu.dot_dimension_numbers<[1], [0], [0], [1], [0, 0, 1, 1], [], []>} : vector<10x128xbf16>, vector<128x128xbf16>, vector<10x128xf32> -> vector<10x128xf32>
    %116 = arith.addf %111, %115 : vector<10x128xf32>
    %c2_101 = arith.constant 2 : index
    %c0_102 = arith.constant 0 : index
    %117 = vector.load %arg10[%c2_101, %c0_102] : memref<16x128xf32, #tpu.memory_space<vmem>>, vector<10x128xf32>
    %118 = arith.truncf %117 : vector<10x128xf32> to vector<10x128xbf16>
    %c640_103 = arith.constant 640 : index
    %c0_104 = arith.constant 0 : index
    %119 = vector.load %arg3[%c640_103, %c0_104] : memref<1280x128xbf16, #tpu.memory_space<vmem>>, vector<128x128xbf16>
    %cst_105 = arith.constant dense<0.000000e+00> : vector<10x128xf32>
    %120 = tpu.matmul %118, %119, %cst_105 {dimension_numbers = #tpu.dot_dimension_numbers<[1], [0], [0], [1], [0, 0, 1, 1], [], []>} : vector<10x128xbf16>, vector<128x128xbf16>, vector<10x128xf32> -> vector<10x128xf32>
    %121 = arith.addf %116, %120 : vector<10x128xf32>
    %c3_106 = arith.constant 3 : index
    %c0_107 = arith.constant 0 : index
    %122 = vector.load %arg10[%c3_106, %c0_107] : memref<16x128xf32, #tpu.memory_space<vmem>>, vector<10x128xf32>
    %123 = arith.truncf %122 : vector<10x128xf32> to vector<10x128xbf16>
    %c896_108 = arith.constant 896 : index
    %c0_109 = arith.constant 0 : index
    %124 = vector.load %arg3[%c896_108, %c0_109] : memref<1280x128xbf16, #tpu.memory_space<vmem>>, vector<128x128xbf16>
    %cst_110 = arith.constant dense<0.000000e+00> : vector<10x128xf32>
    %125 = tpu.matmul %123, %124, %cst_110 {dimension_numbers = #tpu.dot_dimension_numbers<[1], [0], [0], [1], [0, 0, 1, 1], [], []>} : vector<10x128xbf16>, vector<128x128xbf16>, vector<10x128xf32> -> vector<10x128xf32>
    %126 = arith.addf %121, %125 : vector<10x128xf32>
    %c4_111 = arith.constant 4 : index
    %c0_112 = arith.constant 0 : index
    %127 = vector.load %arg10[%c4_111, %c0_112] : memref<16x128xf32, #tpu.memory_space<vmem>>, vector<10x128xf32>
    %128 = arith.truncf %127 : vector<10x128xf32> to vector<10x128xbf16>
    %c1152_113 = arith.constant 1152 : index
    %c0_114 = arith.constant 0 : index
    %129 = vector.load %arg3[%c1152_113, %c0_114] : memref<1280x128xbf16, #tpu.memory_space<vmem>>, vector<128x128xbf16>
    %cst_115 = arith.constant dense<0.000000e+00> : vector<10x128xf32>
    %130 = tpu.matmul %128, %129, %cst_115 {dimension_numbers = #tpu.dot_dimension_numbers<[1], [0], [0], [1], [0, 0, 1, 1], [], []>} : vector<10x128xbf16>, vector<128x128xbf16>, vector<10x128xf32> -> vector<10x128xf32>
    %131 = arith.addf %126, %130 : vector<10x128xf32>
    %cst_116 = arith.constant dense<0.000000e+00> : vector<8x128xf32>
    %132 = tpu.matmul %2, %131, %cst_116 {dimension_numbers = #tpu.dot_dimension_numbers<[1], [0], [0], [1], [0, 0, 1, 1], [], []>} : vector<8x10xf32>, vector<10x128xf32>, vector<8x128xf32> -> vector<8x128xf32>
    %cst_117 = arith.constant dense<0.000000e+00> : vector<8x128xf32>
    %133 = tpu.matmul %3, %131, %cst_117 {dimension_numbers = #tpu.dot_dimension_numbers<[1], [0], [0], [1], [0, 0, 1, 1], [], []>} : vector<8x10xf32>, vector<10x128xf32>, vector<8x128xf32> -> vector<8x128xf32>
    %134 = arith.maximumf %132, %133 : vector<8x128xf32>
    %c112_i32_118 = arith.constant 112 : i32
    %135 = tpu.dynamic_rotate %134 by %c112_i32_118 dim 1 : vector<8x128xf32>, i32 -> vector<8x128xf32>
    %136 = arith.maximumf %134, %135 : vector<8x128xf32>
    %c432 = arith.constant 432 : index
    %c0_119 = arith.constant 0 : index
    %137 = vector.load %arg7[%c432, %c0_119] : memref<560x128xf32, #tpu.memory_space<vmem>>, vector<128x128xf32>
    %cst_120 = arith.constant dense<0.000000e+00> : vector<8x128xf32>
    %138 = tpu.matmul %136, %137, %cst_120 {dimension_numbers = #tpu.dot_dimension_numbers<[1], [0], [0], [1], [0, 0, 1, 1], [], []>} : vector<8x128xf32>, vector<128x128xf32>, vector<8x128xf32> -> vector<8x128xf32>
    %139 = arith.addf %107, %138 : vector<8x128xf32>
    %140 = vector.broadcast %5 : vector<1x128xf32> to vector<8x128xf32>
    %141 = arith.addf %139, %140 : vector<8x128xf32>
    %cst_121 = arith.constant 0.000000e+00 : f32
    %142 = vector.broadcast %cst_121 : f32 to vector<8x128xf32>
    %143 = arith.maximumf %141, %142 : vector<8x128xf32>
    %144 = vector.extract_strided_slice %143 {offsets = [0, 0], sizes = [1, 128], strides = [1, 1]} : vector<8x128xf32> to vector<1x128xf32>
    %145 = arith.truncf %144 : vector<1x128xf32> to vector<1x128xbf16>
    %c0_122 = arith.constant 0 : index
    %c0_123 = arith.constant 0 : index
    %146 = vector.load %arg4[%c0_122, %c0_123] : memref<640x128xbf16, #tpu.memory_space<vmem>>, vector<128x128xbf16>
    %cst_124 = arith.constant dense<0.000000e+00> : vector<1x128xf32>
    %147 = tpu.matmul %145, %146, %cst_124 {dimension_numbers = #tpu.dot_dimension_numbers<[1], [0], [0], [1], [0, 0, 1, 1], [], []>} : vector<1x128xbf16>, vector<128x128xbf16>, vector<1x128xf32> -> vector<1x128xf32>
    %148 = vector.extract_strided_slice %143 {offsets = [1, 0], sizes = [1, 128], strides = [1, 1]} : vector<8x128xf32> to vector<1x128xf32>
    %149 = arith.truncf %148 : vector<1x128xf32> to vector<1x128xbf16>
    %c128_125 = arith.constant 128 : index
    %c0_126 = arith.constant 0 : index
    %150 = vector.load %arg4[%c128_125, %c0_126] : memref<640x128xbf16, #tpu.memory_space<vmem>>, vector<128x128xbf16>
    %cst_127 = arith.constant dense<0.000000e+00> : vector<1x128xf32>
    %151 = tpu.matmul %149, %150, %cst_127 {dimension_numbers = #tpu.dot_dimension_numbers<[1], [0], [0], [1], [0, 0, 1, 1], [], []>} : vector<1x128xbf16>, vector<128x128xbf16>, vector<1x128xf32> -> vector<1x128xf32>
    %152 = arith.addf %147, %151 : vector<1x128xf32>
    %153 = vector.extract_strided_slice %143 {offsets = [2, 0], sizes = [1, 128], strides = [1, 1]} : vector<8x128xf32> to vector<1x128xf32>
    %154 = arith.truncf %153 : vector<1x128xf32> to vector<1x128xbf16>
    %c256_128 = arith.constant 256 : index
    %c0_129 = arith.constant 0 : index
    %155 = vector.load %arg4[%c256_128, %c0_129] : memref<640x128xbf16, #tpu.memory_space<vmem>>, vector<128x128xbf16>
    %cst_130 = arith.constant dense<0.000000e+00> : vector<1x128xf32>
    %156 = tpu.matmul %154, %155, %cst_130 {dimension_numbers = #tpu.dot_dimension_numbers<[1], [0], [0], [1], [0, 0, 1, 1], [], []>} : vector<1x128xbf16>, vector<128x128xbf16>, vector<1x128xf32> -> vector<1x128xf32>
    %157 = arith.addf %152, %156 : vector<1x128xf32>
    %158 = vector.extract_strided_slice %143 {offsets = [3, 0], sizes = [1, 128], strides = [1, 1]} : vector<8x128xf32> to vector<1x128xf32>
    %159 = arith.truncf %158 : vector<1x128xf32> to vector<1x128xbf16>
    %c384_131 = arith.constant 384 : index
    %c0_132 = arith.constant 0 : index
    %160 = vector.load %arg4[%c384_131, %c0_132] : memref<640x128xbf16, #tpu.memory_space<vmem>>, vector<128x128xbf16>
    %cst_133 = arith.constant dense<0.000000e+00> : vector<1x128xf32>
    %161 = tpu.matmul %159, %160, %cst_133 {dimension_numbers = #tpu.dot_dimension_numbers<[1], [0], [0], [1], [0, 0, 1, 1], [], []>} : vector<1x128xbf16>, vector<128x128xbf16>, vector<1x128xf32> -> vector<1x128xf32>
    %162 = arith.addf %157, %161 : vector<1x128xf32>
    %163 = vector.extract_strided_slice %143 {offsets = [4, 0], sizes = [1, 128], strides = [1, 1]} : vector<8x128xf32> to vector<1x128xf32>
    %164 = arith.truncf %163 : vector<1x128xf32> to vector<1x128xbf16>
    %c512_134 = arith.constant 512 : index
    %c0_135 = arith.constant 0 : index
    %165 = vector.load %arg4[%c512_134, %c0_135] : memref<640x128xbf16, #tpu.memory_space<vmem>>, vector<128x128xbf16>
    %cst_136 = arith.constant dense<0.000000e+00> : vector<1x128xf32>
    %166 = tpu.matmul %164, %165, %cst_136 {dimension_numbers = #tpu.dot_dimension_numbers<[1], [0], [0], [1], [0, 0, 1, 1], [], []>} : vector<1x128xbf16>, vector<128x128xbf16>, vector<1x128xf32> -> vector<1x128xf32>
    %167 = arith.addf %162, %166 : vector<1x128xf32>
    %168 = arith.addf %167, %6 : vector<1x128xf32>
    %cst_137 = arith.constant 0.000000e+00 : f32
    %169 = vector.broadcast %cst_137 : f32 to vector<1x128xf32>
    %170 = arith.maximumf %168, %169 : vector<1x128xf32>
    %171 = arith.truncf %170 : vector<1x128xf32> to vector<1x128xbf16>
    %c0_138 = arith.constant 0 : index
    %c0_139 = arith.constant 0 : index
    %172 = vector.load %arg5[%c0_138, %c0_139] : memref<128x128xbf16, #tpu.memory_space<vmem>>, vector<128x128xbf16>
    %cst_140 = arith.constant dense<0.000000e+00> : vector<1x128xf32>
    %173 = tpu.matmul %171, %172, %cst_140 {dimension_numbers = #tpu.dot_dimension_numbers<[1], [0], [0], [1], [0, 0, 1, 1], [], []>} : vector<1x128xbf16>, vector<128x128xbf16>, vector<1x128xf32> -> vector<1x128xf32>
    %174 = arith.addf %173, %7 : vector<1x128xf32>
    %cst_141 = arith.constant 0.000000e+00 : f32
    %175 = vector.broadcast %cst_141 : f32 to vector<1x128xf32>
    %176 = arith.maximumf %174, %175 : vector<1x128xf32>
    %177 = arith.truncf %176 : vector<1x128xf32> to vector<1x128xbf16>
    %c0_142 = arith.constant 0 : index
    %c0_143 = arith.constant 0 : index
    %178 = vector.load %arg6[%c0_142, %c0_143] : memref<128x128xbf16, #tpu.memory_space<vmem>>, vector<128x128xbf16>
    %cst_144 = arith.constant dense<0.000000e+00> : vector<1x128xf32>
    %179 = tpu.matmul %177, %178, %cst_144 {dimension_numbers = #tpu.dot_dimension_numbers<[1], [0], [0], [1], [0, 0, 1, 1], [], []>} : vector<1x128xbf16>, vector<128x128xbf16>, vector<1x128xf32> -> vector<1x128xf32>
    %180 = arith.addf %179, %8 : vector<1x128xf32>
    %181 = vector.shape_cast %180 : vector<1x128xf32> to vector<1x128xf32>
    %182 = vector.broadcast %181 : vector<1x128xf32> to vector<8x128xf32>
    %c0_145 = arith.constant 0 : index
    %c0_146 = arith.constant 0 : index
    %c0_147 = arith.constant 0 : index
    %183 = vector.load %arg9[%c0_145, %c0_146, %c0_147] : memref<1x8x128xf32, #tpu.memory_space<vmem>>, vector<1x8x128xf32>
    %184 = vector.shape_cast %183 : vector<1x8x128xf32> to vector<8x128xf32>
    %185 = vector.shape_cast %182 : vector<8x128xf32> to vector<1x8x128xf32>
    tpu.vector_store %arg9[%c0_145, %c0_146, %c0_147], %185 {strides = array<i32>} : memref<1x8x128xf32, #tpu.memory_space<vmem>>, vector<1x8x128xf32>,
    return
  }
  func.func @transform_0(%arg0: i32) -> (i32, i32) {
    %c0_i32 = arith.constant 0 : i32
    %c0_i32_0 = arith.constant 0 : i32
    return %arg0, %c0_i32 : i32, i32
  }
  func.func @transform_1(%arg0: i32) -> (i32, i32) {
    %c0_i32 = arith.constant 0 : i32
    %c0_i32_0 = arith.constant 0 : i32
    %c0_i32_1 = arith.constant 0 : i32
    return %c0_i32, %c0_i32_0 : i32, i32
  }
  func.func @transform_2(%arg0: i32) -> (i32, i32) {
    %c0_i32 = arith.constant 0 : i32
    %c0_i32_0 = arith.constant 0 : i32
    %c0_i32_1 = arith.constant 0 : i32
    return %c0_i32, %c0_i32_0 : i32, i32
  }
  func.func @transform_3(%arg0: i32) -> (i32, i32) {
    %c0_i32 = arith.constant 0 : i32
    %c0_i32_0 = arith.constant 0 : i32
    %c0_i32_1 = arith.constant 0 : i32
    return %c0_i32, %c0_i32_0 : i32, i32
  }
  func.func @transform_4(%arg0: i32) -> (i32, i32) {
    %c0_i32 = arith.constant 0 : i32
    %c0_i32_0 = arith.constant 0 : i32
    %c0_i32_1 = arith.constant 0 : i32
    return %c0_i32, %c0_i32_0 : i32, i32
  }
  func.func @transform_5(%arg0: i32) -> (i32, i32) {
    %c0_i32 = arith.constant 0 : i32
    %c0_i32_0 = arith.constant 0 : i32
    %c0_i32_1 = arith.constant 0 : i32
    return %c0_i32, %c0_i32_0 : i32, i32
  }
  func.func @transform_6(%arg0: i32) -> (i32, i32) {
    %c0_i32 = arith.constant 0 : i32
    %c0_i32_0 = arith.constant 0 : i32
    %c0_i32_1 = arith.constant 0 : i32
    return %c0_i32, %c0_i32_0 : i32, i32
  }
  func.func @transform_7(%arg0: i32) -> (i32, i32) {
    %c0_i32 = arith.constant 0 : i32
    %c0_i32_0 = arith.constant 0 : i32
    %c0_i32_1 = arith.constant 0 : i32
    return %c0_i32, %c0_i32_0 : i32, i32
  }
  func.func @transform_8(%arg0: i32) -> (i32, i32, i32) {
    %c0_i32 = arith.constant 0 : i32
    %c0_i32_0 = arith.constant 0 : i32
    %c0_i32_1 = arith.constant 0 : i32
    return %arg0, %c0_i32, %c0_i32_0 : i32, i32, i32
  }
}

</mosaic_0001>

<llo_original>
// kernel: net_forward.1
$region0: #{net_forward.1}
  #allocation0 [shape = 'u32[]', space=smem, size = 0x4, offset = 0x4, fixed_abs, tag = 'smem constant byte address 0x4 - core index']
  #allocation1 [shape = 'u32[144,128]{1,0:T(1,128)}', space=vmem, size = 0x12000, scoped, tag = 'internal scratch']
  #allocation2 [shape = 'f32[16,128]{1,0:T(8,128)}', space=vmem, size = 0x2000, scoped, tag = 'scratch operand']
  %s0 = inlined_call_operand.vmem [shape: f32[64,128], index: 0, kind: input, shape index: {}]
  %s1 = inlined_call_operand.vmem [shape: bf16[1280,128], index: 1, kind: input, shape index: {}]
  %s2 = inlined_call_operand.hbm [shape: bf16[1280,128], index: 2, kind: input, shape index: {}]
  %s3 = inlined_call_operand.vmem [shape: bf16[640,128], index: 3, kind: input, shape index: {}]
  %s4 = inlined_call_operand.hbm [shape: bf16[128,128], index: 4, kind: input, shape index: {}]
  %s5 = inlined_call_operand.hbm [shape: bf16[128,128], index: 5, kind: input, shape index: {}]
  %s6 = inlined_call_operand.hbm [shape: f32[560,128], index: 6, kind: input, shape index: {}]
  %s7 = inlined_call_operand.vmem [shape: f32[8,128], index: 7, kind: input, shape index: {}]
  %s8 = inlined_call_operand.vmem [shape: f32[2,8,128], index: 8, kind: output, shape index: {}]
  %s9 = sld [smem:[#allocation0]]
  $region81: #{net_forward.1} parent=0
    _
  %s11 = ssub.s32 1, %s9
  %s12 = scalar_select 0, %s11, %s9
  $region1: #{net_forward.1} parent=0
    #allocation3 [shape = 'u8[327680]{0}', space=vmem, size = 0x50000, scoped, tag = 'input window, operand 2, single buffered']
    #allocation4 [shape = 's32[2]{0}', space=sflag, size = 0x8, scoped, tag = 'scoped memory for net_forward.1']
    #allocation5 [shape = 'u8[32768]{0}', space=vmem, size = 0x8000, scoped, tag = 'input window, operand 4, single buffered']
    #allocation6 [shape = 's32[1]{0}', space=sflag, size = 0x4, scoped, tag = 'scoped memory for net_forward.1']
    #allocation7 [shape = 'u8[32768]{0}', space=vmem, size = 0x8000, scoped, tag = 'input window, operand 5, single buffered']
    #allocation8 [shape = 'u8[286720]{0}', space=vmem, size = 0x46000, scoped, tag = 'input window, operand 6, single buffered']
    #allocation9 [shape = 's32[1]{0}', space=sflag, size = 0x4, scoped, tag = 'scoped memory for net_forward.1']
    %13 = vsyncpa [#allocation4], 0
    %14 = vsyncpa [#allocation6], 0
    %15 = vsyncpa [#allocation9], 0
    loop: start=0, step=1, limit=4
    $region2: #{net_forward.1} parent=1 // loop_pre_header
      _
    $region3: #{net_forward.1} parent=1 // loop_header
      %s17 = sphi 0, %s21
      %p18 = scmp.ge.s32.totalorder %s17, 4
      %s27 = sphi 0, %s29
      %s30 = sphi 0, %s27
      %s31 = sphi 0, %s30
      %s47 = sphi 0, %s31
      %s51 = sphi 0, %s51
      %s53 = sphi 0, %s51
      %s54 = sphi 0, %s53
      %s68 = sphi 0, %s54
      %s72 = sphi 0, %s72
      %s74 = sphi 0, %s72
      %s75 = sphi 0, %s74
      %s89 = sphi 0, %s75
      %s93 = sphi 0, %s93
      %s95 = sphi 0, %s93
      %s96 = sphi 0, %s95
      %s110 = sphi 0, %s96
      %s114 = sphi 0, %s114
      %s116 = sphi 0, %s114
      %s117 = sphi 0, %s116
      %s131 = sphi 0, %s117
      %s135 = sphi 0, %s135
      %s137 = sphi 0, %s135
      %s138 = sphi 0, %s137
      %s152 = sphi 0, %s138
      %s156 = sphi 0, %s156
      %s158 = sphi 0, %s156
      %s159 = sphi 0, %s158
      %s173 = sphi 0, %s159
      %s177 = sphi 0, %s177
      %s179 = sphi 0, %s177
      %s180 = sphi 0, %s179
      %s194 = sphi 0, %s180
      %s200 = sphi 0, %s202
      %s203 = sphi 0, %s200
      %s204 = sphi 0, %s203
      %s220 = sphi 0, %s204
    $region4: #{net_forward.1} parent=1 // loop_header_branch
      %20 = sbr.rel (%p18) target = $region8
    $region5: #{net_forward.1} parent=1 // loop_body
      %s22 = ssub.s32 %s17, 1
      %s23 = ssub.s32 %s17, 2
      %s24 = sadd.s32 %s17, 1
      %s25 = ssub.s32 %s17, %s24
      %p26 = scmp.eq.s32.totalorder %s25, 0
      %s28 = sadd.s32 %s27, 1
      %s29 = scalar_select %p26, %s27, %s28
      %p32 = pneg %p26
      %p33 = scmp.eq.s32.totalorder %s17, 1
      %p34 = por %p32, %p33
      %p35 = scmp.ne.s32.totalorder %s27, %s30
      %p36 = scmp.eq.s32.totalorder %s17, 0
      %p37 = por %p35, %p36
      %p38 = scmp.ne.s32.totalorder %s27, %s30
      %p39 = scmp.eq.s32.totalorder %s22, 1
      %p40 = por %p38, %p39
      %p41 = scmp.ne.s32.totalorder %s30, %s31
      %p42 = scmp.eq.s32.totalorder %s22, 0
      %p43 = por %p41, %p42
      %p44 = scmp.ne.s32.totalorder %s30, %s31
      %p45 = scmp.eq.s32.totalorder %s23, 1
      %p46 = por %p44, %p45
      %p48 = scmp.ne.s32.totalorder %s31, %s47
      %p49 = scmp.eq.s32.totalorder %s23, 0
      %p50 = por %p48, %p49
      %s52 = sadd.s32 %s51, 1
      %p55 = scmp.eq.s32.totalorder %s17, 1
      %p56 = scmp.ne.s32.totalorder %s51, %s53
      %p57 = scmp.eq.s32.totalorder %s17, 0
      %p58 = por %p56, %p57
      %p59 = scmp.ne.s32.totalorder %s51, %s53
      %p60 = scmp.eq.s32.totalorder %s22, 1
      %p61 = por %p59, %p60
      %p62 = scmp.ne.s32.totalorder %s53, %s54
      %p63 = scmp.eq.s32.totalorder %s22, 0
      %p64 = por %p62, %p63
      %p65 = scmp.ne.s32.totalorder %s53, %s54
      %p66 = scmp.eq.s32.totalorder %s23, 1
      %p67 = por %p65, %p66
      %p69 = scmp.ne.s32.totalorder %s54, %s68
      %p70 = scmp.eq.s32.totalorder %s23, 0
      %p71 = por %p69, %p70
      %s73 = sadd.s32 %s72, 1
      %p76 = scmp.eq.s32.totalorder %s17, 1
      %p77 = scmp.ne.s32.totalorder %s72, %s74
      %p78 = scmp.eq.s32.totalorder %s17, 0
      %p79 = por %p77, %p78
      %p80 = scmp.ne.s32.totalorder %s72, %s74
      %p81 = scmp.eq.s32.totalorder %s22, 1
      %p82 = por %p80, %p81
      %p83 = scmp.ne.s32.totalorder %s74, %s75
      %p84 = scmp.eq.s32.totalorder %s22, 0
      %p85 = por %p83, %p84
      %p86 = scmp.ne.s32.totalorder %s74, %s75
      %p87 = scmp.eq.s32.totalorder %s23, 1
      %p88 = por %p86, %p87
      %p90 = scmp.ne.s32.totalorder %s75, %s89
      %p91 = scmp.eq.s32.totalorder %s23, 0
      %p92 = por %p90, %p91
      %s94 = sadd.s32 %s93, 1
      %p97 = scmp.eq.s32.totalorder %s17, 1
      %p98 = scmp.ne.s32.totalorder %s93, %s95
      %p99 = scmp.eq.s32.totalorder %s17, 0
      %p100 = por %p98, %p99
      %p101 = scmp.ne.s32.totalorder %s93, %s95
      %p102 = scmp.eq.s32.totalorder %s22, 1
      %p103 = por %p101, %p102
      %p104 = scmp.ne.s32.totalorder %s95, %s96
      %p105 = scmp.eq.s32.totalorder %s22, 0
      %p106 = por %p104, %p105
      %p107 = scmp.ne.s32.totalorder %s95, %s96
      %p108 = scmp.eq.s32.totalorder %s23, 1
      %p109 = por %p107, %p108
      %p111 = scmp.ne.s32.totalorder %s96, %s110
      %p112 = scmp.eq.s32.totalorder %s23, 0
      %p113 = por %p111, %p112
      %s115 = sadd.s32 %s114, 1
      %p118 = scmp.eq.s32.totalorder %s17, 1
      %p119 = scmp.ne.s32.totalorder %s114, %s116
      %p120 = scmp.eq.s32.totalorder %s17, 0
      %p121 = por %p119, %p120
      %p122 = scmp.ne.s32.totalorder %s114, %s116
      %p123 = scmp.eq.s32.totalorder %s22, 1
      %p124 = por %p122, %p123
      %p125 = scmp.ne.s32.totalorder %s116, %s117
      %p126 = scmp.eq.s32.totalorder %s22, 0
      %p127 = por %p125, %p126
      %p128 = scmp.ne.s32.totalorder %s116, %s117
      %p129 = scmp.eq.s32.totalorder %s23, 1
      %p130 = por %p128, %p129
      %p132 = scmp.ne.s32.totalorder %s117, %s131
      %p133 = scmp.eq.s32.totalorder %s23, 0
      %p134 = por %p132, %p133
      %s136 = sadd.s32 %s135, 1
      %p139 = scmp.eq.s32.totalorder %s17, 1
      %p140 = scmp.ne.s32.totalorder %s135, %s137
      %p141 = scmp.eq.s32.totalorder %s17, 0
      %p142 = por %p140, %p141
      %p143 = scmp.ne.s32.totalorder %s135, %s137
      %p144 = scmp.eq.s32.totalorder %s22, 1
      %p145 = por %p143, %p144
      %p146 = scmp.ne.s32.totalorder %s137, %s138
      %p147 = scmp.eq.s32.totalorder %s22, 0
      %p148 = por %p146, %p147
      %p149 = scmp.ne.s32.totalorder %s137, %s138
      %p150 = scmp.eq.s32.totalorder %s23, 1
      %p151 = por %p149, %p150
      %p153 = scmp.ne.s32.totalorder %s138, %s152
      %p154 = scmp.eq.s32.totalorder %s23, 0
      %p155 = por %p153, %p154
      %s157 = sadd.s32 %s156, 1
      %p160 = scmp.eq.s32.totalorder %s17, 1
      %p161 = scmp.ne.s32.totalorder %s156, %s158
      %p162 = scmp.eq.s32.totalorder %s17, 0
      %p163 = por %p161, %p162
      %p164 = scmp.ne.s32.totalorder %s156, %s158
      %p165 = scmp.eq.s32.totalorder %s22, 1
      %p166 = por %p164, %p165
      %p167 = scmp.ne.s32.totalorder %s158, %s159
      %p168 = scmp.eq.s32.totalorder %s22, 0
      %p169 = por %p167, %p168
      %p170 = scmp.ne.s32.totalorder %s158, %s159
      %p171 = scmp.eq.s32.totalorder %s23, 1
      %p172 = por %p170, %p171
      %p174 = scmp.ne.s32.totalorder %s159, %s173
      %p175 = scmp.eq.s32.totalorder %s23, 0
      %p176 = por %p174, %p175
      %s178 = sadd.s32 %s177, 1
      %p181 = scmp.eq.s32.totalorder %s17, 1
      %p182 = scmp.ne.s32.totalorder %s177, %s179
      %p183 = scmp.eq.s32.totalorder %s17, 0
      %p184 = por %p182, %p183
      %p185 = scmp.ne.s32.totalorder %s177, %s179
      %p186 = scmp.eq.s32.totalorder %s22, 1
      %p187 = por %p185, %p186
      %p188 = scmp.ne.s32.totalorder %s179, %s180
      %p189 = scmp.eq.s32.totalorder %s22, 0
      %p190 = por %p188, %p189
      %p191 = scmp.ne.s32.totalorder %s179, %s180
      %p192 = scmp.eq.s32.totalorder %s23, 1
      %p193 = por %p191, %p192
      %p195 = scmp.ne.s32.totalorder %s180, %s194
      %p196 = scmp.eq.s32.totalorder %s23, 0
      %p197 = por %p195, %p196
      %s198 = ssub.s32 %s17, %s24
      %p199 = scmp.eq.s32.totalorder %s198, 0
      %s201 = sadd.s32 %s200, 1
      %s202 = scalar_select %p199, %s200, %s201
      %p205 = pneg %p199
      %p206 = scmp.eq.s32.totalorder %s17, 1
      %p207 = por %p205, %p206
      %p208 = scmp.ne.s32.totalorder %s200, %s203
      %p209 = scmp.eq.s32.totalorder %s17, 0
      %p210 = por %p208, %p209
      %p211 = scmp.ne.s32.totalorder %s200, %s203
      %p212 = scmp.eq.s32.totalorder %s22, 1
      %p213 = por %p211, %p212
      %p214 = scmp.ne.s32.totalorder %s203, %s204
      %p215 = scmp.eq.s32.totalorder %s22, 0
      %p216 = por %p214, %p215
      %p217 = scmp.ne.s32.totalorder %s203, %s204
      %p218 = scmp.eq.s32.totalorder %s23, 1
      %p219 = por %p217, %p218
      %p221 = scmp.ne.s32.totalorder %s204, %s220
      %p222 = scmp.eq.s32.totalorder %s23, 0
      %p223 = por %p221, %p222
      %p224 = scmp.le.s32.totalorder 1, %s17
      %p225 = scmp.lt.s32.totalorder %s17, 3
      %p226 = pnand %p224, %p225
      %p227 = pneg %p226
      // Predicated region
      $region9: #{net_forward.1} parent=5 // pred_check
        _
      $region10: #{net_forward.1} parent=5 // pred_check_branch
        %229 = sbr.rel (%p226) target = $region12
      $region11: #{net_forward.1} parent=5 // pred_region
        %s230 = ssub.s32 %s17, 1
        // Predicated region
        $region13: #{net_forward.1} parent=11 // pred_check
          %p231 = pneg %p64
        $region14: #{net_forward.1} parent=11 // pred_check_branch
          %233 = sbr.rel (%p231) target = $region16
        $region15: #{net_forward.1} parent=11 // pred_region
          _
        $region16: #{net_forward.1} parent=11 // pred_fallthru
          _
        // Predicated region
        $region17: #{net_forward.1} parent=11 // pred_check
          %p234 = pneg %p85
        $region18: #{net_forward.1} parent=11 // pred_check_branch
          %236 = sbr.rel (%p234) target = $region20
        $region19: #{net_forward.1} parent=11 // pred_region
          %s238 = ssub.s32 10240, 10240
          %239 = vsyncadd [#allocation4], %s238
          %s240 = sshll.u32 [#allocation3], 4
          %s241 = int_to_ptr.vmem [resolvable:$true] %s240
          %246 = dma.hbm_to_vmem [thread:$0]  %s2, 10240, %s241, [#allocation4], 64, 64, 4
        $region20: #{net_forward.1} parent=11 // pred_fallthru
          _
        // Predicated region
        $region21: #{net_forward.1} parent=11 // pred_check
          %p247 = pneg %p106
        $region22: #{net_forward.1} parent=11 // pred_check_branch
          %249 = sbr.rel (%p247) target = $region24
        $region23: #{net_forward.1} parent=11 // pred_region
          _
        $region24: #{net_forward.1} parent=11 // pred_fallthru
          _
        // Predicated region
        $region25: #{net_forward.1} parent=11 // pred_check
          %p250 = pneg %p127
        $region26: #{net_forward.1} parent=11 // pred_check_branch
          %252 = sbr.rel (%p250) target = $region28
        $region27: #{net_forward.1} parent=11 // pred_region
          %s254 = ssub.s32 1024, 1024
          %255 = vsyncadd [#allocation6], %s254
          %s256 = sshll.u32 [#allocation5], 4
          %s257 = int_to_ptr.vmem [resolvable:$true] %s256
          %262 = dma.hbm_to_vmem [thread:$0]  %s4, 1024, %s257, [#allocation6], 64, 64, 4
        $region28: #{net_forward.1} parent=11 // pred_fallthru
          _
        // Predicated region
        $region29: #{net_forward.1} parent=11 // pred_check
          %p263 = pneg %p148
        $region30: #{net_forward.1} parent=11 // pred_check_branch
          %265 = sbr.rel (%p263) target = $region32
        $region31: #{net_forward.1} parent=11 // pred_region
          %s267 = ssub.s32 1024, 1024
          %268 = vsyncadd [#allocation6], %s267
          %s269 = sshll.u32 [#allocation7], 4
          %s270 = int_to_ptr.vmem [resolvable:$true] %s269
          %275 = dma.hbm_to_vmem [thread:$0]  %s5, 1024, %s270, [#allocation6], 64, 64, 4
        $region32: #{net_forward.1} parent=11 // pred_fallthru
          _
        // Predicated region
        $region33: #{net_forward.1} parent=11 // pred_check
          %p276 = pneg %p169
        $region34: #{net_forward.1} parent=11 // pred_check_branch
          %278 = sbr.rel (%p276) target = $region36
        $region35: #{net_forward.1} parent=11 // pred_region
          %s280 = ssub.s32 8960, 8960
          %281 = vsyncadd [#allocation9], %s280
          %s282 = sshll.u32 [#allocation8], 4
          %s283 = int_to_ptr.vmem [resolvable:$true] %s282
          %288 = dma.hbm_to_vmem [thread:$0]  %s6, 8960, %s283, [#allocation9], 128, 128, 8
        $region36: #{net_forward.1} parent=11 // pred_fallthru
          _
        // Predicated region
        $region37: #{net_forward.1} parent=11 // pred_check
          %p289 = pneg %p190
        $region38: #{net_forward.1} parent=11 // pred_check_branch
          %291 = sbr.rel (%p289) target = $region40
        $region39: #{net_forward.1} parent=11 // pred_region
          _
        $region40: #{net_forward.1} parent=11 // pred_fallthru
          _
      $region12: #{net_forward.1} parent=5 // pred_fallthru
        _
      %p292 = scmp.lt.s32.totalorder %s17, 2
      // Predicated region
      $region41: #{net_forward.1} parent=5 // pred_check
        %p293 = pneg %p292
      $region42: #{net_forward.1} parent=5 // pred_check_branch
        %295 = sbr.rel (%p293) target = $region44
      $region43: #{net_forward.1} parent=5 // pred_region
        // Predicated region
        $region45: #{net_forward.1} parent=43 // pred_check
          %p296 = pneg %p37
        $region46: #{net_forward.1} parent=43 // pred_check_branch
          %298 = sbr.rel (%p296) target = $region48
        $region47: #{net_forward.1} parent=43 // pred_region
          %s299 = smul.u32 4, %s17
          %p300 = scmp.lt.s32.totalorder %s299, 7
          %s301 = scalar_select %p300, %s299, 7
          %s302 = smul.addr %s301, 8
          %s303 = scalar_lea.vmem %s0, %s302
          %s304 = smul.u32 4, %s17
        $region48: #{net_forward.1} parent=43 // pred_fallthru
          _
      $region44: #{net_forward.1} parent=5 // pred_fallthru
        _
      %p305 = scmp.le.s32.totalorder 1, %s17
      %p306 = scmp.lt.s32.totalorder %s17, 3
      %p307 = pnand %p305, %p306
      %p308 = pneg %p307
      // Predicated region
      $region49: #{net_forward.1} parent=5 // pred_check
        _
      $region50: #{net_forward.1} parent=5 // pred_check_branch
        %310 = sbr.rel (%p307) target = $region52
      $region51: #{net_forward.1} parent=5 // pred_region
        %s311 = ssub.s32 %s17, 1
        // Predicated region
        $region53: #{net_forward.1} parent=51 // pred_check
          %p312 = pneg %p85
        $region54: #{net_forward.1} parent=51 // pred_check_branch
          %314 = sbr.rel (%p312) target = $region56
        $region55: #{net_forward.1} parent=51 // pred_region
          %315 = dma.done [#allocation4], 10240
        $region56: #{net_forward.1} parent=51 // pred_fallthru
          _
        // Predicated region
        $region57: #{net_forward.1} parent=51 // pred_check
          %p316 = pneg %p127
        $region58: #{net_forward.1} parent=51 // pred_check_branch
          %318 = sbr.rel (%p316) target = $region60
        $region59: #{net_forward.1} parent=51 // pred_region
          %319 = dma.done [#allocation6], 1024
        $region60: #{net_forward.1} parent=51 // pred_fallthru
          _
        // Predicated region
        $region61: #{net_forward.1} parent=51 // pred_check
          %p320 = pneg %p148
        $region62: #{net_forward.1} parent=51 // pred_check_branch
          %322 = sbr.rel (%p320) target = $region64
        $region63: #{net_forward.1} parent=51 // pred_region
          %323 = dma.done [#allocation6], 1024
        $region64: #{net_forward.1} parent=51 // pred_fallthru
          _
        // Predicated region
        $region65: #{net_forward.1} parent=51 // pred_check
          %p324 = pneg %p169
        $region66: #{net_forward.1} parent=51 // pred_check_branch
          %326 = sbr.rel (%p324) target = $region68
        $region67: #{net_forward.1} parent=51 // pred_region
          %327 = dma.done [#allocation9], 8960
        $region68: #{net_forward.1} parent=51 // pred_fallthru
          _
        %s328 = smul.u32 4, %s22
        %p329 = scmp.lt.s32.totalorder %s328, 7
        %s330 = scalar_select %p329, %s328, 7
        %s331 = smul.addr %s330, 8
        %s332 = scalar_lea.vmem %s0, %s331
        %p333 = pneg %p43
        %p334 = pneg %p40
        %p335 = pneg %p64
        %p336 = pneg %p61
        %p337 = pneg %p85
        %p338 = pneg %p82
        %p339 = pneg %p106
        %p340 = pneg %p103
        %p341 = pneg %p127
        %p342 = pneg %p124
        %p343 = pneg %p148
        %p344 = pneg %p145
        %p345 = pneg %p169
        %p346 = pneg %p166
        %p347 = pneg %p190
        %p348 = pneg %p187
        %p349 = pneg %p216
        %p350 = pneg %p213
        %p351 = scmp.lt.s32.totalorder %s22, 1
        %s352 = scalar_select %p351, %s22, 1
        %s353 = smul.addr %s352, 8
        %s354 = scalar_lea.vmem %s8, %s353
        %s355 = smul.u32 4, %s22
        %p356 = scmp.lt.s32.totalorder %s355, 7
        %s357 = scalar_select %p356, %s355, 7
        %s358 = smul.addr %s357, 8
        %s359 = scalar_lea.vmem %s0, %s358
        %s360 = smul.u32 4, %s22
        %p361 = scmp.lt.s32.totalorder %s22, 1
        %s362 = scalar_select %p361, %s22, 1
        %s363 = smul.addr %s362, 8
        %s364 = scalar_lea.vmem %s8, %s363
        %v366 = vld [vmem:[#allocation8] sm:$0xff]
        %v367 = vld [vmem:[#allocation8 + $0x8] sm:$0xff]
        %v368 = vld [vmem:[#allocation8 + $0x10] sm:$0xff]
        %v369 = vld [vmem:[#allocation8 + $0x18] sm:$0xff]
        %v370 = vld [vmem:[#allocation8 + $0x20] sm:$0xff]
        %v371 = vld [vmem:[#allocation8 + $0x28] sm:$0xff]
        %v372 = vld [vmem:[%s7] sm:$0x1]
        %v373 = vld [vmem:[%s7 + $0x1] sm:$0x1]
        %v374 = vld [vmem:[%s7 + $0x2] sm:$0x1]
        %v375 = vld [vmem:[%s7 + $0x3] sm:$0x1]
        %v376 = vld [vmem:[%s7 + $0x4] sm:$0x1]
        %v377 = vld [vmem:[%s359] sm:$0xff]
        %v378 = vld [vmem:[%s359 + $0x8] sm:$0xff]
        %v379 = vld [vmem:[%s359 + $0x10] sm:$0xff]
        %v380 = vld [vmem:[%s359 + $0x18] sm:$0xf]
        %v381 = vpack.c.bf16 %v378, %v377
        %v382 = vpack.c.bf16 %v380, %v379
        %v383 = vld [vmem:[%s1] sm:$0xf]
        %v384 = vld [vmem:[%s1 + $0x4] sm:$0xf]
        %v385 = vld [vmem:[%s1 + $0x8] sm:$0xf]
        %v386 = vld [vmem:[%s1 + $0xc] sm:$0xf]
        %v387 = vld [vmem:[%s1 + $0x10] sm:$0xf]
        %v388 = vld [vmem:[%s1 + $0x14] sm:$0xf]
        %v389 = vld [vmem:[%s1 + $0x18] sm:$0xf]
        %v390 = vld [vmem:[%s1 + $0x1c] sm:$0xf]
        %v391 = vld [vmem:[%s1 + $0x20] sm:$0xf]
        %v392 = vld [vmem:[%s1 + $0x24] sm:$0xf]
        %v393 = vld [vmem:[%s1 + $0x28] sm:$0xf]
        %v394 = vld [vmem:[%s1 + $0x2c] sm:$0xf]
        %v395 = vld [vmem:[%s1 + $0x30] sm:$0xf]
        %v396 = vld [vmem:[%s1 + $0x34] sm:$0xf]
        %v397 = vld [vmem:[%s1 + $0x38] sm:$0xf]
        %v398 = vld [vmem:[%s1 + $0x3c] sm:$0xf]
        %v399 = vld [vmem:[%s359 + $0x1] sm:$0xff]
        %v400 = vld [vmem:[%s359 + $0x9] sm:$0xff]
        %v401 = vld [vmem:[%s359 + $0x11] sm:$0xff]
        %v402 = vld [vmem:[%s359 + $0x19] sm:$0xf]
        %v403 = vpack.c.bf16 %v400, %v399
        %v404 = vpack.c.bf16 %v402, %v401
        %v405 = vld [vmem:[%s1 + $0x80] sm:$0xf]
        %v406 = vld [vmem:[%s1 + $0x84] sm:$0xf]
        %v407 = vld [vmem:[%s1 + $0x88] sm:$0xf]
        %v408 = vld [vmem:[%s1 + $0x8c] sm:$0xf]
        %v409 = vld [vmem:[%s1 + $0x90] sm:$0xf]
        %v410 = vld [vmem:[%s1 + $0x94] sm:$0xf]
        %v411 = vld [vmem:[%s1 + $0x98] sm:$0xf]
        %v412 = vld [vmem:[%s1 + $0x9c] sm:$0xf]
        %v413 = vld [vmem:[%s1 + $0xa0] sm:$0xf]
        %v414 = vld [vmem:[%s1 + $0xa4] sm:$0xf]
        %v415 = vld [vmem:[%s1 + $0xa8] sm:$0xf]
        %v416 = vld [vmem:[%s1 + $0xac] sm:$0xf]
        %v417 = vld [vmem:[%s1 + $0xb0] sm:$0xf]
        %v418 = vld [vmem:[%s1 + $0xb4] sm:$0xf]
        %v419 = vld [vmem:[%s1 + $0xb8] sm:$0xf]
        %v420 = vld [vmem:[%s1 + $0xbc] sm:$0xf]
        %v437 = vunpack.c.l.b16 %v405
        %v438 = vunpack.c.l.b16 %v406
        %v439 = vunpack.c.l.b16 %v407
        %v440 = vunpack.c.l.b16 %v408
        %v441 = vunpack.c.l.b16 %v409
        %v442 = vunpack.c.l.b16 %v410
        %v443 = vunpack.c.l.b16 %v411
        %v444 = vunpack.c.l.b16 %v412
        %v445 = vunpack.c.l.b16 %v413
        %v446 = vunpack.c.l.b16 %v414
        %v447 = vunpack.c.l.b16 %v415
        %v448 = vunpack.c.l.b16 %v416
        %v449 = vunpack.c.l.b16 %v417
        %v450 = vunpack.c.l.b16 %v418
        %v451 = vunpack.c.l.b16 %v419
        %v452 = vunpack.c.l.b16 %v420
        %v453 = vpack.c.b16 %v438, %v437
        %v454 = vpack.c.b16 %v440, %v439
        %v455 = vpack.c.b16 %v442, %v441
        %v456 = vpack.c.b16 %v444, %v443
        %v457 = vpack.c.b16 %v446, %v445
        %v458 = vpack.c.b16 %v448, %v447
        %v459 = vpack.c.b16 %v450, %v449
        %v460 = vpack.c.b16 %v452, %v451
        %469 = vmatprep.subr.bf16.mxu0 0
        %470 = vmatpush1.bf16.msra.mxu0 %v460
        %471 = vmatprep.subr.bf16.mxu0 0
        %472 = vmatpush1.bf16.msra.mxu0 %v459
        %473 = vmatprep.subr.bf16.mxu0 0
        %474 = vmatpush1.bf16.msra.mxu0 %v458
        %475 = vmatprep.subr.bf16.mxu0 0
        %476 = vmatpush1.bf16.msra.mxu0 %v457
        %477 = vmatprep.subr.bf16.mxu0 0
        %478 = vmatpush1.bf16.msra.mxu0 %v456
        %479 = vmatprep.subr.bf16.mxu0 0
        %480 = vmatpush1.bf16.msra.mxu0 %v455
        %481 = vmatprep.subr.bf16.mxu0 0
        %482 = vmatpush1.bf16.msra.mxu0 %v454
        %483 = vmatprep.subr.bf16.mxu0 0
        %484 = vmatpush1.bf16.msra.mxu0 %v453
        %485 = vmatprep.subr.bf16.mxu0 0
        %486 = vmatpush2.bf16.msra.mxu0 0
        %487 = vmatprep.subr.bf16.mxu0 0
        %488 = vmatpush2.bf16.msra.mxu0 0
        %489 = vmatprep.subr.bf16.mxu0 0
        %490 = vmatpush2.bf16.msra.mxu0 0
        %491 = vmatprep.subr.bf16.mxu0 0
        %492 = vmatpush2.bf16.msra.mxu0 0
        %493 = vmatprep.subr.bf16.mxu0 0
        %494 = vmatpush2.bf16.msra.mxu0 0
        %495 = vmatprep.subr.bf16.mxu0 0
        %496 = vmatpush2.bf16.msra.mxu0 0
        %497 = vmatprep.subr.bf16.mxu0 0
        %498 = vmatpush2.bf16.msra.mxu0 0
        %499 = vmatprep.subr.bf16.mxu0 0
        %500 = vmatpush2.bf16.msra.mxu0 0
        %501 = vmatprep.mubr.bf16.mxu0 0
        %502 = vmatmul.mubr.bf16.gmra.mxu0 %v403
        %v503 = vpop.f32.mrf.mxu0
        %v504 = vadd.f32 0.0, %v503
        %v505 = vpop.f32.mrf.mxu0
        %v506 = vpop.f32.mrf.mxu0
        %v507 = vadd.f32 0.0, %v506
        %v508 = vpop.f32.mrf.mxu0
        %509 = vmatprep.mubr.bf16.mxu0 0
        %510 = vmatmul.mubr.bf16.gmra.mxu0 %v404
        %v511 = vpop.f32.mrf.mxu0
        %v512 = vadd.f32 0.0, %v511
        %v513 = vpop.f32.mrf.mxu0
        %v514 = vpop.f32.mrf.mxu0
        %v515 = vadd.f32 0.0, %v514
        %v516 = vpop.f32.mrf.mxu0
        %517 = vdwg.mxu0
        %v534 = vunpack.c.l.b16 %v383
        %v535 = vunpack.c.l.b16 %v384
        %v536 = vunpack.c.l.b16 %v385
        %v537 = vunpack.c.l.b16 %v386
        %v538 = vunpack.c.l.b16 %v387
        %v539 = vunpack.c.l.b16 %v388
        %v540 = vunpack.c.l.b16 %v389
        %v541 = vunpack.c.l.b16 %v390
        %v542 = vunpack.c.l.b16 %v391
        %v543 = vunpack.c.l.b16 %v392
        %v544 = vunpack.c.l.b16 %v393
        %v545 = vunpack.c.l.b16 %v394
        %v546 = vunpack.c.l.b16 %v395
        %v547 = vunpack.c.l.b16 %v396
        %v548 = vunpack.c.l.b16 %v397
        %v549 = vunpack.c.l.b16 %v398
        %v550 = vpack.c.b16 %v535, %v534
        %v551 = vpack.c.b16 %v537, %v536
        %v552 = vpack.c.b16 %v539, %v538
        %v553 = vpack.c.b16 %v541, %v540
        %v554 = vpack.c.b16 %v543, %v542
        %v555 = vpack.c.b16 %v545, %v544
        %v556 = vpack.c.b16 %v547, %v546
        %v557 = vpack.c.b16 %v549, %v548
        %566 = vmatprep.subr.bf16.mxu0 0
        %567 = vmatpush1.bf16.msra.mxu0 %v557
        %568 = vmatprep.subr.bf16.mxu0 0
        %569 = vmatpush1.bf16.msra.mxu0 %v556
        %570 = vmatprep.subr.bf16.mxu0 0
        %571 = vmatpush1.bf16.msra.mxu0 %v555
        %572 = vmatprep.subr.bf16.mxu0 0
        %573 = vmatpush1.bf16.msra.mxu0 %v554
        %574 = vmatprep.subr.bf16.mxu0 0
        %575 = vmatpush1.bf16.msra.mxu0 %v553
        %576 = vmatprep.subr.bf16.mxu0 0
        %577 = vmatpush1.bf16.msra.mxu0 %v552
        %578 = vmatprep.subr.bf16.mxu0 0
        %579 = vmatpush1.bf16.msra.mxu0 %v551
        %580 = vmatprep.subr.bf16.mxu0 0
        %581 = vmatpush1.bf16.msra.mxu0 %v550
        %582 = vmatprep.subr.bf16.mxu0 0
        %583 = vmatpush2.bf16.msra.mxu0 0
        %584 = vmatprep.subr.bf16.mxu0 0
        %585 = vmatpush2.bf16.msra.mxu0 0
        %586 = vmatprep.subr.bf16.mxu0 0
        %587 = vmatpush2.bf16.msra.mxu0 0
        %588 = vmatprep.subr.bf16.mxu0 0
        %589 = vmatpush2.bf16.msra.mxu0 0
        %590 = vmatprep.subr.bf16.mxu0 0
        %591 = vmatpush2.bf16.msra.mxu0 0
        %592 = vmatprep.subr.bf16.mxu0 0
        %593 = vmatpush2.bf16.msra.mxu0 0
        %594 = vmatprep.subr.bf16.mxu0 0
        %595 = vmatpush2.bf16.msra.mxu0 0
        %596 = vmatprep.subr.bf16.mxu0 0
        %597 = vmatpush2.bf16.msra.mxu0 0
        %598 = vmatprep.mubr.bf16.mxu0 0
        %599 = vmatmul.mubr.bf16.gmra.mxu0 %v381
        %v600 = vpop.f32.mrf.mxu0
        %v601 = vadd.f32 %v504, %v600
        %v602 = vpop.f32.mrf.mxu0
        %v603 = vpop.f32.mrf.mxu0
        %v604 = vadd.f32 %v507, %v603
        %v605 = vpop.f32.mrf.mxu0
        %606 = vmatprep.mubr.bf16.mxu0 0
        %607 = vmatmul.mubr.bf16.gmra.mxu0 %v382
        %v608 = vpop.f32.mrf.mxu0
        %v609 = vadd.f32 %v512, %v608
        %v610 = vpop.f32.mrf.mxu0
        %v611 = vpop.f32.mrf.mxu0
        %v612 = vadd.f32 %v515, %v611
        %v613 = vpop.f32.mrf.mxu0
        %614 = vdwg.mxu0
        %v615 = vld [vmem:[%s359 + $0x2] sm:$0xff]
        %v616 = vld [vmem:[%s359 + $0xa] sm:$0xff]
        %v617 = vld [vmem:[%s359 + $0x12] sm:$0xff]
        %v618 = vld [vmem:[%s359 + $0x1a] sm:$0xf]
        %v619 = vpack.c.bf16 %v616, %v615
        %v620 = vpack.c.bf16 %v618, %v617
        %v621 = vld [vmem:[%s1 + $0x100] sm:$0xf]
        %v622 = vld [vmem:[%s1 + $0x104] sm:$0xf]
        %v623 = vld [vmem:[%s1 + $0x108] sm:$0xf]
        %v624 = vld [vmem:[%s1 + $0x10c] sm:$0xf]
        %v625 = vld [vmem:[%s1 + $0x110] sm:$0xf]
        %v626 = vld [vmem:[%s1 + $0x114] sm:$0xf]
        %v627 = vld [vmem:[%s1 + $0x118] sm:$0xf]
        %v628 = vld [vmem:[%s1 + $0x11c] sm:$0xf]
        %v629 = vld [vmem:[%s1 + $0x120] sm:$0xf]
        %v630 = vld [vmem:[%s1 + $0x124] sm:$0xf]
        %v631 = vld [vmem:[%s1 + $0x128] sm:$0xf]
        %v632 = vld [vmem:[%s1 + $0x12c] sm:$0xf]
        %v633 = vld [vmem:[%s1 + $0x130] sm:$0xf]
        %v634 = vld [vmem:[%s1 + $0x134] sm:$0xf]
        %v635 = vld [vmem:[%s1 + $0x138] sm:$0xf]
        %v636 = vld [vmem:[%s1 + $0x13c] sm:$0xf]
        %v653 = vunpack.c.l.b16 %v621
        %v654 = vunpack.c.l.b16 %v622
        %v655 = vunpack.c.l.b16 %v623
        %v656 = vunpack.c.l.b16 %v624
        %v657 = vunpack.c.l.b16 %v625
        %v658 = vunpack.c.l.b16 %v626
        %v659 = vunpack.c.l.b16 %v627
        %v660 = vunpack.c.l.b16 %v628
        %v661 = vunpack.c.l.b16 %v629
        %v662 = vunpack.c.l.b16 %v630
        %v663 = vunpack.c.l.b16 %v631
        %v664 = vunpack.c.l.b16 %v632
        %v665 = vunpack.c.l.b16 %v633
        %v666 = vunpack.c.l.b16 %v634
        %v667 = vunpack.c.l.b16 %v635
        %v668 = vunpack.c.l.b16 %v636
        %v669 = vpack.c.b16 %v654, %v653
        %v670 = vpack.c.b16 %v656, %v655
        %v671 = vpack.c.b16 %v658, %v657
        %v672 = vpack.c.b16 %v660, %v659
        %v673 = vpack.c.b16 %v662, %v661
        %v674 = vpack.c.b16 %v664, %v663
        %v675 = vpack.c.b16 %v666, %v665
        %v676 = vpack.c.b16 %v668, %v667
        %685 = vmatprep.subr.bf16.mxu0 0
        %686 = vmatpush1.bf16.msra.mxu0 %v676
        %687 = vmatprep.subr.bf16.mxu0 0
        %688 = vmatpush1.bf16.msra.mxu0 %v675
        %689 = vmatprep.subr.bf16.mxu0 0
        %690 = vmatpush1.bf16.msra.mxu0 %v674
        %691 = vmatprep.subr.bf16.mxu0 0
        %692 = vmatpush1.bf16.msra.mxu0 %v673
        %693 = vmatprep.subr.bf16.mxu0 0
        %694 = vmatpush1.bf16.msra.mxu0 %v672
        %695 = vmatprep.subr.bf16.mxu0 0
        %696 = vmatpush1.bf16.msra.mxu0 %v671
        %697 = vmatprep.subr.bf16.mxu0 0
        %698 = vmatpush1.bf16.msra.mxu0 %v670
        %699 = vmatprep.subr.bf16.mxu0 0
        %700 = vmatpush1.bf16.msra.mxu0 %v669
        %701 = vmatprep.subr.bf16.mxu0 0
        %702 = vmatpush2.bf16.msra.mxu0 0
        %703 = vmatprep.subr.bf16.mxu0 0
        %704 = vmatpush2.bf16.msra.mxu0 0
        %705 = vmatprep.subr.bf16.mxu0 0
        %706 = vmatpush2.bf16.msra.mxu0 0
        %707 = vmatprep.subr.bf16.mxu0 0
        %708 = vmatpush2.bf16.msra.mxu0 0
        %709 = vmatprep.subr.bf16.mxu0 0
        %710 = vmatpush2.bf16.msra.mxu0 0
        %711 = vmatprep.subr.bf16.mxu0 0
        %712 = vmatpush2.bf16.msra.mxu0 0
        %713 = vmatprep.subr.bf16.mxu0 0
        %714 = vmatpush2.bf16.msra.mxu0 0
        %715 = vmatprep.subr.bf16.mxu0 0
        %716 = vmatpush2.bf16.msra.mxu0 0
        %717 = vmatprep.mubr.bf16.mxu0 0
        %718 = vmatmul.mubr.bf16.gmra.mxu0 %v619
        %v719 = vpop.f32.mrf.mxu0
        %v720 = vadd.f32 0.0, %v719
        %v721 = vpop.f32.mrf.mxu0
        %v722 = vpop.f32.mrf.mxu0
        %v723 = vadd.f32 0.0, %v722
        %v724 = vpop.f32.mrf.mxu0
        %725 = vmatprep.mubr.bf16.mxu0 0
        %726 = vmatmul.mubr.bf16.gmra.mxu0 %v620
        %v727 = vpop.f32.mrf.mxu0
        %v728 = vadd.f32 0.0, %v727
        %v729 = vpop.f32.mrf.mxu0
        %v730 = vpop.f32.mrf.mxu0
        %v731 = vadd.f32 0.0, %v730
        %v732 = vpop.f32.mrf.mxu0
        %733 = vdwg.mxu0
        %v734 = vadd.f32 %v601, %v720
        %v735 = vadd.f32 %v604, %v723
        %v736 = vadd.f32 %v609, %v728
        %v737 = vadd.f32 %v612, %v731
        %v738 = vld [vmem:[%s359 + $0x3] sm:$0xff]
        %v739 = vld [vmem:[%s359 + $0xb] sm:$0xff]
        %v740 = vld [vmem:[%s359 + $0x13] sm:$0xff]
        %v741 = vld [vmem:[%s359 + $0x1b] sm:$0xf]
        %v742 = vpack.c.bf16 %v739, %v738
        %v743 = vpack.c.bf16 %v741, %v740
        %v744 = vld [vmem:[%s1 + $0x180] sm:$0xf]
        %v745 = vld [vmem:[%s1 + $0x184] sm:$0xf]
        %v746 = vld [vmem:[%s1 + $0x188] sm:$0xf]
        %v747 = vld [vmem:[%s1 + $0x18c] sm:$0xf]
        %v748 = vld [vmem:[%s1 + $0x190] sm:$0xf]
        %v749 = vld [vmem:[%s1 + $0x194] sm:$0xf]
        %v750 = vld [vmem:[%s1 + $0x198] sm:$0xf]
        %v751 = vld [vmem:[%s1 + $0x19c] sm:$0xf]
        %v752 = vld [vmem:[%s1 + $0x1a0] sm:$0xf]
        %v753 = vld [vmem:[%s1 + $0x1a4] sm:$0xf]
        %v754 = vld [vmem:[%s1 + $0x1a8] sm:$0xf]
        %v755 = vld [vmem:[%s1 + $0x1ac] sm:$0xf]
        %v756 = vld [vmem:[%s1 + $0x1b0] sm:$0xf]
        %v757 = vld [vmem:[%s1 + $0x1b4] sm:$0xf]
        %v758 = vld [vmem:[%s1 + $0x1b8] sm:$0xf]
        %v759 = vld [vmem:[%s1 + $0x1bc] sm:$0xf]
        %v776 = vunpack.c.l.b16 %v744
        %v777 = vunpack.c.l.b16 %v745
        %v778 = vunpack.c.l.b16 %v746
        %v779 = vunpack.c.l.b16 %v747
        %v780 = vunpack.c.l.b16 %v748
        %v781 = vunpack.c.l.b16 %v749
        %v782 = vunpack.c.l.b16 %v750
        %v783 = vunpack.c.l.b16 %v751
        %v784 = vunpack.c.l.b16 %v752
        %v785 = vunpack.c.l.b16 %v753
        %v786 = vunpack.c.l.b16 %v754
        %v787 = vunpack.c.l.b16 %v755
        %v788 = vunpack.c.l.b16 %v756
        %v789 = vunpack.c.l.b16 %v757
        %v790 = vunpack.c.l.b16 %v758
        %v791 = vunpack.c.l.b16 %v759
        %v792 = vpack.c.b16 %v777, %v776
        %v793 = vpack.c.b16 %v779, %v778
        %v794 = vpack.c.b16 %v781, %v780
        %v795 = vpack.c.b16 %v783, %v782
        %v796 = vpack.c.b16 %v785, %v784
        %v797 = vpack.c.b16 %v787, %v786
        %v798 = vpack.c.b16 %v789, %v788
        %v799 = vpack.c.b16 %v791, %v790
        %808 = vmatprep.subr.bf16.mxu0 0
        %809 = vmatpush1.bf16.msra.mxu0 %v799
        %810 = vmatprep.subr.bf16.mxu0 0
        %811 = vmatpush1.bf16.msra.mxu0 %v798
        %812 = vmatprep.subr.bf16.mxu0 0
        %813 = vmatpush1.bf16.msra.mxu0 %v797
        %814 = vmatprep.subr.bf16.mxu0 0
        %815 = vmatpush1.bf16.msra.mxu0 %v796
        %816 = vmatprep.subr.bf16.mxu0 0
        %817 = vmatpush1.bf16.msra.mxu0 %v795
        %818 = vmatprep.subr.bf16.mxu0 0
        %819 = vmatpush1.bf16.msra.mxu0 %v794
        %820 = vmatprep.subr.bf16.mxu0 0
        %821 = vmatpush1.bf16.msra.mxu0 %v793
        %822 = vmatprep.subr.bf16.mxu0 0
        %823 = vmatpush1.bf16.msra.mxu0 %v792
        %824 = vmatprep.subr.bf16.mxu0 0
        %825 = vmatpush2.bf16.msra.mxu0 0
        %826 = vmatprep.subr.bf16.mxu0 0
        %827 = vmatpush2.bf16.msra.mxu0 0
        %828 = vmatprep.subr.bf16.mxu0 0
        %829 = vmatpush2.bf16.msra.mxu0 0
        %830 = vmatprep.subr.bf16.mxu0 0
        %831 = vmatpush2.bf16.msra.mxu0 0
        %832 = vmatprep.subr.bf16.mxu0 0
        %833 = vmatpush2.bf16.msra.mxu0 0
        %834 = vmatprep.subr.bf16.mxu0 0
        %835 = vmatpush2.bf16.msra.mxu0 0
        %836 = vmatprep.subr.bf16.mxu0 0
        %837 = vmatpush2.bf16.msra.mxu0 0
        %838 = vmatprep.subr.bf16.mxu0 0
        %839 = vmatpush2.bf16.msra.mxu0 0
        %840 = vmatprep.mubr.bf16.mxu0 0
        %841 = vmatmul.mubr.bf16.gmra.mxu0 %v742
        %v842 = vpop.f32.mrf.mxu0
        %v843 = vadd.f32 0.0, %v842
        %v844 = vpop.f32.mrf.mxu0
        %v845 = vpop.f32.mrf.mxu0
        %v846 = vadd.f32 0.0, %v845
        %v847 = vpop.f32.mrf.mxu0
        %848 = vmatprep.mubr.bf16.mxu0 0
        %849 = vmatmul.mubr.bf16.gmra.mxu0 %v743
        %v850 = vpop.f32.mrf.mxu0
        %v851 = vadd.f32 0.0, %v850
        %v852 = vpop.f32.mrf.mxu0
        %v853 = vpop.f32.mrf.mxu0
        %v854 = vadd.f32 0.0, %v853
        %v855 = vpop.f32.mrf.mxu0
        %856 = vdwg.mxu0
        %v857 = vadd.f32 %v734, %v843
        %v858 = vadd.f32 %v735, %v846
        %v859 = vadd.f32 %v736, %v851
        %v860 = vadd.f32 %v737, %v854
        %v861 = vld [vmem:[%s359 + $0x4] sm:$0xff]
        %v862 = vld [vmem:[%s359 + $0xc] sm:$0xff]
        %v863 = vld [vmem:[%s359 + $0x14] sm:$0xff]
        %v864 = vld [vmem:[%s359 + $0x1c] sm:$0xf]
        %v865 = vpack.c.bf16 %v862, %v861
        %v866 = vpack.c.bf16 %v864, %v863
        %v867 = vld [vmem:[%s1 + $0x200] sm:$0xf]
        %v868 = vld [vmem:[%s1 + $0x204] sm:$0xf]
        %v869 = vld [vmem:[%s1 + $0x208] sm:$0xf]
        %v870 = vld [vmem:[%s1 + $0x20c] sm:$0xf]
        %v871 = vld [vmem:[%s1 + $0x210] sm:$0xf]
        %v872 = vld [vmem:[%s1 + $0x214] sm:$0xf]
        %v873 = vld [vmem:[%s1 + $0x218] sm:$0xf]
        %v874 = vld [vmem:[%s1 + $0x21c] sm:$0xf]
        %v875 = vld [vmem:[%s1 + $0x220] sm:$0xf]
        %v876 = vld [vmem:[%s1 + $0x224] sm:$0xf]
        %v877 = vld [vmem:[%s1 + $0x228] sm:$0xf]
        %v878 = vld [vmem:[%s1 + $0x22c] sm:$0xf]
        %v879 = vld [vmem:[%s1 + $0x230] sm:$0xf]
        %v880 = vld [vmem:[%s1 + $0x234] sm:$0xf]
        %v881 = vld [vmem:[%s1 + $0x238] sm:$0xf]
        %v882 = vld [vmem:[%s1 + $0x23c] sm:$0xf]
        %v899 = vunpack.c.l.b16 %v867
        %v900 = vunpack.c.l.b16 %v868
        %v901 = vunpack.c.l.b16 %v869
        %v902 = vunpack.c.l.b16 %v870
        %v903 = vunpack.c.l.b16 %v871
        %v904 = vunpack.c.l.b16 %v872
        %v905 = vunpack.c.l.b16 %v873
        %v906 = vunpack.c.l.b16 %v874
        %v907 = vunpack.c.l.b16 %v875
        %v908 = vunpack.c.l.b16 %v876
        %v909 = vunpack.c.l.b16 %v877
        %v910 = vunpack.c.l.b16 %v878
        %v911 = vunpack.c.l.b16 %v879
        %v912 = vunpack.c.l.b16 %v880
        %v913 = vunpack.c.l.b16 %v881
        %v914 = vunpack.c.l.b16 %v882
        %v915 = vpack.c.b16 %v900, %v899
        %v916 = vpack.c.b16 %v902, %v901
        %v917 = vpack.c.b16 %v904, %v903
        %v918 = vpack.c.b16 %v906, %v905
        %v919 = vpack.c.b16 %v908, %v907
        %v920 = vpack.c.b16 %v910, %v909
        %v921 = vpack.c.b16 %v912, %v911
        %v922 = vpack.c.b16 %v914, %v913
        %931 = vmatprep.subr.bf16.mxu0 0
        %932 = vmatpush1.bf16.msra.mxu0 %v922
        %933 = vmatprep.subr.bf16.mxu0 0
        %934 = vmatpush1.bf16.msra.mxu0 %v921
        %935 = vmatprep.subr.bf16.mxu0 0
        %936 = vmatpush1.bf16.msra.mxu0 %v920
        %937 = vmatprep.subr.bf16.mxu0 0
        %938 = vmatpush1.bf16.msra.mxu0 %v919
        %939 = vmatprep.subr.bf16.mxu0 0
        %940 = vmatpush1.bf16.msra.mxu0 %v918
        %941 = vmatprep.subr.bf16.mxu0 0
        %942 = vmatpush1.bf16.msra.mxu0 %v917
        %943 = vmatprep.subr.bf16.mxu0 0
        %944 = vmatpush1.bf16.msra.mxu0 %v916
        %945 = vmatprep.subr.bf16.mxu0 0
        %946 = vmatpush1.bf16.msra.mxu0 %v915
        %947 = vmatprep.subr.bf16.mxu0 0
        %948 = vmatpush2.bf16.msra.mxu0 0
        %949 = vmatprep.subr.bf16.mxu0 0
        %950 = vmatpush2.bf16.msra.mxu0 0
        %951 = vmatprep.subr.bf16.mxu0 0
        %952 = vmatpush2.bf16.msra.mxu0 0
        %953 = vmatprep.subr.bf16.mxu0 0
        %954 = vmatpush2.bf16.msra.mxu0 0
        %955 = vmatprep.subr.bf16.mxu0 0
        %956 = vmatpush2.bf16.msra.mxu0 0
        %957 = vmatprep.subr.bf16.mxu0 0
        %958 = vmatpush2.bf16.msra.mxu0 0
        %959 = vmatprep.subr.bf16.mxu0 0
        %960 = vmatpush2.bf16.msra.mxu0 0
        %961 = vmatprep.subr.bf16.mxu0 0
        %962 = vmatpush2.bf16.msra.mxu0 0
        %963 = vmatprep.mubr.bf16.mxu0 0
        %964 = vmatmul.mubr.bf16.gmra.mxu0 %v865
        %v965 = vpop.f32.mrf.mxu0
        %v966 = vadd.f32 0.0, %v965
        %v967 = vpop.f32.mrf.mxu0
        %v968 = vpop.f32.mrf.mxu0
        %v969 = vadd.f32 0.0, %v968
        %v970 = vpop.f32.mrf.mxu0
        %971 = vmatprep.mubr.bf16.mxu0 0
        %972 = vmatmul.mubr.bf16.gmra.mxu0 %v866
        %v973 = vpop.f32.mrf.mxu0
        %v974 = vadd.f32 0.0, %v973
        %v975 = vpop.f32.mrf.mxu0
        %v976 = vpop.f32.mrf.mxu0
        %v977 = vadd.f32 0.0, %v976
        %v978 = vpop.f32.mrf.mxu0
        %979 = vdwg.mxu0
        %v980 = vadd.f32 %v857, %v966
        %v981 = vadd.f32 %v858, %v969
        %v982 = vadd.f32 %v859, %v974
        %v983 = vadd.f32 %v860, %v977
        %vm984 = vcmask 228352
        %v986 = vsel %vm984, %v366, 0
        %v989 = vsel %vm984, %v367, 0
        %vm991 = vcmask 1043456
        %v993 = vsel %vm991, %v983, 0
        %995 = vmatprep.subr.mxu0 0.0
        %996 = vmatpush1.msra.mxu0 0.0
        %997 = vmatprep.subr.mxu0 0.0
        %998 = vmatpush1.msra.mxu0 0.0
        %999 = vmatprep.subr.mxu0 0.0
        %1000 = vmatpush1.msra.mxu0 0.0
        %1001 = vmatprep.subr.mxu0 0.0
        %1002 = vmatpush1.msra.mxu0 0.0
        %1003 = vmatprep.subr.mxu0 0.0
        %1004 = vmatpush1.msra.mxu0 0.0
        %1005 = vmatprep.subr.mxu0 0.0
        %1006 = vmatpush1.msra.mxu0 0.0
        %1007 = vmatprep.subr.mxu0 0.0
        %1008 = vmatpush1.msra.mxu0 0.0
        %1009 = vmatprep.subr.mxu0 0.0
        %1010 = vmatpush1.msra.mxu0 0.0
        %1011 = vmatprep.subr.mxu0 0.0
        %1012 = vmatpush1.msra.mxu0 0.0
        %1013 = vmatprep.subr.mxu0 0.0
        %1014 = vmatpush1.msra.mxu0 0.0
        %1015 = vmatprep.subr.mxu0 0.0
        %1016 = vmatpush1.msra.mxu0 0.0
        %1017 = vmatprep.subr.mxu0 0.0
        %1018 = vmatpush1.msra.mxu0 0.0
        %1019 = vmatprep.subr.mxu0 0.0
        %1020 = vmatpush1.msra.mxu0 %v993
        %1021 = vmatprep.subr.mxu0 0.0
        %1022 = vmatpush1.msra.mxu0 %v982
        %1023 = vmatprep.subr.mxu0 0.0
        %1024 = vmatpush1.msra.mxu0 %v981
        %1025 = vmatprep.subr.mxu0 0.0
        %1026 = vmatpush1.msra.mxu0 %v980
        %1027 = vmatprep.subr.mxu0 0.0
        %1028 = vmatpush2.msra.mxu0 0.0
        %1029 = vmatprep.subr.mxu0 0.0
        %1030 = vmatpush2.msra.mxu0 0.0
        %1031 = vmatprep.subr.mxu0 0.0
        %1032 = vmatpush2.msra.mxu0 0.0
        %1033 = vmatprep.subr.mxu0 0.0
        %1034 = vmatpush2.msra.mxu0 0.0
        %1035 = vmatprep.subr.mxu0 0.0
        %1036 = vmatpush2.msra.mxu0 0.0
        %1037 = vmatprep.subr.mxu0 0.0
        %1038 = vmatpush2.msra.mxu0 0.0
        %1039 = vmatprep.subr.mxu0 0.0
        %1040 = vmatpush2.msra.mxu0 0.0
        %1041 = vmatprep.subr.mxu0 0.0
        %1042 = vmatpush2.msra.mxu0 0.0
        %1043 = vmatprep.subr.mxu0 0.0
        %1044 = vmatpush2.msra.mxu0 0.0
        %1045 = vmatprep.subr.mxu0 0.0
        %1046 = vmatpush2.msra.mxu0 0.0
        %1047 = vmatprep.subr.mxu0 0.0
        %1048 = vmatpush2.msra.mxu0 0.0
        %1049 = vmatprep.subr.mxu0 0.0
        %1050 = vmatpush2.msra.mxu0 0.0
        %1051 = vmatprep.subr.mxu0 0.0
        %1052 = vmatpush2.msra.mxu0 0.0
        %1053 = vmatprep.subr.mxu0 0.0
        %1054 = vmatpush2.msra.mxu0 0.0
        %1055 = vmatprep.subr.mxu0 0.0
        %1056 = vmatpush2.msra.mxu0 0.0
        %1057 = vmatprep.subr.mxu0 0.0
        %1058 = vmatpush2.msra.mxu0 0.0
        %1059 = vmatprep.mubr.f32.mxu0 0.0
        %1060 = vmatmul.mubr.f32.gmra.mxu0 %v986
        %v1061 = vpop.f32.mrf.mxu0
        %v1062 = vadd.f32 0.0, %v1061
        %v1063 = vpop.f32.mrf.mxu0
        %1064 = vmatprep.mubr.f32.mxu0 0.0
        %1065 = vmatmul.mubr.f32.gmra.mxu0 %v989
        %v1066 = vpop.f32.mrf.mxu0
        %v1067 = vadd.f32 0.0, %v1066
        %v1068 = vpop.f32.mrf.mxu0
        %1069 = vdwg.mxu0
        %v1071 = vsel %vm984, %v368, 0
        %v1074 = vsel %vm984, %v369, 0
        %1076 = vmatprep.subr.mxu0 0.0
        %1077 = vmatpush1.msra.mxu0 0.0
        %1078 = vmatprep.subr.mxu0 0.0
        %1079 = vmatpush1.msra.mxu0 0.0
        %1080 = vmatprep.subr.mxu0 0.0
        %1081 = vmatpush1.msra.mxu0 0.0
        %1082 = vmatprep.subr.mxu0 0.0
        %1083 = vmatpush1.msra.mxu0 0.0
        %1084 = vmatprep.subr.mxu0 0.0
        %1085 = vmatpush1.msra.mxu0 0.0
        %1086 = vmatprep.subr.mxu0 0.0
        %1087 = vmatpush1.msra.mxu0 0.0
        %1088 = vmatprep.subr.mxu0 0.0
        %1089 = vmatpush1.msra.mxu0 0.0
        %1090 = vmatprep.subr.mxu0 0.0
        %1091 = vmatpush1.msra.mxu0 0.0
        %1092 = vmatprep.subr.mxu0 0.0
        %1093 = vmatpush1.msra.mxu0 0.0
        %1094 = vmatprep.subr.mxu0 0.0
        %1095 = vmatpush1.msra.mxu0 0.0
        %1096 = vmatprep.subr.mxu0 0.0
        %1097 = vmatpush1.msra.mxu0 0.0
        %1098 = vmatprep.subr.mxu0 0.0
        %1099 = vmatpush1.msra.mxu0 0.0
        %1100 = vmatprep.subr.mxu0 0.0
        %1101 = vmatpush1.msra.mxu0 %v993
        %1102 = vmatprep.subr.mxu0 0.0
        %1103 = vmatpush1.msra.mxu0 %v982
        %1104 = vmatprep.subr.mxu0 0.0
        %1105 = vmatpush1.msra.mxu0 %v981
        %1106 = vmatprep.subr.mxu0 0.0
        %1107 = vmatpush1.msra.mxu0 %v980
        %1108 = vmatprep.subr.mxu0 0.0
        %1109 = vmatpush2.msra.mxu0 0.0
        %1110 = vmatprep.subr.mxu0 0.0
        %1111 = vmatpush2.msra.mxu0 0.0
        %1112 = vmatprep.subr.mxu0 0.0
        %1113 = vmatpush2.msra.mxu0 0.0
        %1114 = vmatprep.subr.mxu0 0.0
        %1115 = vmatpush2.msra.mxu0 0.0
        %1116 = vmatprep.subr.mxu0 0.0
        %1117 = vmatpush2.msra.mxu0 0.0
        %1118 = vmatprep.subr.mxu0 0.0
        %1119 = vmatpush2.msra.mxu0 0.0
        %1120 = vmatprep.subr.mxu0 0.0
        %1121 = vmatpush2.msra.mxu0 0.0
        %1122 = vmatprep.subr.mxu0 0.0
        %1123 = vmatpush2.msra.mxu0 0.0
        %1124 = vmatprep.subr.mxu0 0.0
        %1125 = vmatpush2.msra.mxu0 0.0
        %1126 = vmatprep.subr.mxu0 0.0
        %1127 = vmatpush2.msra.mxu0 0.0
        %1128 = vmatprep.subr.mxu0 0.0
        %1129 = vmatpush2.msra.mxu0 0.0
        %1130 = vmatprep.subr.mxu0 0.0
        %1131 = vmatpush2.msra.mxu0 0.0
        %1132 = vmatprep.subr.mxu0 0.0
        %1133 = vmatpush2.msra.mxu0 0.0
        %1134 = vmatprep.subr.mxu0 0.0
        %1135 = vmatpush2.msra.mxu0 0.0
        %1136 = vmatprep.subr.mxu0 0.0
        %1137 = vmatpush2.msra.mxu0 0.0
        %1138 = vmatprep.subr.mxu0 0.0
        %1139 = vmatpush2.msra.mxu0 0.0
        %1140 = vmatprep.mubr.f32.mxu0 0.0
        %1141 = vmatmul.mubr.f32.gmra.mxu0 %v1071
        %v1142 = vpop.f32.mrf.mxu0
        %v1143 = vadd.f32 0.0, %v1142
        %v1144 = vpop.f32.mrf.mxu0
        %1145 = vmatprep.mubr.f32.mxu0 0.0
        %1146 = vmatmul.mubr.f32.gmra.mxu0 %v1074
        %v1147 = vpop.f32.mrf.mxu0
        %v1148 = vadd.f32 0.0, %v1147
        %v1149 = vpop.f32.mrf.mxu0
        %1150 = vdwg.mxu0
        %v1151 = vmax.f32 %v1062, %v1143
        %v1152 = vmax.f32 %v1067, %v1148
        %1153 = vrot.lane.b32.xlu0 %v1151, 122
        %v1154 = vpop.permute.xlu0 %1153
        %1155 = vrot.lane.b32.xlu0 %v1152, 122
        %v1156 = vpop.permute.xlu0 %1155
        %v1157 = vmax.f32 %v1151, %v1154
        %v1158 = vmax.f32 %v1152, %v1156
        %v1159 = vld [vmem:[#allocation8 + $0x30] sm:$0xff]
        %v1160 = vld [vmem:[#allocation8 + $0x38] sm:$0xff]
        %v1161 = vld [vmem:[#allocation8 + $0x40] sm:$0xff]
        %v1162 = vld [vmem:[#allocation8 + $0x48] sm:$0xff]
        %v1163 = vld [vmem:[#allocation8 + $0x50] sm:$0xff]
        %v1164 = vld [vmem:[#allocation8 + $0x58] sm:$0xff]
        %v1165 = vld [vmem:[#allocation8 + $0x60] sm:$0xff]
        %v1166 = vld [vmem:[#allocation8 + $0x68] sm:$0xff]
        %v1167 = vld [vmem:[#allocation8 + $0x70] sm:$0xff]
        %v1168 = vld [vmem:[#allocation8 + $0x78] sm:$0xff]
        %v1169 = vld [vmem:[#allocation8 + $0x80] sm:$0xff]
        %v1170 = vld [vmem:[#allocation8 + $0x88] sm:$0xff]
        %v1171 = vld [vmem:[#allocation8 + $0x90] sm:$0xff]
        %v1172 = vld [vmem:[#allocation8 + $0x98] sm:$0xff]
        %v1173 = vld [vmem:[#allocation8 + $0xa0] sm:$0xff]
        %v1174 = vld [vmem:[#allocation8 + $0xa8] sm:$0xff]
        %v1175 = vld [vmem:[%s1 + $0x40] sm:$0xf]
        %v1176 = vld [vmem:[%s1 + $0x44] sm:$0xf]
        %v1177 = vld [vmem:[%s1 + $0x48] sm:$0xf]
        %v1178 = vld [vmem:[%s1 + $0x4c] sm:$0xf]
        %v1179 = vld [vmem:[%s1 + $0x50] sm:$0xf]
        %v1180 = vld [vmem:[%s1 + $0x54] sm:$0xf]
        %v1181 = vld [vmem:[%s1 + $0x58] sm:$0xf]
        %v1182 = vld [vmem:[%s1 + $0x5c] sm:$0xf]
        %v1183 = vld [vmem:[%s1 + $0x60] sm:$0xf]
        %v1184 = vld [vmem:[%s1 + $0x64] sm:$0xf]
        %v1185 = vld [vmem:[%s1 + $0x68] sm:$0xf]
        %v1186 = vld [vmem:[%s1 + $0x6c] sm:$0xf]
        %v1187 = vld [vmem:[%s1 + $0x70] sm:$0xf]
        %v1188 = vld [vmem:[%s1 + $0x74] sm:$0xf]
        %v1189 = vld [vmem:[%s1 + $0x78] sm:$0xf]
        %v1190 = vld [vmem:[%s1 + $0x7c] sm:$0xf]
        %v1191 = vld [vmem:[%s1 + $0xc0] sm:$0xf]
        %v1192 = vld [vmem:[%s1 + $0xc4] sm:$0xf]
        %v1193 = vld [vmem:[%s1 + $0xc8] sm:$0xf]
        %v1194 = vld [vmem:[%s1 + $0xcc] sm:$0xf]
        %v1195 = vld [vmem:[%s1 + $0xd0] sm:$0xf]
        %v1196 = vld [vmem:[%s1 + $0xd4] sm:$0xf]
        %v1197 = vld [vmem:[%s1 + $0xd8] sm:$0xf]
        %v1198 = vld [vmem:[%s1 + $0xdc] sm:$0xf]
        %v1199 = vld [vmem:[%s1 + $0xe0] sm:$0xf]
        %v1200 = vld [vmem:[%s1 + $0xe4] sm:$0xf]
        %v1201 = vld [vmem:[%s1 + $0xe8] sm:$0xf]
        %v1202 = vld [vmem:[%s1 + $0xec] sm:$0xf]
        %v1203 = vld [vmem:[%s1 + $0xf0] sm:$0xf]
        %v1204 = vld [vmem:[%s1 + $0xf4] sm:$0xf]
        %v1205 = vld [vmem:[%s1 + $0xf8] sm:$0xf]
        %v1206 = vld [vmem:[%s1 + $0xfc] sm:$0xf]
        %v1223 = vunpack.c.l.b16 %v1191
        %v1224 = vunpack.c.l.b16 %v1192
        %v1225 = vunpack.c.l.b16 %v1193
        %v1226 = vunpack.c.l.b16 %v1194
        %v1227 = vunpack.c.l.b16 %v1195
        %v1228 = vunpack.c.l.b16 %v1196
        %v1229 = vunpack.c.l.b16 %v1197
        %v1230 = vunpack.c.l.b16 %v1198
        %v1231 = vunpack.c.l.b16 %v1199
        %v1232 = vunpack.c.l.b16 %v1200
        %v1233 = vunpack.c.l.b16 %v1201
        %v1234 = vunpack.c.l.b16 %v1202
        %v1235 = vunpack.c.l.b16 %v1203
        %v1236 = vunpack.c.l.b16 %v1204
        %v1237 = vunpack.c.l.b16 %v1205
        %v1238 = vunpack.c.l.b16 %v1206
        %v1239 = vpack.c.b16 %v1224, %v1223
        %v1240 = vpack.c.b16 %v1226, %v1225
        %v1241 = vpack.c.b16 %v1228, %v1227
        %v1242 = vpack.c.b16 %v1230, %v1229
        %v1243 = vpack.c.b16 %v1232, %v1231
        %v1244 = vpack.c.b16 %v1234, %v1233
        %v1245 = vpack.c.b16 %v1236, %v1235
        %v1246 = vpack.c.b16 %v1238, %v1237
        %1255 = vmatprep.subr.bf16.mxu0 0
        %1256 = vmatpush1.bf16.msra.mxu0 %v1246
        %1257 = vmatprep.subr.bf16.mxu0 0
        %1258 = vmatpush1.bf16.msra.mxu0 %v1245
        %1259 = vmatprep.subr.bf16.mxu0 0
        %1260 = vmatpush1.bf16.msra.mxu0 %v1244
        %1261 = vmatprep.subr.bf16.mxu0 0
        %1262 = vmatpush1.bf16.msra.mxu0 %v1243
        %1263 = vmatprep.subr.bf16.mxu0 0
        %1264 = vmatpush1.bf16.msra.mxu0 %v1242
        %1265 = vmatprep.subr.bf16.mxu0 0
        %1266 = vmatpush1.bf16.msra.mxu0 %v1241
        %1267 = vmatprep.subr.bf16.mxu0 0
        %1268 = vmatpush1.bf16.msra.mxu0 %v1240
        %1269 = vmatprep.subr.bf16.mxu0 0
        %1270 = vmatpush1.bf16.msra.mxu0 %v1239
        %1271 = vmatprep.subr.bf16.mxu0 0
        %1272 = vmatpush2.bf16.msra.mxu0 0
        %1273 = vmatprep.subr.bf16.mxu0 0
        %1274 = vmatpush2.bf16.msra.mxu0 0
        %1275 = vmatprep.subr.bf16.mxu0 0
        %1276 = vmatpush2.bf16.msra.mxu0 0
        %1277 = vmatprep.subr.bf16.mxu0 0
        %1278 = vmatpush2.bf16.msra.mxu0 0
        %1279 = vmatprep.subr.bf16.mxu0 0
        %1280 = vmatpush2.bf16.msra.mxu0 0
        %1281 = vmatprep.subr.bf16.mxu0 0
        %1282 = vmatpush2.bf16.msra.mxu0 0
        %1283 = vmatprep.subr.bf16.mxu0 0
        %1284 = vmatpush2.bf16.msra.mxu0 0
        %1285 = vmatprep.subr.bf16.mxu0 0
        %1286 = vmatpush2.bf16.msra.mxu0 0
        %1287 = vmatprep.mubr.bf16.mxu0 0
        %1288 = vmatmul.mubr.bf16.gmra.mxu0 %v403
        %v1289 = vpop.f32.mrf.mxu0
        %v1290 = vadd.f32 0.0, %v1289
        %v1291 = vpop.f32.mrf.mxu0
        %v1292 = vpop.f32.mrf.mxu0
        %v1293 = vadd.f32 0.0, %v1292
        %v1294 = vpop.f32.mrf.mxu0
        %1295 = vmatprep.mubr.bf16.mxu0 0
        %1296 = vmatmul.mubr.bf16.gmra.mxu0 %v404
        %v1297 = vpop.f32.mrf.mxu0
        %v1298 = vadd.f32 0.0, %v1297
        %v1299 = vpop.f32.mrf.mxu0
        %v1300 = vpop.f32.mrf.mxu0
        %v1301 = vadd.f32 0.0, %v1300
        %v1302 = vpop.f32.mrf.mxu0
        %1303 = vdwg.mxu0
        %v1320 = vunpack.c.l.b16 %v1175
        %v1321 = vunpack.c.l.b16 %v1176
        %v1322 = vunpack.c.l.b16 %v1177
        %v1323 = vunpack.c.l.b16 %v1178
        %v1324 = vunpack.c.l.b16 %v1179
        %v1325 = vunpack.c.l.b16 %v1180
        %v1326 = vunpack.c.l.b16 %v1181
        %v1327 = vunpack.c.l.b16 %v1182
        %v1328 = vunpack.c.l.b16 %v1183
        %v1329 = vunpack.c.l.b16 %v1184
        %v1330 = vunpack.c.l.b16 %v1185
        %v1331 = vunpack.c.l.b16 %v1186
        %v1332 = vunpack.c.l.b16 %v1187
        %v1333 = vunpack.c.l.b16 %v1188
        %v1334 = vunpack.c.l.b16 %v1189
        %v1335 = vunpack.c.l.b16 %v1190
        %v1336 = vpack.c.b16 %v1321, %v1320
        %v1337 = vpack.c.b16 %v1323, %v1322
        %v1338 = vpack.c.b16 %v1325, %v1324
        %v1339 = vpack.c.b16 %v1327, %v1326
        %v1340 = vpack.c.b16 %v1329, %v1328
        %v1341 = vpack.c.b16 %v1331, %v1330
        %v1342 = vpack.c.b16 %v1333, %v1332
        %v1343 = vpack.c.b16 %v1335, %v1334
        %1352 = vmatprep.subr.bf16.mxu0 0
        %1353 = vmatpush1.bf16.msra.mxu0 %v1343
        %1354 = vmatprep.subr.bf16.mxu0 0
        %1355 = vmatpush1.bf16.msra.mxu0 %v1342
        %1356 = vmatprep.subr.bf16.mxu0 0
        %1357 = vmatpush1.bf16.msra.mxu0 %v1341
        %1358 = vmatprep.subr.bf16.mxu0 0
        %1359 = vmatpush1.bf16.msra.mxu0 %v1340
        %1360 = vmatprep.subr.bf16.mxu0 0
        %1361 = vmatpush1.bf16.msra.mxu0 %v1339
        %1362 = vmatprep.subr.bf16.mxu0 0
        %1363 = vmatpush1.bf16.msra.mxu0 %v1338
        %1364 = vmatprep.subr.bf16.mxu0 0
        %1365 = vmatpush1.bf16.msra.mxu0 %v1337
        %1366 = vmatprep.subr.bf16.mxu0 0
        %1367 = vmatpush1.bf16.msra.mxu0 %v1336
        %1368 = vmatprep.subr.bf16.mxu0 0
        %1369 = vmatpush2.bf16.msra.mxu0 0
        %1370 = vmatprep.subr.bf16.mxu0 0
        %1371 = vmatpush2.bf16.msra.mxu0 0
        %1372 = vmatprep.subr.bf16.mxu0 0
        %1373 = vmatpush2.bf16.msra.mxu0 0
        %1374 = vmatprep.subr.bf16.mxu0 0
        %1375 = vmatpush2.bf16.msra.mxu0 0
        %1376 = vmatprep.subr.bf16.mxu0 0
        %1377 = vmatpush2.bf16.msra.mxu0 0
        %1378 = vmatprep.subr.bf16.mxu0 0
        %1379 = vmatpush2.bf16.msra.mxu0 0
        %1380 = vmatprep.subr.bf16.mxu0 0
        %1381 = vmatpush2.bf16.msra.mxu0 0
        %1382 = vmatprep.subr.bf16.mxu0 0
        %1383 = vmatpush2.bf16.msra.mxu0 0
        %1384 = vmatprep.mubr.bf16.mxu0 0
        %1385 = vmatmul.mubr.bf16.gmra.mxu0 %v381
        %v1386 = vpop.f32.mrf.mxu0
        %v1387 = vadd.f32 %v1290, %v1386
        %v1388 = vpop.f32.mrf.mxu0
        %v1389 = vpop.f32.mrf.mxu0
        %v1390 = vadd.f32 %v1293, %v1389
        %v1391 = vpop.f32.mrf.mxu0
        %1392 = vmatprep.mubr.bf16.mxu0 0
        %1393 = vmatmul.mubr.bf16.gmra.mxu0 %v382
        %v1394 = vpop.f32.mrf.mxu0
        %v1395 = vadd.f32 %v1298, %v1394
        %v1396 = vpop.f32.mrf.mxu0
        %v1397 = vpop.f32.mrf.mxu0
        %v1398 = vadd.f32 %v1301, %v1397
        %v1399 = vpop.f32.mrf.mxu0
        %1400 = vdwg.mxu0
        %v1401 = vld [vmem:[%s1 + $0x140] sm:$0xf]
        %v1402 = vld [vmem:[%s1 + $0x144] sm:$0xf]
        %v1403 = vld [vmem:[%s1 + $0x148] sm:$0xf]
        %v1404 = vld [vmem:[%s1 + $0x14c] sm:$0xf]
        %v1405 = vld [vmem:[%s1 + $0x150] sm:$0xf]
        %v1406 = vld [vmem:[%s1 + $0x154] sm:$0xf]
        %v1407 = vld [vmem:[%s1 + $0x158] sm:$0xf]
        %v1408 = vld [vmem:[%s1 + $0x15c] sm:$0xf]
        %v1409 = vld [vmem:[%s1 + $0x160] sm:$0xf]
        %v1410 = vld [vmem:[%s1 + $0x164] sm:$0xf]
        %v1411 = vld [vmem:[%s1 + $0x168] sm:$0xf]
        %v1412 = vld [vmem:[%s1 + $0x16c] sm:$0xf]
        %v1413 = vld [vmem:[%s1 + $0x170] sm:$0xf]
        %v1414 = vld [vmem:[%s1 + $0x174] sm:$0xf]
        %v1415 = vld [vmem:[%s1 + $0x178] sm:$0xf]
        %v1416 = vld [vmem:[%s1 + $0x17c] sm:$0xf]
        %v1433 = vunpack.c.l.b16 %v1401
        %v1434 = vunpack.c.l.b16 %v1402
        %v1435 = vunpack.c.l.b16 %v1403
        %v1436 = vunpack.c.l.b16 %v1404
        %v1437 = vunpack.c.l.b16 %v1405
        %v1438 = vunpack.c.l.b16 %v1406
        %v1439 = vunpack.c.l.b16 %v1407
        %v1440 = vunpack.c.l.b16 %v1408
        %v1441 = vunpack.c.l.b16 %v1409
        %v1442 = vunpack.c.l.b16 %v1410
        %v1443 = vunpack.c.l.b16 %v1411
        %v1444 = vunpack.c.l.b16 %v1412
        %v1445 = vunpack.c.l.b16 %v1413
        %v1446 = vunpack.c.l.b16 %v1414
        %v1447 = vunpack.c.l.b16 %v1415
        %v1448 = vunpack.c.l.b16 %v1416
        %v1449 = vpack.c.b16 %v1434, %v1433
        %v1450 = vpack.c.b16 %v1436, %v1435
        %v1451 = vpack.c.b16 %v1438, %v1437
        %v1452 = vpack.c.b16 %v1440, %v1439
        %v1453 = vpack.c.b16 %v1442, %v1441
        %v1454 = vpack.c.b16 %v1444, %v1443
        %v1455 = vpack.c.b16 %v1446, %v1445
        %v1456 = vpack.c.b16 %v1448, %v1447
        %1465 = vmatprep.subr.bf16.mxu0 0
        %1466 = vmatpush1.bf16.msra.mxu0 %v1456
        %1467 = vmatprep.subr.bf16.mxu0 0
        %1468 = vmatpush1.bf16.msra.mxu0 %v1455
        %1469 = vmatprep.subr.bf16.mxu0 0
        %1470 = vmatpush1.bf16.msra.mxu0 %v1454
        %1471 = vmatprep.subr.bf16.mxu0 0
        %1472 = vmatpush1.bf16.msra.mxu0 %v1453
        %1473 = vmatprep.subr.bf16.mxu0 0
        %1474 = vmatpush1.bf16.msra.mxu0 %v1452
        %1475 = vmatprep.subr.bf16.mxu0 0
        %1476 = vmatpush1.bf16.msra.mxu0 %v1451
        %1477 = vmatprep.subr.bf16.mxu0 0
        %1478 = vmatpush1.bf16.msra.mxu0 %v1450
        %1479 = vmatprep.subr.bf16.mxu0 0
        %1480 = vmatpush1.bf16.msra.mxu0 %v1449
        %1481 = vmatprep.subr.bf16.mxu0 0
        %1482 = vmatpush2.bf16.msra.mxu0 0
        %1483 = vmatprep.subr.bf16.mxu0 0
        %1484 = vmatpush2.bf16.msra.mxu0 0
        %1485 = vmatprep.subr.bf16.mxu0 0
        %1486 = vmatpush2.bf16.msra.mxu0 0
        %1487 = vmatprep.subr.bf16.mxu0 0
        %1488 = vmatpush2.bf16.msra.mxu0 0
        %1489 = vmatprep.subr.bf16.mxu0 0
        %1490 = vmatpush2.bf16.msra.mxu0 0
        %1491 = vmatprep.subr.bf16.mxu0 0
        %1492 = vmatpush2.bf16.msra.mxu0 0
        %1493 = vmatprep.subr.bf16.mxu0 0
        %1494 = vmatpush2.bf16.msra.mxu0 0
        %1495 = vmatprep.subr.bf16.mxu0 0
        %1496 = vmatpush2.bf16.msra.mxu0 0
        %1497 = vmatprep.mubr.bf16.mxu0 0
        %1498 = vmatmul.mubr.bf16.gmra.mxu0 %v619
        %v1499 = vpop.f32.mrf.mxu0
        %v1500 = vadd.f32 0.0, %v1499
        %v1501 = vpop.f32.mrf.mxu0
        %v1502 = vpop.f32.mrf.mxu0
        %v1503 = vadd.f32 0.0, %v1502
        %v1504 = vpop.f32.mrf.mxu0
        %1505 = vmatprep.mubr.bf16.mxu0 0
        %1506 = vmatmul.mubr.bf16.gmra.mxu0 %v620
        %v1507 = vpop.f32.mrf.mxu0
        %v1508 = vadd.f32 0.0, %v1507
        %v1509 = vpop.f32.mrf.mxu0
        %v1510 = vpop.f32.mrf.mxu0
        %v1511 = vadd.f32 0.0, %v1510
        %v1512 = vpop.f32.mrf.mxu0
        %1513 = vdwg.mxu0
        %v1514 = vadd.f32 %v1387, %v1500
        %v1515 = vadd.f32 %v1390, %v1503
        %v1516 = vadd.f32 %v1395, %v1508
        %v1517 = vadd.f32 %v1398, %v1511
        %v1518 = vld [vmem:[%s1 + $0x1c0] sm:$0xf]
        %v1519 = vld [vmem:[%s1 + $0x1c4] sm:$0xf]
        %v1520 = vld [vmem:[%s1 + $0x1c8] sm:$0xf]
        %v1521 = vld [vmem:[%s1 + $0x1cc] sm:$0xf]
        %v1522 = vld [vmem:[%s1 + $0x1d0] sm:$0xf]
        %v1523 = vld [vmem:[%s1 + $0x1d4] sm:$0xf]
        %v1524 = vld [vmem:[%s1 + $0x1d8] sm:$0xf]
        %v1525 = vld [vmem:[%s1 + $0x1dc] sm:$0xf]
        %v1526 = vld [vmem:[%s1 + $0x1e0] sm:$0xf]
        %v1527 = vld [vmem:[%s1 + $0x1e4] sm:$0xf]
        %v1528 = vld [vmem:[%s1 + $0x1e8] sm:$0xf]
        %v1529 = vld [vmem:[%s1 + $0x1ec] sm:$0xf]
        %v1530 = vld [vmem:[%s1 + $0x1f0] sm:$0xf]
        %v1531 = vld [vmem:[%s1 + $0x1f4] sm:$0xf]
        %v1532 = vld [vmem:[%s1 + $0x1f8] sm:$0xf]
        %v1533 = vld [vmem:[%s1 + $0x1fc] sm:$0xf]
        %v1550 = vunpack.c.l.b16 %v1518
        %v1551 = vunpack.c.l.b16 %v1519
        %v1552 = vunpack.c.l.b16 %v1520
        %v1553 = vunpack.c.l.b16 %v1521
        %v1554 = vunpack.c.l.b16 %v1522
        %v1555 = vunpack.c.l.b16 %v1523
        %v1556 = vunpack.c.l.b16 %v1524
        %v1557 = vunpack.c.l.b16 %v1525
        %v1558 = vunpack.c.l.b16 %v1526
        %v1559 = vunpack.c.l.b16 %v1527
        %v1560 = vunpack.c.l.b16 %v1528
        %v1561 = vunpack.c.l.b16 %v1529
        %v1562 = vunpack.c.l.b16 %v1530
        %v1563 = vunpack.c.l.b16 %v1531
        %v1564 = vunpack.c.l.b16 %v1532
        %v1565 = vunpack.c.l.b16 %v1533
        %v1566 = vpack.c.b16 %v1551, %v1550
        %v1567 = vpack.c.b16 %v1553, %v1552
        %v1568 = vpack.c.b16 %v1555, %v1554
        %v1569 = vpack.c.b16 %v1557, %v1556
        %v1570 = vpack.c.b16 %v1559, %v1558
        %v1571 = vpack.c.b16 %v1561, %v1560
        %v1572 = vpack.c.b16 %v1563, %v1562
        %v1573 = vpack.c.b16 %v1565, %v1564
        %1582 = vmatprep.subr.bf16.mxu0 0
        %1583 = vmatpush1.bf16.msra.mxu0 %v1573
        %1584 = vmatprep.subr.bf16.mxu0 0
        %1585 = vmatpush1.bf16.msra.mxu0 %v1572
        %1586 = vmatprep.subr.bf16.mxu0 0
        %1587 = vmatpush1.bf16.msra.mxu0 %v1571
        %1588 = vmatprep.subr.bf16.mxu0 0
        %1589 = vmatpush1.bf16.msra.mxu0 %v1570
        %1590 = vmatprep.subr.bf16.mxu0 0
        %1591 = vmatpush1.bf16.msra.mxu0 %v1569
        %1592 = vmatprep.subr.bf16.mxu0 0
        %1593 = vmatpush1.bf16.msra.mxu0 %v1568
        %1594 = vmatprep.subr.bf16.mxu0 0
        %1595 = vmatpush1.bf16.msra.mxu0 %v1567
        %1596 = vmatprep.subr.bf16.mxu0 0
        %1597 = vmatpush1.bf16.msra.mxu0 %v1566
        %1598 = vmatprep.subr.bf16.mxu0 0
        %1599 = vmatpush2.bf16.msra.mxu0 0
        %1600 = vmatprep.subr.bf16.mxu0 0
        %1601 = vmatpush2.bf16.msra.mxu0 0
        %1602 = vmatprep.subr.bf16.mxu0 0
        %1603 = vmatpush2.bf16.msra.mxu0 0
        %1604 = vmatprep.subr.bf16.mxu0 0
        %1605 = vmatpush2.bf16.msra.mxu0 0
        %1606 = vmatprep.subr.bf16.mxu0 0
        %1607 = vmatpush2.bf16.msra.mxu0 0
        %1608 = vmatprep.subr.bf16.mxu0 0
        %1609 = vmatpush2.bf16.msra.mxu0 0
        %1610 = vmatprep.subr.bf16.mxu0 0
        %1611 = vmatpush2.bf16.msra.mxu0 0
        %1612 = vmatprep.subr.bf16.mxu0 0
        %1613 = vmatpush2.bf16.msra.mxu0 0
        %1614 = vmatprep.mubr.bf16.mxu0 0
        %1615 = vmatmul.mubr.bf16.gmra.mxu0 %v742
        %v1616 = vpop.f32.mrf.mxu0
        %v1617 = vadd.f32 0.0, %v1616
        %v1618 = vpop.f32.mrf.mxu0
        %v1619 = vpop.f32.mrf.mxu0
        %v1620 = vadd.f32 0.0, %v1619
        %v1621 = vpop.f32.mrf.mxu0
        %1622 = vmatprep.mubr.bf16.mxu0 0
        %1623 = vmatmul.mubr.bf16.gmra.mxu0 %v743
        %v1624 = vpop.f32.mrf.mxu0
        %v1625 = vadd.f32 0.0, %v1624
        %v1626 = vpop.f32.mrf.mxu0
        %v1627 = vpop.f32.mrf.mxu0
        %v1628 = vadd.f32 0.0, %v1627
        %v1629 = vpop.f32.mrf.mxu0
        %1630 = vdwg.mxu0
        %v1631 = vadd.f32 %v1514, %v1617
        %v1632 = vadd.f32 %v1515, %v1620
        %v1633 = vadd.f32 %v1516, %v1625
        %v1634 = vadd.f32 %v1517, %v1628
        %v1635 = vld [vmem:[%s1 + $0x240] sm:$0xf]
        %v1636 = vld [vmem:[%s1 + $0x244] sm:$0xf]
        %v1637 = vld [vmem:[%s1 + $0x248] sm:$0xf]
        %v1638 = vld [vmem:[%s1 + $0x24c] sm:$0xf]
        %v1639 = vld [vmem:[%s1 + $0x250] sm:$0xf]
        %v1640 = vld [vmem:[%s1 + $0x254] sm:$0xf]
        %v1641 = vld [vmem:[%s1 + $0x258] sm:$0xf]
        %v1642 = vld [vmem:[%s1 + $0x25c] sm:$0xf]
        %v1643 = vld [vmem:[%s1 + $0x260] sm:$0xf]
        %v1644 = vld [vmem:[%s1 + $0x264] sm:$0xf]
        %v1645 = vld [vmem:[%s1 + $0x268] sm:$0xf]
        %v1646 = vld [vmem:[%s1 + $0x26c] sm:$0xf]
        %v1647 = vld [vmem:[%s1 + $0x270] sm:$0xf]
        %v1648 = vld [vmem:[%s1 + $0x274] sm:$0xf]
        %v1649 = vld [vmem:[%s1 + $0x278] sm:$0xf]
        %v1650 = vld [vmem:[%s1 + $0x27c] sm:$0xf]
        %v1667 = vunpack.c.l.b16 %v1635
        %v1668 = vunpack.c.l.b16 %v1636
        %v1669 = vunpack.c.l.b16 %v1637
        %v1670 = vunpack.c.l.b16 %v1638
        %v1671 = vunpack.c.l.b16 %v1639
        %v1672 = vunpack.c.l.b16 %v1640
        %v1673 = vunpack.c.l.b16 %v1641
        %v1674 = vunpack.c.l.b16 %v1642
        %v1675 = vunpack.c.l.b16 %v1643
        %v1676 = vunpack.c.l.b16 %v1644
        %v1677 = vunpack.c.l.b16 %v1645
        %v1678 = vunpack.c.l.b16 %v1646
        %v1679 = vunpack.c.l.b16 %v1647
        %v1680 = vunpack.c.l.b16 %v1648
        %v1681 = vunpack.c.l.b16 %v1649
        %v1682 = vunpack.c.l.b16 %v1650
        %v1683 = vpack.c.b16 %v1668, %v1667
        %v1684 = vpack.c.b16 %v1670, %v1669
        %v1685 = vpack.c.b16 %v1672, %v1671
        %v1686 = vpack.c.b16 %v1674, %v1673
        %v1687 = vpack.c.b16 %v1676, %v1675
        %v1688 = vpack.c.b16 %v1678, %v1677
        %v1689 = vpack.c.b16 %v1680, %v1679
        %v1690 = vpack.c.b16 %v1682, %v1681
        %1699 = vmatprep.subr.bf16.mxu0 0
        %1700 = vmatpush1.bf16.msra.mxu0 %v1690
        %1701 = vmatprep.subr.bf16.mxu0 0
        %1702 = vmatpush1.bf16.msra.mxu0 %v1689
        %1703 = vmatprep.subr.bf16.mxu0 0
        %1704 = vmatpush1.bf16.msra.mxu0 %v1688
        %1705 = vmatprep.subr.bf16.mxu0 0
        %1706 = vmatpush1.bf16.msra.mxu0 %v1687
        %1707 = vmatprep.subr.bf16.mxu0 0
        %1708 = vmatpush1.bf16.msra.mxu0 %v1686
        %1709 = vmatprep.subr.bf16.mxu0 0
        %1710 = vmatpush1.bf16.msra.mxu0 %v1685
        %1711 = vmatprep.subr.bf16.mxu0 0
        %1712 = vmatpush1.bf16.msra.mxu0 %v1684
        %1713 = vmatprep.subr.bf16.mxu0 0
        %1714 = vmatpush1.bf16.msra.mxu0 %v1683
        %1715 = vmatprep.subr.bf16.mxu0 0
        %1716 = vmatpush2.bf16.msra.mxu0 0
        %1717 = vmatprep.subr.bf16.mxu0 0
        %1718 = vmatpush2.bf16.msra.mxu0 0
        %1719 = vmatprep.subr.bf16.mxu0 0
        %1720 = vmatpush2.bf16.msra.mxu0 0
        %1721 = vmatprep.subr.bf16.mxu0 0
        %1722 = vmatpush2.bf16.msra.mxu0 0
        %1723 = vmatprep.subr.bf16.mxu0 0
        %1724 = vmatpush2.bf16.msra.mxu0 0
        %1725 = vmatprep.subr.bf16.mxu0 0
        %1726 = vmatpush2.bf16.msra.mxu0 0
        %1727 = vmatprep.subr.bf16.mxu0 0
        %1728 = vmatpush2.bf16.msra.mxu0 0
        %1729 = vmatprep.subr.bf16.mxu0 0
        %1730 = vmatpush2.bf16.msra.mxu0 0
        %1731 = vmatprep.mubr.bf16.mxu0 0
        %1732 = vmatmul.mubr.bf16.gmra.mxu0 %v865
        %v1733 = vpop.f32.mrf.mxu0
        %v1734 = vadd.f32 0.0, %v1733
        %v1735 = vpop.f32.mrf.mxu0
        %v1736 = vpop.f32.mrf.mxu0
        %v1737 = vadd.f32 0.0, %v1736
        %v1738 = vpop.f32.mrf.mxu0
        %1739 = vmatprep.mubr.bf16.mxu0 0
        %1740 = vmatmul.mubr.bf16.gmra.mxu0 %v866
        %v1741 = vpop.f32.mrf.mxu0
        %v1742 = vadd.f32 0.0, %v1741
        %v1743 = vpop.f32.mrf.mxu0
        %v1744 = vpop.f32.mrf.mxu0
        %v1745 = vadd.f32 0.0, %v1744
        %v1746 = vpop.f32.mrf.mxu0
        %1747 = vdwg.mxu0
        %v1748 = vadd.f32 %v1631, %v1734
        %v1749 = vadd.f32 %v1632, %v1737
        %v1750 = vadd.f32 %v1633, %v1742
        %v1751 = vadd.f32 %v1634, %v1745
        %v1753 = vsel %vm991, %v1751, 0
        %1755 = vmatprep.subr.mxu0 0.0
        %1756 = vmatpush1.msra.mxu0 0.0
        %1757 = vmatprep.subr.mxu0 0.0
        %1758 = vmatpush1.msra.mxu0 0.0
        %1759 = vmatprep.subr.mxu0 0.0
        %1760 = vmatpush1.msra.mxu0 0.0
        %1761 = vmatprep.subr.mxu0 0.0
        %1762 = vmatpush1.msra.mxu0 0.0
        %1763 = vmatprep.subr.mxu0 0.0
        %1764 = vmatpush1.msra.mxu0 0.0
        %1765 = vmatprep.subr.mxu0 0.0
        %1766 = vmatpush1.msra.mxu0 0.0
        %1767 = vmatprep.subr.mxu0 0.0
        %1768 = vmatpush1.msra.mxu0 0.0
        %1769 = vmatprep.subr.mxu0 0.0
        %1770 = vmatpush1.msra.mxu0 0.0
        %1771 = vmatprep.subr.mxu0 0.0
        %1772 = vmatpush1.msra.mxu0 0.0
        %1773 = vmatprep.subr.mxu0 0.0
        %1774 = vmatpush1.msra.mxu0 0.0
        %1775 = vmatprep.subr.mxu0 0.0
        %1776 = vmatpush1.msra.mxu0 0.0
        %1777 = vmatprep.subr.mxu0 0.0
        %1778 = vmatpush1.msra.mxu0 0.0
        %1779 = vmatprep.subr.mxu0 0.0
        %1780 = vmatpush1.msra.mxu0 %v1753
        %1781 = vmatprep.subr.mxu0 0.0
        %1782 = vmatpush1.msra.mxu0 %v1750
        %1783 = vmatprep.subr.mxu0 0.0
        %1784 = vmatpush1.msra.mxu0 %v1749
        %1785 = vmatprep.subr.mxu0 0.0
        %1786 = vmatpush1.msra.mxu0 %v1748
        %1787 = vmatprep.subr.mxu0 0.0
        %1788 = vmatpush2.msra.mxu0 0.0
        %1789 = vmatprep.subr.mxu0 0.0
        %1790 = vmatpush2.msra.mxu0 0.0
        %1791 = vmatprep.subr.mxu0 0.0
        %1792 = vmatpush2.msra.mxu0 0.0
        %1793 = vmatprep.subr.mxu0 0.0
        %1794 = vmatpush2.msra.mxu0 0.0
        %1795 = vmatprep.subr.mxu0 0.0
        %1796 = vmatpush2.msra.mxu0 0.0
        %1797 = vmatprep.subr.mxu0 0.0
        %1798 = vmatpush2.msra.mxu0 0.0
        %1799 = vmatprep.subr.mxu0 0.0
        %1800 = vmatpush2.msra.mxu0 0.0
        %1801 = vmatprep.subr.mxu0 0.0
        %1802 = vmatpush2.msra.mxu0 0.0
        %1803 = vmatprep.subr.mxu0 0.0
        %1804 = vmatpush2.msra.mxu0 0.0
        %1805 = vmatprep.subr.mxu0 0.0
        %1806 = vmatpush2.msra.mxu0 0.0
        %1807 = vmatprep.subr.mxu0 0.0
        %1808 = vmatpush2.msra.mxu0 0.0
        %1809 = vmatprep.subr.mxu0 0.0
        %1810 = vmatpush2.msra.mxu0 0.0
        %1811 = vmatprep.subr.mxu0 0.0
        %1812 = vmatpush2.msra.mxu0 0.0
        %1813 = vmatprep.subr.mxu0 0.0
        %1814 = vmatpush2.msra.mxu0 0.0
        %1815 = vmatprep.subr.mxu0 0.0
        %1816 = vmatpush2.msra.mxu0 0.0
        %1817 = vmatprep.subr.mxu0 0.0
        %1818 = vmatpush2.msra.mxu0 0.0
        %1819 = vmatprep.mubr.f32.mxu0 0.0
        %1820 = vmatmul.mubr.f32.gmra.mxu0 %v986
        %v1821 = vpop.f32.mrf.mxu0
        %v1822 = vadd.f32 0.0, %v1821
        %v1823 = vpop.f32.mrf.mxu0
        %1824 = vmatprep.mubr.f32.mxu0 0.0
        %1825 = vmatmul.mubr.f32.gmra.mxu0 %v989
        %v1826 = vpop.f32.mrf.mxu0
        %v1827 = vadd.f32 0.0, %v1826
        %v1828 = vpop.f32.mrf.mxu0
        %1829 = vdwg.mxu0
        %1830 = vmatprep.subr.mxu0 0.0
        %1831 = vmatpush1.msra.mxu0 0.0
        %1832 = vmatprep.subr.mxu0 0.0
        %1833 = vmatpush1.msra.mxu0 0.0
        %1834 = vmatprep.subr.mxu0 0.0
        %1835 = vmatpush1.msra.mxu0 0.0
        %1836 = vmatprep.subr.mxu0 0.0
        %1837 = vmatpush1.msra.mxu0 0.0
        %1838 = vmatprep.subr.mxu0 0.0
        %1839 = vmatpush1.msra.mxu0 0.0
        %1840 = vmatprep.subr.mxu0 0.0
        %1841 = vmatpush1.msra.mxu0 0.0
        %1842 = vmatprep.subr.mxu0 0.0
        %1843 = vmatpush1.msra.mxu0 0.0
        %1844 = vmatprep.subr.mxu0 0.0
        %1845 = vmatpush1.msra.mxu0 0.0
        %1846 = vmatprep.subr.mxu0 0.0
        %1847 = vmatpush1.msra.mxu0 0.0
        %1848 = vmatprep.subr.mxu0 0.0
        %1849 = vmatpush1.msra.mxu0 0.0
        %1850 = vmatprep.subr.mxu0 0.0
        %1851 = vmatpush1.msra.mxu0 0.0
        %1852 = vmatprep.subr.mxu0 0.0
        %1853 = vmatpush1.msra.mxu0 0.0
        %1854 = vmatprep.subr.mxu0 0.0
        %1855 = vmatpush1.msra.mxu0 %v1753
        %1856 = vmatprep.subr.mxu0 0.0
        %1857 = vmatpush1.msra.mxu0 %v1750
        %1858 = vmatprep.subr.mxu0 0.0
        %1859 = vmatpush1.msra.mxu0 %v1749
        %1860 = vmatprep.subr.mxu0 0.0
        %1861 = vmatpush1.msra.mxu0 %v1748
        %1862 = vmatprep.subr.mxu0 0.0
        %1863 = vmatpush2.msra.mxu0 0.0
        %1864 = vmatprep.subr.mxu0 0.0
        %1865 = vmatpush2.msra.mxu0 0.0
        %1866 = vmatprep.subr.mxu0 0.0
        %1867 = vmatpush2.msra.mxu0 0.0
        %1868 = vmatprep.subr.mxu0 0.0
        %1869 = vmatpush2.msra.mxu0 0.0
        %1870 = vmatprep.subr.mxu0 0.0
        %1871 = vmatpush2.msra.mxu0 0.0
        %1872 = vmatprep.subr.mxu0 0.0
        %1873 = vmatpush2.msra.mxu0 0.0
        %1874 = vmatprep.subr.mxu0 0.0
        %1875 = vmatpush2.msra.mxu0 0.0
        %1876 = vmatprep.subr.mxu0 0.0
        %1877 = vmatpush2.msra.mxu0 0.0
        %1878 = vmatprep.subr.mxu0 0.0
        %1879 = vmatpush2.msra.mxu0 0.0
        %1880 = vmatprep.subr.mxu0 0.0
        %1881 = vmatpush2.msra.mxu0 0.0
        %1882 = vmatprep.subr.mxu0 0.0
        %1883 = vmatpush2.msra.mxu0 0.0
        %1884 = vmatprep.subr.mxu0 0.0
        %1885 = vmatpush2.msra.mxu0 0.0
        %1886 = vmatprep.subr.mxu0 0.0
        %1887 = vmatpush2.msra.mxu0 0.0
        %1888 = vmatprep.subr.mxu0 0.0
        %1889 = vmatpush2.msra.mxu0 0.0
        %1890 = vmatprep.subr.mxu0 0.0
        %1891 = vmatpush2.msra.mxu0 0.0
        %1892 = vmatprep.subr.mxu0 0.0
        %1893 = vmatpush2.msra.mxu0 0.0
        %1894 = vmatprep.mubr.f32.mxu0 0.0
        %1895 = vmatmul.mubr.f32.gmra.mxu0 %v1071
        %v1896 = vpop.f32.mrf.mxu0
        %v1897 = vadd.f32 0.0, %v1896
        %v1898 = vpop.f32.mrf.mxu0
        %1899 = vmatprep.mubr.f32.mxu0 0.0
        %1900 = vmatmul.mubr.f32.gmra.mxu0 %v1074
        %v1901 = vpop.f32.mrf.mxu0
        %v1902 = vadd.f32 0.0, %v1901
        %v1903 = vpop.f32.mrf.mxu0
        %1904 = vdwg.mxu0
        %v1905 = vmax.f32 %v1822, %v1897
        %v1906 = vmax.f32 %v1827, %v1902
        %1907 = vrot.lane.b32.xlu0 %v1905, 122
        %v1908 = vpop.permute.xlu0 %1907
        %1909 = vrot.lane.b32.xlu0 %v1906, 122
        %v1910 = vpop.permute.xlu0 %1909
        %v1911 = vmax.f32 %v1905, %v1908
        %v1912 = vmax.f32 %v1906, %v1910
        %v1913 = vld [vmem:[#allocation8 + $0xb0] sm:$0xff]
        %v1914 = vld [vmem:[#allocation8 + $0xb8] sm:$0xff]
        %v1915 = vld [vmem:[#allocation8 + $0xc0] sm:$0xff]
        %v1916 = vld [vmem:[#allocation8 + $0xc8] sm:$0xff]
        %v1917 = vld [vmem:[#allocation8 + $0xd0] sm:$0xff]
        %v1918 = vld [vmem:[#allocation8 + $0xd8] sm:$0xff]
        %v1919 = vld [vmem:[#allocation8 + $0xe0] sm:$0xff]
        %v1920 = vld [vmem:[#allocation8 + $0xe8] sm:$0xff]
        %v1921 = vld [vmem:[#allocation8 + $0xf0] sm:$0xff]
        %v1922 = vld [vmem:[#allocation8 + $0xf8] sm:$0xff]
        %v1923 = vld [vmem:[#allocation8 + $0x100] sm:$0xff]
        %v1924 = vld [vmem:[#allocation8 + $0x108] sm:$0xff]
        %v1925 = vld [vmem:[#allocation8 + $0x110] sm:$0xff]
        %v1926 = vld [vmem:[#allocation8 + $0x118] sm:$0xff]
        %v1927 = vld [vmem:[#allocation8 + $0x120] sm:$0xff]
        %v1928 = vld [vmem:[#allocation8 + $0x128] sm:$0xff]
        %1929 = vmatprep.subr.mxu0 0.0
        %1930 = vmatpush1.msra.mxu0 %v1928
        %1931 = vmatprep.subr.mxu0 0.0
        %1932 = vmatpush1.msra.mxu0 %v1927
        %1933 = vmatprep.subr.mxu0 0.0
        %1934 = vmatpush1.msra.mxu0 %v1926
        %1935 = vmatprep.subr.mxu0 0.0
        %1936 = vmatpush1.msra.mxu0 %v1925
        %1937 = vmatprep.subr.mxu0 0.0
        %1938 = vmatpush1.msra.mxu0 %v1924
        %1939 = vmatprep.subr.mxu0 0.0
        %1940 = vmatpush1.msra.mxu0 %v1923
        %1941 = vmatprep.subr.mxu0 0.0
        %1942 = vmatpush1.msra.mxu0 %v1922
        %1943 = vmatprep.subr.mxu0 0.0
        %1944 = vmatpush1.msra.mxu0 %v1921
        %1945 = vmatprep.subr.mxu0 0.0
        %1946 = vmatpush1.msra.mxu0 %v1920
        %1947 = vmatprep.subr.mxu0 0.0
        %1948 = vmatpush1.msra.mxu0 %v1919
        %1949 = vmatprep.subr.mxu0 0.0
        %1950 = vmatpush1.msra.mxu0 %v1918
        %1951 = vmatprep.subr.mxu0 0.0
        %1952 = vmatpush1.msra.mxu0 %v1917
        %1953 = vmatprep.subr.mxu0 0.0
        %1954 = vmatpush1.msra.mxu0 %v1916
        %1955 = vmatprep.subr.mxu0 0.0
        %1956 = vmatpush1.msra.mxu0 %v1915
        %1957 = vmatprep.subr.mxu0 0.0
        %1958 = vmatpush1.msra.mxu0 %v1914
        %1959 = vmatprep.subr.mxu0 0.0
        %1960 = vmatpush1.msra.mxu0 %v1913
        %1961 = vmatprep.subr.mxu0 0.0
        %1962 = vmatpush2.msra.mxu0 0.0
        %1963 = vmatprep.subr.mxu0 0.0
        %1964 = vmatpush2.msra.mxu0 0.0
        %1965 = vmatprep.subr.mxu0 0.0
        %1966 = vmatpush2.msra.mxu0 0.0
        %1967 = vmatprep.subr.mxu0 0.0
        %1968 = vmatpush2.msra.mxu0 0.0
        %1969 = vmatprep.subr.mxu0 0.0
        %1970 = vmatpush2.msra.mxu0 0.0
        %1971 = vmatprep.subr.mxu0 0.0
        %1972 = vmatpush2.msra.mxu0 0.0
        %1973 = vmatprep.subr.mxu0 0.0
        %1974 = vmatpush2.msra.mxu0 0.0
        %1975 = vmatprep.subr.mxu0 0.0
        %1976 = vmatpush2.msra.mxu0 0.0
        %1977 = vmatprep.subr.mxu0 0.0
        %1978 = vmatpush2.msra.mxu0 0.0
        %1979 = vmatprep.subr.mxu0 0.0
        %1980 = vmatpush2.msra.mxu0 0.0
        %1981 = vmatprep.subr.mxu0 0.0
        %1982 = vmatpush2.msra.mxu0 0.0
        %1983 = vmatprep.subr.mxu0 0.0
        %1984 = vmatpush2.msra.mxu0 0.0
        %1985 = vmatprep.subr.mxu0 0.0
        %1986 = vmatpush2.msra.mxu0 0.0
        %1987 = vmatprep.subr.mxu0 0.0
        %1988 = vmatpush2.msra.mxu0 0.0
        %1989 = vmatprep.subr.mxu0 0.0
        %1990 = vmatpush2.msra.mxu0 0.0
        %1991 = vmatprep.subr.mxu0 0.0
        %1992 = vmatpush2.msra.mxu0 0.0
        %1993 = vmatprep.mubr.f32.mxu0 0.0
        %1994 = vmatmul.mubr.f32.gmra.mxu0 %v1911
        %v1995 = vpop.f32.mrf.mxu0
        %v1996 = vadd.f32 0.0, %v1995
        %v1997 = vpop.f32.mrf.mxu0
        %1998 = vmatprep.mubr.f32.mxu0 0.0
        %1999 = vmatmul.mubr.f32.gmra.mxu0 %v1912
        %v2000 = vpop.f32.mrf.mxu0
        %v2001 = vadd.f32 0.0, %v2000
        %v2002 = vpop.f32.mrf.mxu0
        %2003 = vdwg.mxu0
        %2004 = vmatprep.subr.mxu0 0.0
        %2005 = vmatpush1.msra.mxu0 %v1174
        %2006 = vmatprep.subr.mxu0 0.0
        %2007 = vmatpush1.msra.mxu0 %v1173
        %2008 = vmatprep.subr.mxu0 0.0
        %2009 = vmatpush1.msra.mxu0 %v1172
        %2010 = vmatprep.subr.mxu0 0.0
        %2011 = vmatpush1.msra.mxu0 %v1171
        %2012 = vmatprep.subr.mxu0 0.0
        %2013 = vmatpush1.msra.mxu0 %v1170
        %2014 = vmatprep.subr.mxu0 0.0
        %2015 = vmatpush1.msra.mxu0 %v1169
        %2016 = vmatprep.subr.mxu0 0.0
        %2017 = vmatpush1.msra.mxu0 %v1168
        %2018 = vmatprep.subr.mxu0 0.0
        %2019 = vmatpush1.msra.mxu0 %v1167
        %2020 = vmatprep.subr.mxu0 0.0
        %2021 = vmatpush1.msra.mxu0 %v1166
        %2022 = vmatprep.subr.mxu0 0.0
        %2023 = vmatpush1.msra.mxu0 %v1165
        %2024 = vmatprep.subr.mxu0 0.0
        %2025 = vmatpush1.msra.mxu0 %v1164
        %2026 = vmatprep.subr.mxu0 0.0
        %2027 = vmatpush1.msra.mxu0 %v1163
        %2028 = vmatprep.subr.mxu0 0.0
        %2029 = vmatpush1.msra.mxu0 %v1162
        %2030 = vmatprep.subr.mxu0 0.0
        %2031 = vmatpush1.msra.mxu0 %v1161
        %2032 = vmatprep.subr.mxu0 0.0
        %2033 = vmatpush1.msra.mxu0 %v1160
        %2034 = vmatprep.subr.mxu0 0.0
        %2035 = vmatpush1.msra.mxu0 %v1159
        %2036 = vmatprep.subr.mxu0 0.0
        %2037 = vmatpush2.msra.mxu0 0.0
        %2038 = vmatprep.subr.mxu0 0.0
        %2039 = vmatpush2.msra.mxu0 0.0
        %2040 = vmatprep.subr.mxu0 0.0
        %2041 = vmatpush2.msra.mxu0 0.0
        %2042 = vmatprep.subr.mxu0 0.0
        %2043 = vmatpush2.msra.mxu0 0.0
        %2044 = vmatprep.subr.mxu0 0.0
        %2045 = vmatpush2.msra.mxu0 0.0
        %2046 = vmatprep.subr.mxu0 0.0
        %2047 = vmatpush2.msra.mxu0 0.0
        %2048 = vmatprep.subr.mxu0 0.0
        %2049 = vmatpush2.msra.mxu0 0.0
        %2050 = vmatprep.subr.mxu0 0.0
        %2051 = vmatpush2.msra.mxu0 0.0
        %2052 = vmatprep.subr.mxu0 0.0
        %2053 = vmatpush2.msra.mxu0 0.0
        %2054 = vmatprep.subr.mxu0 0.0
        %2055 = vmatpush2.msra.mxu0 0.0
        %2056 = vmatprep.subr.mxu0 0.0
        %2057 = vmatpush2.msra.mxu0 0.0
        %2058 = vmatprep.subr.mxu0 0.0
        %2059 = vmatpush2.msra.mxu0 0.0
        %2060 = vmatprep.subr.mxu0 0.0
        %2061 = vmatpush2.msra.mxu0 0.0
        %2062 = vmatprep.subr.mxu0 0.0
        %2063 = vmatpush2.msra.mxu0 0.0
        %2064 = vmatprep.subr.mxu0 0.0
        %2065 = vmatpush2.msra.mxu0 0.0
        %2066 = vmatprep.subr.mxu0 0.0
        %2067 = vmatpush2.msra.mxu0 0.0
        %2068 = vmatprep.mubr.f32.mxu0 0.0
        %2069 = vmatmul.mubr.f32.gmra.mxu0 %v1157
        %v2070 = vpop.f32.mrf.mxu0
        %v2071 = vadd.f32 %v1996, %v2070
        %v2072 = vpop.f32.mrf.mxu0
        %2073 = vmatprep.mubr.f32.mxu0 0.0
        %2074 = vmatmul.mubr.f32.gmra.mxu0 %v1158
        %v2075 = vpop.f32.mrf.mxu0
        %v2076 = vadd.f32 %v2001, %v2075
        %v2077 = vpop.f32.mrf.mxu0
        %2078 = vdwg.mxu0
        %v2079 = vlaneseq
        %v2080 = vshrl.u32 %v2079, 7
        %v2081 = vsub.s32 0, %v2080
        %v2082 = vrot.slane %v372, %v2081
        %v2083 = vadd.f32 %v2071, %v2082
        %v2084 = vadd.f32 %v2076, %v2082
        %v2085 = vmax.f32 %v2083, 0.0
        %v2086 = vmax.f32 %v2084, 0.0
        %2087 = vst [vmem:[#allocation2] sm:$0xff] %v2085
        %2088 = vst [vmem:[#allocation2 + $0x8] sm:$0xff] %v2086
        %v2089 = vld [vmem:[#allocation2] sm:$0xff]
        %v2090 = vld [vmem:[#allocation2 + $0x8] sm:$0x3]
        %v2091 = vpack.c.bf16 %v2090, %v2089
        %v2092 = vld [vmem:[#allocation3] sm:$0xf]
        %v2093 = vld [vmem:[#allocation3 + $0x4] sm:$0xf]
        %v2094 = vld [vmem:[#allocation3 + $0x8] sm:$0xf]
        %v2095 = vld [vmem:[#allocation3 + $0xc] sm:$0xf]
        %v2096 = vld [vmem:[#allocation3 + $0x10] sm:$0xf]
        %v2097 = vld [vmem:[#allocation3 + $0x14] sm:$0xf]
        %v2098 = vld [vmem:[#allocation3 + $0x18] sm:$0xf]
        %v2099 = vld [vmem:[#allocation3 + $0x1c] sm:$0xf]
        %v2100 = vld [vmem:[#allocation3 + $0x20] sm:$0xf]
        %v2101 = vld [vmem:[#allocation3 + $0x24] sm:$0xf]
        %v2102 = vld [vmem:[#allocation3 + $0x28] sm:$0xf]
        %v2103 = vld [vmem:[#allocation3 + $0x2c] sm:$0xf]
        %v2104 = vld [vmem:[#allocation3 + $0x30] sm:$0xf]
        %v2105 = vld [vmem:[#allocation3 + $0x34] sm:$0xf]
        %v2106 = vld [vmem:[#allocation3 + $0x38] sm:$0xf]
        %v2107 = vld [vmem:[#allocation3 + $0x3c] sm:$0xf]
        %v2108 = vld [vmem:[#allocation2 + $0x1] sm:$0xff]
        %v2109 = vld [vmem:[#allocation2 + $0x9] sm:$0x3]
        %v2110 = vpack.c.bf16 %v2109, %v2108
        %v2111 = vld [vmem:[#allocation3 + $0x80] sm:$0xf]
        %v2112 = vld [vmem:[#allocation3 + $0x84] sm:$0xf]
        %v2113 = vld [vmem:[#allocation3 + $0x88] sm:$0xf]
        %v2114 = vld [vmem:[#allocation3 + $0x8c] sm:$0xf]
        %v2115 = vld [vmem:[#allocation3 + $0x90] sm:$0xf]
        %v2116 = vld [vmem:[#allocation3 + $0x94] sm:$0xf]
        %v2117 = vld [vmem:[#allocation3 + $0x98] sm:$0xf]
        %v2118 = vld [vmem:[#allocation3 + $0x9c] sm:$0xf]
        %v2119 = vld [vmem:[#allocation3 + $0xa0] sm:$0xf]
        %v2120 = vld [vmem:[#allocation3 + $0xa4] sm:$0xf]
        %v2121 = vld [vmem:[#allocation3 + $0xa8] sm:$0xf]
        %v2122 = vld [vmem:[#allocation3 + $0xac] sm:$0xf]
        %v2123 = vld [vmem:[#allocation3 + $0xb0] sm:$0xf]
        %v2124 = vld [vmem:[#allocation3 + $0xb4] sm:$0xf]
        %v2125 = vld [vmem:[#allocation3 + $0xb8] sm:$0xf]
        %v2126 = vld [vmem:[#allocation3 + $0xbc] sm:$0xf]
        %v2143 = vunpack.c.l.b16 %v2111
        %v2144 = vunpack.c.l.b16 %v2112
        %v2145 = vunpack.c.l.b16 %v2113
        %v2146 = vunpack.c.l.b16 %v2114
        %v2147 = vunpack.c.l.b16 %v2115
        %v2148 = vunpack.c.l.b16 %v2116
        %v2149 = vunpack.c.l.b16 %v2117
        %v2150 = vunpack.c.l.b16 %v2118
        %v2151 = vunpack.c.l.b16 %v2119
        %v2152 = vunpack.c.l.b16 %v2120
        %v2153 = vunpack.c.l.b16 %v2121
        %v2154 = vunpack.c.l.b16 %v2122
        %v2155 = vunpack.c.l.b16 %v2123
        %v2156 = vunpack.c.l.b16 %v2124
        %v2157 = vunpack.c.l.b16 %v2125
        %v2158 = vunpack.c.l.b16 %v2126
        %v2159 = vpack.c.b16 %v2144, %v2143
        %v2160 = vpack.c.b16 %v2146, %v2145
        %v2161 = vpack.c.b16 %v2148, %v2147
        %v2162 = vpack.c.b16 %v2150, %v2149
        %v2163 = vpack.c.b16 %v2152, %v2151
        %v2164 = vpack.c.b16 %v2154, %v2153
        %v2165 = vpack.c.b16 %v2156, %v2155
        %v2166 = vpack.c.b16 %v2158, %v2157
        %2175 = vmatprep.subr.bf16.mxu0 0
        %2176 = vmatpush1.bf16.msra.mxu0 %v2166
        %2177 = vmatprep.subr.bf16.mxu0 0
        %2178 = vmatpush1.bf16.msra.mxu0 %v2165
        %2179 = vmatprep.subr.bf16.mxu0 0
        %2180 = vmatpush1.bf16.msra.mxu0 %v2164
        %2181 = vmatprep.subr.bf16.mxu0 0
        %2182 = vmatpush1.bf16.msra.mxu0 %v2163
        %2183 = vmatprep.subr.bf16.mxu0 0
        %2184 = vmatpush1.bf16.msra.mxu0 %v2162
        %2185 = vmatprep.subr.bf16.mxu0 0
        %2186 = vmatpush1.bf16.msra.mxu0 %v2161
        %2187 = vmatprep.subr.bf16.mxu0 0
        %2188 = vmatpush1.bf16.msra.mxu0 %v2160
        %2189 = vmatprep.subr.bf16.mxu0 0
        %2190 = vmatpush1.bf16.msra.mxu0 %v2159
        %2191 = vmatprep.subr.bf16.mxu0 0
        %2192 = vmatpush2.bf16.msra.mxu0 0
        %2193 = vmatprep.subr.bf16.mxu0 0
        %2194 = vmatpush2.bf16.msra.mxu0 0
        %2195 = vmatprep.subr.bf16.mxu0 0
        %2196 = vmatpush2.bf16.msra.mxu0 0
        %2197 = vmatprep.subr.bf16.mxu0 0
        %2198 = vmatpush2.bf16.msra.mxu0 0
        %2199 = vmatprep.subr.bf16.mxu0 0
        %2200 = vmatpush2.bf16.msra.mxu0 0
        %2201 = vmatprep.subr.bf16.mxu0 0
        %2202 = vmatpush2.bf16.msra.mxu0 0
        %2203 = vmatprep.subr.bf16.mxu0 0
        %2204 = vmatpush2.bf16.msra.mxu0 0
        %2205 = vmatprep.subr.bf16.mxu0 0
        %2206 = vmatpush2.bf16.msra.mxu0 0
        %2207 = vmatprep.mubr.bf16.mxu0 0
        %2208 = vmatmul.mubr.bf16.gmra.mxu0 %v2110
        %v2209 = vpop.f32.mrf.mxu0
        %v2210 = vadd.f32 0.0, %v2209
        %v2211 = vpop.f32.mrf.mxu0
        %v2212 = vpop.f32.mrf.mxu0
        %v2213 = vadd.f32 0.0, %v2212
        %v2214 = vpop.f32.mrf.mxu0
        %2215 = vdwg.mxu0
        %v2232 = vunpack.c.l.b16 %v2092
        %v2233 = vunpack.c.l.b16 %v2093
        %v2234 = vunpack.c.l.b16 %v2094
        %v2235 = vunpack.c.l.b16 %v2095
        %v2236 = vunpack.c.l.b16 %v2096
        %v2237 = vunpack.c.l.b16 %v2097
        %v2238 = vunpack.c.l.b16 %v2098
        %v2239 = vunpack.c.l.b16 %v2099
        %v2240 = vunpack.c.l.b16 %v2100
        %v2241 = vunpack.c.l.b16 %v2101
        %v2242 = vunpack.c.l.b16 %v2102
        %v2243 = vunpack.c.l.b16 %v2103
        %v2244 = vunpack.c.l.b16 %v2104
        %v2245 = vunpack.c.l.b16 %v2105
        %v2246 = vunpack.c.l.b16 %v2106
        %v2247 = vunpack.c.l.b16 %v2107
        %v2248 = vpack.c.b16 %v2233, %v2232
        %v2249 = vpack.c.b16 %v2235, %v2234
        %v2250 = vpack.c.b16 %v2237, %v2236
        %v2251 = vpack.c.b16 %v2239, %v2238
        %v2252 = vpack.c.b16 %v2241, %v2240
        %v2253 = vpack.c.b16 %v2243, %v2242
        %v2254 = vpack.c.b16 %v2245, %v2244
        %v2255 = vpack.c.b16 %v2247, %v2246
        %2264 = vmatprep.subr.bf16.mxu0 0
        %2265 = vmatpush1.bf16.msra.mxu0 %v2255
        %2266 = vmatprep.subr.bf16.mxu0 0
        %2267 = vmatpush1.bf16.msra.mxu0 %v2254
        %2268 = vmatprep.subr.bf16.mxu0 0
        %2269 = vmatpush1.bf16.msra.mxu0 %v2253
        %2270 = vmatprep.subr.bf16.mxu0 0
        %2271 = vmatpush1.bf16.msra.mxu0 %v2252
        %2272 = vmatprep.subr.bf16.mxu0 0
        %2273 = vmatpush1.bf16.msra.mxu0 %v2251
        %2274 = vmatprep.subr.bf16.mxu0 0
        %2275 = vmatpush1.bf16.msra.mxu0 %v2250
        %2276 = vmatprep.subr.bf16.mxu0 0
        %2277 = vmatpush1.bf16.msra.mxu0 %v2249
        %2278 = vmatprep.subr.bf16.mxu0 0
        %2279 = vmatpush1.bf16.msra.mxu0 %v2248
        %2280 = vmatprep.subr.bf16.mxu0 0
        %2281 = vmatpush2.bf16.msra.mxu0 0
        %2282 = vmatprep.subr.bf16.mxu0 0
        %2283 = vmatpush2.bf16.msra.mxu0 0
        %2284 = vmatprep.subr.bf16.mxu0 0
        %2285 = vmatpush2.bf16.msra.mxu0 0
        %2286 = vmatprep.subr.bf16.mxu0 0
        %2287 = vmatpush2.bf16.msra.mxu0 0
        %2288 = vmatprep.subr.bf16.mxu0 0
        %2289 = vmatpush2.bf16.msra.mxu0 0
        %2290 = vmatprep.subr.bf16.mxu0 0
        %2291 = vmatpush2.bf16.msra.mxu0 0
        %2292 = vmatprep.subr.bf16.mxu0 0
        %2293 = vmatpush2.bf16.msra.mxu0 0
        %2294 = vmatprep.subr.bf16.mxu0 0
        %2295 = vmatpush2.bf16.msra.mxu0 0
        %2296 = vmatprep.mubr.bf16.mxu0 0
        %2297 = vmatmul.mubr.bf16.gmra.mxu0 %v2091
        %v2298 = vpop.f32.mrf.mxu0
        %v2299 = vadd.f32 %v2210, %v2298
        %v2300 = vpop.f32.mrf.mxu0
        %v2301 = vpop.f32.mrf.mxu0
        %v2302 = vadd.f32 %v2213, %v2301
        %v2303 = vpop.f32.mrf.mxu0
        %2304 = vdwg.mxu0
        %v2305 = vld [vmem:[#allocation2 + $0x2] sm:$0xff]
        %v2306 = vld [vmem:[#allocation2 + $0xa] sm:$0x3]
        %v2307 = vpack.c.bf16 %v2306, %v2305
        %v2308 = vld [vmem:[#allocation3 + $0x100] sm:$0xf]
        %v2309 = vld [vmem:[#allocation3 + $0x104] sm:$0xf]
        %v2310 = vld [vmem:[#allocation3 + $0x108] sm:$0xf]
        %v2311 = vld [vmem:[#allocation3 + $0x10c] sm:$0xf]
        %v2312 = vld [vmem:[#allocation3 + $0x110] sm:$0xf]
        %v2313 = vld [vmem:[#allocation3 + $0x114] sm:$0xf]
        %v2314 = vld [vmem:[#allocation3 + $0x118] sm:$0xf]
        %v2315 = vld [vmem:[#allocation3 + $0x11c] sm:$0xf]
        %v2316 = vld [vmem:[#allocation3 + $0x120] sm:$0xf]
        %v2317 = vld [vmem:[#allocation3 + $0x124] sm:$0xf]
        %v2318 = vld [vmem:[#allocation3 + $0x128] sm:$0xf]
        %v2319 = vld [vmem:[#allocation3 + $0x12c] sm:$0xf]
        %v2320 = vld [vmem:[#allocation3 + $0x130] sm:$0xf]
        %v2321 = vld [vmem:[#allocation3 + $0x134] sm:$0xf]
        %v2322 = vld [vmem:[#allocation3 + $0x138] sm:$0xf]
        %v2323 = vld [vmem:[#allocation3 + $0x13c] sm:$0xf]
        %v2340 = vunpack.c.l.b16 %v2308
        %v2341 = vunpack.c.l.b16 %v2309
        %v2342 = vunpack.c.l.b16 %v2310
        %v2343 = vunpack.c.l.b16 %v2311
        %v2344 = vunpack.c.l.b16 %v2312
        %v2345 = vunpack.c.l.b16 %v2313
        %v2346 = vunpack.c.l.b16 %v2314
        %v2347 = vunpack.c.l.b16 %v2315
        %v2348 = vunpack.c.l.b16 %v2316
        %v2349 = vunpack.c.l.b16 %v2317
        %v2350 = vunpack.c.l.b16 %v2318
        %v2351 = vunpack.c.l.b16 %v2319
        %v2352 = vunpack.c.l.b16 %v2320
        %v2353 = vunpack.c.l.b16 %v2321
        %v2354 = vunpack.c.l.b16 %v2322
        %v2355 = vunpack.c.l.b16 %v2323
        %v2356 = vpack.c.b16 %v2341, %v2340
        %v2357 = vpack.c.b16 %v2343, %v2342
        %v2358 = vpack.c.b16 %v2345, %v2344
        %v2359 = vpack.c.b16 %v2347, %v2346
        %v2360 = vpack.c.b16 %v2349, %v2348
        %v2361 = vpack.c.b16 %v2351, %v2350
        %v2362 = vpack.c.b16 %v2353, %v2352
        %v2363 = vpack.c.b16 %v2355, %v2354
        %2372 = vmatprep.subr.bf16.mxu0 0
        %2373 = vmatpush1.bf16.msra.mxu0 %v2363
        %2374 = vmatprep.subr.bf16.mxu0 0
        %2375 = vmatpush1.bf16.msra.mxu0 %v2362
        %2376 = vmatprep.subr.bf16.mxu0 0
        %2377 = vmatpush1.bf16.msra.mxu0 %v2361
        %2378 = vmatprep.subr.bf16.mxu0 0
        %2379 = vmatpush1.bf16.msra.mxu0 %v2360
        %2380 = vmatprep.subr.bf16.mxu0 0
        %2381 = vmatpush1.bf16.msra.mxu0 %v2359
        %2382 = vmatprep.subr.bf16.mxu0 0
        %2383 = vmatpush1.bf16.msra.mxu0 %v2358
        %2384 = vmatprep.subr.bf16.mxu0 0
        %2385 = vmatpush1.bf16.msra.mxu0 %v2357
        %2386 = vmatprep.subr.bf16.mxu0 0
        %2387 = vmatpush1.bf16.msra.mxu0 %v2356
        %2388 = vmatprep.subr.bf16.mxu0 0
        %2389 = vmatpush2.bf16.msra.mxu0 0
        %2390 = vmatprep.subr.bf16.mxu0 0
        %2391 = vmatpush2.bf16.msra.mxu0 0
        %2392 = vmatprep.subr.bf16.mxu0 0
        %2393 = vmatpush2.bf16.msra.mxu0 0
        %2394 = vmatprep.subr.bf16.mxu0 0
        %2395 = vmatpush2.bf16.msra.mxu0 0
        %2396 = vmatprep.subr.bf16.mxu0 0
        %2397 = vmatpush2.bf16.msra.mxu0 0
        %2398 = vmatprep.subr.bf16.mxu0 0
        %2399 = vmatpush2.bf16.msra.mxu0 0
        %2400 = vmatprep.subr.bf16.mxu0 0
        %2401 = vmatpush2.bf16.msra.mxu0 0
        %2402 = vmatprep.subr.bf16.mxu0 0
        %2403 = vmatpush2.bf16.msra.mxu0 0
        %2404 = vmatprep.mubr.bf16.mxu0 0
        %2405 = vmatmul.mubr.bf16.gmra.mxu0 %v2307
        %v2406 = vpop.f32.mrf.mxu0
        %v2407 = vadd.f32 0.0, %v2406
        %v2408 = vpop.f32.mrf.mxu0
        %v2409 = vpop.f32.mrf.mxu0
        %v2410 = vadd.f32 0.0, %v2409
        %v2411 = vpop.f32.mrf.mxu0
        %2412 = vdwg.mxu0
        %v2413 = vadd.f32 %v2299, %v2407
        %v2414 = vadd.f32 %v2302, %v2410
        %v2415 = vld [vmem:[#allocation2 + $0x3] sm:$0xff]
        %v2416 = vld [vmem:[#allocation2 + $0xb] sm:$0x3]
        %v2417 = vpack.c.bf16 %v2416, %v2415
        %v2418 = vld [vmem:[#allocation3 + $0x180] sm:$0xf]
        %v2419 = vld [vmem:[#allocation3 + $0x184] sm:$0xf]
        %v2420 = vld [vmem:[#allocation3 + $0x188] sm:$0xf]
        %v2421 = vld [vmem:[#allocation3 + $0x18c] sm:$0xf]
        %v2422 = vld [vmem:[#allocation3 + $0x190] sm:$0xf]
        %v2423 = vld [vmem:[#allocation3 + $0x194] sm:$0xf]
        %v2424 = vld [vmem:[#allocation3 + $0x198] sm:$0xf]
        %v2425 = vld [vmem:[#allocation3 + $0x19c] sm:$0xf]
        %v2426 = vld [vmem:[#allocation3 + $0x1a0] sm:$0xf]
        %v2427 = vld [vmem:[#allocation3 + $0x1a4] sm:$0xf]
        %v2428 = vld [vmem:[#allocation3 + $0x1a8] sm:$0xf]
        %v2429 = vld [vmem:[#allocation3 + $0x1ac] sm:$0xf]
        %v2430 = vld [vmem:[#allocation3 + $0x1b0] sm:$0xf]
        %v2431 = vld [vmem:[#allocation3 + $0x1b4] sm:$0xf]
        %v2432 = vld [vmem:[#allocation3 + $0x1b8] sm:$0xf]
        %v2433 = vld [vmem:[#allocation3 + $0x1bc] sm:$0xf]
        %v2450 = vunpack.c.l.b16 %v2418
        %v2451 = vunpack.c.l.b16 %v2419
        %v2452 = vunpack.c.l.b16 %v2420
        %v2453 = vunpack.c.l.b16 %v2421
        %v2454 = vunpack.c.l.b16 %v2422
        %v2455 = vunpack.c.l.b16 %v2423
        %v2456 = vunpack.c.l.b16 %v2424
        %v2457 = vunpack.c.l.b16 %v2425
        %v2458 = vunpack.c.l.b16 %v2426
        %v2459 = vunpack.c.l.b16 %v2427
        %v2460 = vunpack.c.l.b16 %v2428
        %v2461 = vunpack.c.l.b16 %v2429
        %v2462 = vunpack.c.l.b16 %v2430
        %v2463 = vunpack.c.l.b16 %v2431
        %v2464 = vunpack.c.l.b16 %v2432
        %v2465 = vunpack.c.l.b16 %v2433
        %v2466 = vpack.c.b16 %v2451, %v2450
        %v2467 = vpack.c.b16 %v2453, %v2452
        %v2468 = vpack.c.b16 %v2455, %v2454
        %v2469 = vpack.c.b16 %v2457, %v2456
        %v2470 = vpack.c.b16 %v2459, %v2458
        %v2471 = vpack.c.b16 %v2461, %v2460
        %v2472 = vpack.c.b16 %v2463, %v2462
        %v2473 = vpack.c.b16 %v2465, %v2464
        %2482 = vmatprep.subr.bf16.mxu0 0
        %2483 = vmatpush1.bf16.msra.mxu0 %v2473
        %2484 = vmatprep.subr.bf16.mxu0 0
        %2485 = vmatpush1.bf16.msra.mxu0 %v2472
        %2486 = vmatprep.subr.bf16.mxu0 0
        %2487 = vmatpush1.bf16.msra.mxu0 %v2471
        %2488 = vmatprep.subr.bf16.mxu0 0
        %2489 = vmatpush1.bf16.msra.mxu0 %v2470
        %2490 = vmatprep.subr.bf16.mxu0 0
        %2491 = vmatpush1.bf16.msra.mxu0 %v2469
        %2492 = vmatprep.subr.bf16.mxu0 0
        %2493 = vmatpush1.bf16.msra.mxu0 %v2468
        %2494 = vmatprep.subr.bf16.mxu0 0
        %2495 = vmatpush1.bf16.msra.mxu0 %v2467
        %2496 = vmatprep.subr.bf16.mxu0 0
        %2497 = vmatpush1.bf16.msra.mxu0 %v2466
        %2498 = vmatprep.subr.bf16.mxu0 0
        %2499 = vmatpush2.bf16.msra.mxu0 0
        %2500 = vmatprep.subr.bf16.mxu0 0
        %2501 = vmatpush2.bf16.msra.mxu0 0
        %2502 = vmatprep.subr.bf16.mxu0 0
        %2503 = vmatpush2.bf16.msra.mxu0 0
        %2504 = vmatprep.subr.bf16.mxu0 0
        %2505 = vmatpush2.bf16.msra.mxu0 0
        %2506 = vmatprep.subr.bf16.mxu0 0
        %2507 = vmatpush2.bf16.msra.mxu0 0
        %2508 = vmatprep.subr.bf16.mxu0 0
        %2509 = vmatpush2.bf16.msra.mxu0 0
        %2510 = vmatprep.subr.bf16.mxu0 0
        %2511 = vmatpush2.bf16.msra.mxu0 0
        %2512 = vmatprep.subr.bf16.mxu0 0
        %2513 = vmatpush2.bf16.msra.mxu0 0
        %2514 = vmatprep.mubr.bf16.mxu0 0
        %2515 = vmatmul.mubr.bf16.gmra.mxu0 %v2417
        %v2516 = vpop.f32.mrf.mxu0
        %v2517 = vadd.f32 0.0, %v2516
        %v2518 = vpop.f32.mrf.mxu0
        %v2519 = vpop.f32.mrf.mxu0
        %v2520 = vadd.f32 0.0, %v2519
        %v2521 = vpop.f32.mrf.mxu0
        %2522 = vdwg.mxu0
        %v2523 = vadd.f32 %v2413, %v2517
        %v2524 = vadd.f32 %v2414, %v2520
        %v2525 = vld [vmem:[#allocation2 + $0x4] sm:$0xff]
        %v2526 = vld [vmem:[#allocation2 + $0xc] sm:$0x3]
        %v2527 = vpack.c.bf16 %v2526, %v2525
        %v2528 = vld [vmem:[#allocation3 + $0x200] sm:$0xf]
        %v2529 = vld [vmem:[#allocation3 + $0x204] sm:$0xf]
        %v2530 = vld [vmem:[#allocation3 + $0x208] sm:$0xf]
        %v2531 = vld [vmem:[#allocation3 + $0x20c] sm:$0xf]
        %v2532 = vld [vmem:[#allocation3 + $0x210] sm:$0xf]
        %v2533 = vld [vmem:[#allocation3 + $0x214] sm:$0xf]
        %v2534 = vld [vmem:[#allocation3 + $0x218] sm:$0xf]
        %v2535 = vld [vmem:[#allocation3 + $0x21c] sm:$0xf]
        %v2536 = vld [vmem:[#allocation3 + $0x220] sm:$0xf]
        %v2537 = vld [vmem:[#allocation3 + $0x224] sm:$0xf]
        %v2538 = vld [vmem:[#allocation3 + $0x228] sm:$0xf]
        %v2539 = vld [vmem:[#allocation3 + $0x22c] sm:$0xf]
        %v2540 = vld [vmem:[#allocation3 + $0x230] sm:$0xf]
        %v2541 = vld [vmem:[#allocation3 + $0x234] sm:$0xf]
        %v2542 = vld [vmem:[#allocation3 + $0x238] sm:$0xf]
        %v2543 = vld [vmem:[#allocation3 + $0x23c] sm:$0xf]
        %v2560 = vunpack.c.l.b16 %v2528
        %v2561 = vunpack.c.l.b16 %v2529
        %v2562 = vunpack.c.l.b16 %v2530
        %v2563 = vunpack.c.l.b16 %v2531
        %v2564 = vunpack.c.l.b16 %v2532
        %v2565 = vunpack.c.l.b16 %v2533
        %v2566 = vunpack.c.l.b16 %v2534
        %v2567 = vunpack.c.l.b16 %v2535
        %v2568 = vunpack.c.l.b16 %v2536
        %v2569 = vunpack.c.l.b16 %v2537
        %v2570 = vunpack.c.l.b16 %v2538
        %v2571 = vunpack.c.l.b16 %v2539
        %v2572 = vunpack.c.l.b16 %v2540
        %v2573 = vunpack.c.l.b16 %v2541
        %v2574 = vunpack.c.l.b16 %v2542
        %v2575 = vunpack.c.l.b16 %v2543
        %v2576 = vpack.c.b16 %v2561, %v2560
        %v2577 = vpack.c.b16 %v2563, %v2562
        %v2578 = vpack.c.b16 %v2565, %v2564
        %v2579 = vpack.c.b16 %v2567, %v2566
        %v2580 = vpack.c.b16 %v2569, %v2568
        %v2581 = vpack.c.b16 %v2571, %v2570
        %v2582 = vpack.c.b16 %v2573, %v2572
        %v2583 = vpack.c.b16 %v2575, %v2574
        %2592 = vmatprep.subr.bf16.mxu0 0
        %2593 = vmatpush1.bf16.msra.mxu0 %v2583
        %2594 = vmatprep.subr.bf16.mxu0 0
        %2595 = vmatpush1.bf16.msra.mxu0 %v2582
        %2596 = vmatprep.subr.bf16.mxu0 0
        %2597 = vmatpush1.bf16.msra.mxu0 %v2581
        %2598 = vmatprep.subr.bf16.mxu0 0
        %2599 = vmatpush1.bf16.msra.mxu0 %v2580
        %2600 = vmatprep.subr.bf16.mxu0 0
        %2601 = vmatpush1.bf16.msra.mxu0 %v2579
        %2602 = vmatprep.subr.bf16.mxu0 0
        %2603 = vmatpush1.bf16.msra.mxu0 %v2578
        %2604 = vmatprep.subr.bf16.mxu0 0
        %2605 = vmatpush1.bf16.msra.mxu0 %v2577
        %2606 = vmatprep.subr.bf16.mxu0 0
        %2607 = vmatpush1.bf16.msra.mxu0 %v2576
        %2608 = vmatprep.subr.bf16.mxu0 0
        %2609 = vmatpush2.bf16.msra.mxu0 0
        %2610 = vmatprep.subr.bf16.mxu0 0
        %2611 = vmatpush2.bf16.msra.mxu0 0
        %2612 = vmatprep.subr.bf16.mxu0 0
        %2613 = vmatpush2.bf16.msra.mxu0 0
        %2614 = vmatprep.subr.bf16.mxu0 0
        %2615 = vmatpush2.bf16.msra.mxu0 0
        %2616 = vmatprep.subr.bf16.mxu0 0
        %2617 = vmatpush2.bf16.msra.mxu0 0
        %2618 = vmatprep.subr.bf16.mxu0 0
        %2619 = vmatpush2.bf16.msra.mxu0 0
        %2620 = vmatprep.subr.bf16.mxu0 0
        %2621 = vmatpush2.bf16.msra.mxu0 0
        %2622 = vmatprep.subr.bf16.mxu0 0
        %2623 = vmatpush2.bf16.msra.mxu0 0
        %2624 = vmatprep.mubr.bf16.mxu0 0
        %2625 = vmatmul.mubr.bf16.gmra.mxu0 %v2527
        %v2626 = vpop.f32.mrf.mxu0
        %v2627 = vadd.f32 0.0, %v2626
        %v2628 = vpop.f32.mrf.mxu0
        %v2629 = vpop.f32.mrf.mxu0
        %v2630 = vadd.f32 0.0, %v2629
        %v2631 = vpop.f32.mrf.mxu0
        %2632 = vdwg.mxu0
        %v2633 = vadd.f32 %v2523, %v2627
        %v2634 = vadd.f32 %v2524, %v2630
        %vm2635 = vcmask 80896
        %v2637 = vsel %vm2635, %v370, 0
        %vm2639 = vcmask 1041408
        %v2641 = vsel %vm2639, %v2634, 0
        %2643 = vmatprep.subr.mxu0 0.0
        %2644 = vmatpush1.msra.mxu0 0.0
        %2645 = vmatprep.subr.mxu0 0.0
        %2646 = vmatpush1.msra.mxu0 0.0
        %2647 = vmatprep.subr.mxu0 0.0
        %2648 = vmatpush1.msra.mxu0 0.0
        %2649 = vmatprep.subr.mxu0 0.0
        %2650 = vmatpush1.msra.mxu0 0.0
        %2651 = vmatprep.subr.mxu0 0.0
        %2652 = vmatpush1.msra.mxu0 0.0
        %2653 = vmatprep.subr.mxu0 0.0
        %2654 = vmatpush1.msra.mxu0 0.0
        %2655 = vmatprep.subr.mxu0 0.0
        %2656 = vmatpush1.msra.mxu0 0.0
        %2657 = vmatprep.subr.mxu0 0.0
        %2658 = vmatpush1.msra.mxu0 0.0
        %2659 = vmatprep.subr.mxu0 0.0
        %2660 = vmatpush1.msra.mxu0 0.0
        %2661 = vmatprep.subr.mxu0 0.0
        %2662 = vmatpush1.msra.mxu0 0.0
        %2663 = vmatprep.subr.mxu0 0.0
        %2664 = vmatpush1.msra.mxu0 0.0
        %2665 = vmatprep.subr.mxu0 0.0
        %2666 = vmatpush1.msra.mxu0 0.0
        %2667 = vmatprep.subr.mxu0 0.0
        %2668 = vmatpush1.msra.mxu0 0.0
        %2669 = vmatprep.subr.mxu0 0.0
        %2670 = vmatpush1.msra.mxu0 0.0
        %2671 = vmatprep.subr.mxu0 0.0
        %2672 = vmatpush1.msra.mxu0 %v2641
        %2673 = vmatprep.subr.mxu0 0.0
        %2674 = vmatpush1.msra.mxu0 %v2633
        %2675 = vmatprep.subr.mxu0 0.0
        %2676 = vmatpush2.msra.mxu0 0.0
        %2677 = vmatprep.subr.mxu0 0.0
        %2678 = vmatpush2.msra.mxu0 0.0
        %2679 = vmatprep.subr.mxu0 0.0
        %2680 = vmatpush2.msra.mxu0 0.0
        %2681 = vmatprep.subr.mxu0 0.0
        %2682 = vmatpush2.msra.mxu0 0.0
        %2683 = vmatprep.subr.mxu0 0.0
        %2684 = vmatpush2.msra.mxu0 0.0
        %2685 = vmatprep.subr.mxu0 0.0
        %2686 = vmatpush2.msra.mxu0 0.0
        %2687 = vmatprep.subr.mxu0 0.0
        %2688 = vmatpush2.msra.mxu0 0.0
        %2689 = vmatprep.subr.mxu0 0.0
        %2690 = vmatpush2.msra.mxu0 0.0
        %2691 = vmatprep.subr.mxu0 0.0
        %2692 = vmatpush2.msra.mxu0 0.0
        %2693 = vmatprep.subr.mxu0 0.0
        %2694 = vmatpush2.msra.mxu0 0.0
        %2695 = vmatprep.subr.mxu0 0.0
        %2696 = vmatpush2.msra.mxu0 0.0
        %2697 = vmatprep.subr.mxu0 0.0
        %2698 = vmatpush2.msra.mxu0 0.0
        %2699 = vmatprep.subr.mxu0 0.0
        %2700 = vmatpush2.msra.mxu0 0.0
        %2701 = vmatprep.subr.mxu0 0.0
        %2702 = vmatpush2.msra.mxu0 0.0
        %2703 = vmatprep.subr.mxu0 0.0
        %2704 = vmatpush2.msra.mxu0 0.0
        %2705 = vmatprep.subr.mxu0 0.0
        %2706 = vmatpush2.msra.mxu0 0.0
        %2707 = vmatprep.mubr.f32.mxu0 0.0
        %2708 = vmatmul.mubr.f32.gmra.mxu0 %v2637
        %v2709 = vpop.f32.mrf.mxu0
        %v2710 = vadd.f32 0.0, %v2709
        %v2711 = vpop.f32.mrf.mxu0
        %2712 = vdwg.mxu0
        %v2714 = vsel %vm2635, %v371, 0
        %2716 = vmatprep.subr.mxu0 0.0
        %2717 = vmatpush1.msra.mxu0 0.0
        %2718 = vmatprep.subr.mxu0 0.0
        %2719 = vmatpush1.msra.mxu0 0.0
        %2720 = vmatprep.subr.mxu0 0.0
        %2721 = vmatpush1.msra.mxu0 0.0
        %2722 = vmatprep.subr.mxu0 0.0
        %2723 = vmatpush1.msra.mxu0 0.0
        %2724 = vmatprep.subr.mxu0 0.0
        %2725 = vmatpush1.msra.mxu0 0.0
        %2726 = vmatprep.subr.mxu0 0.0
        %2727 = vmatpush1.msra.mxu0 0.0
        %2728 = vmatprep.subr.mxu0 0.0
        %2729 = vmatpush1.msra.mxu0 0.0
        %2730 = vmatprep.subr.mxu0 0.0
        %2731 = vmatpush1.msra.mxu0 0.0
        %2732 = vmatprep.subr.mxu0 0.0
        %2733 = vmatpush1.msra.mxu0 0.0
        %2734 = vmatprep.subr.mxu0 0.0
        %2735 = vmatpush1.msra.mxu0 0.0
        %2736 = vmatprep.subr.mxu0 0.0
        %2737 = vmatpush1.msra.mxu0 0.0
        %2738 = vmatprep.subr.mxu0 0.0
        %2739 = vmatpush1.msra.mxu0 0.0
        %2740 = vmatprep.subr.mxu0 0.0
        %2741 = vmatpush1.msra.mxu0 0.0
        %2742 = vmatprep.subr.mxu0 0.0
        %2743 = vmatpush1.msra.mxu0 0.0
        %2744 = vmatprep.subr.mxu0 0.0
        %2745 = vmatpush1.msra.mxu0 %v2641
        %2746 = vmatprep.subr.mxu0 0.0
        %2747 = vmatpush1.msra.mxu0 %v2633
        %2748 = vmatprep.subr.mxu0 0.0
        %2749 = vmatpush2.msra.mxu0 0.0
        %2750 = vmatprep.subr.mxu0 0.0
        %2751 = vmatpush2.msra.mxu0 0.0
        %2752 = vmatprep.subr.mxu0 0.0
        %2753 = vmatpush2.msra.mxu0 0.0
        %2754 = vmatprep.subr.mxu0 0.0
        %2755 = vmatpush2.msra.mxu0 0.0
        %2756 = vmatprep.subr.mxu0 0.0
        %2757 = vmatpush2.msra.mxu0 0.0
        %2758 = vmatprep.subr.mxu0 0.0
        %2759 = vmatpush2.msra.mxu0 0.0
        %2760 = vmatprep.subr.mxu0 0.0
        %2761 = vmatpush2.msra.mxu0 0.0
        %2762 = vmatprep.subr.mxu0 0.0
        %2763 = vmatpush2.msra.mxu0 0.0
        %2764 = vmatprep.subr.mxu0 0.0
        %2765 = vmatpush2.msra.mxu0 0.0
        %2766 = vmatprep.subr.mxu0 0.0
        %2767 = vmatpush2.msra.mxu0 0.0
        %2768 = vmatprep.subr.mxu0 0.0
        %2769 = vmatpush2.msra.mxu0 0.0
        %2770 = vmatprep.subr.mxu0 0.0
        %2771 = vmatpush2.msra.mxu0 0.0
        %2772 = vmatprep.subr.mxu0 0.0
        %2773 = vmatpush2.msra.mxu0 0.0
        %2774 = vmatprep.subr.mxu0 0.0
        %2775 = vmatpush2.msra.mxu0 0.0
        %2776 = vmatprep.subr.mxu0 0.0
        %2777 = vmatpush2.msra.mxu0 0.0
        %2778 = vmatprep.subr.mxu0 0.0
        %2779 = vmatpush2.msra.mxu0 0.0
        %2780 = vmatprep.mubr.f32.mxu0 0.0
        %2781 = vmatmul.mubr.f32.gmra.mxu0 %v2714
        %v2782 = vpop.f32.mrf.mxu0
        %v2783 = vadd.f32 0.0, %v2782
        %v2784 = vpop.f32.mrf.mxu0
        %2785 = vdwg.mxu0
        %v2786 = vmax.f32 %v2710, %v2783
        %2787 = vrot.lane.b32.xlu0 %v2786, 112
        %v2788 = vpop.permute.xlu0 %2787
        %v2789 = vmax.f32 %v2786, %v2788
        %v2790 = vld [vmem:[#allocation8 + $0x130] sm:$0xff]
        %v2791 = vld [vmem:[#allocation8 + $0x138] sm:$0xff]
        %v2792 = vld [vmem:[#allocation8 + $0x140] sm:$0xff]
        %v2793 = vld [vmem:[#allocation8 + $0x148] sm:$0xff]
        %v2794 = vld [vmem:[#allocation8 + $0x150] sm:$0xff]
        %v2795 = vld [vmem:[#allocation8 + $0x158] sm:$0xff]
        %v2796 = vld [vmem:[#allocation8 + $0x160] sm:$0xff]
        %v2797 = vld [vmem:[#allocation8 + $0x168] sm:$0xff]
        %v2798 = vld [vmem:[#allocation8 + $0x170] sm:$0xff]
        %v2799 = vld [vmem:[#allocation8 + $0x178] sm:$0xff]
        %v2800 = vld [vmem:[#allocation8 + $0x180] sm:$0xff]
        %v2801 = vld [vmem:[#allocation8 + $0x188] sm:$0xff]
        %v2802 = vld [vmem:[#allocation8 + $0x190] sm:$0xff]
        %v2803 = vld [vmem:[#allocation8 + $0x198] sm:$0xff]
        %v2804 = vld [vmem:[#allocation8 + $0x1a0] sm:$0xff]
        %v2805 = vld [vmem:[#allocation8 + $0x1a8] sm:$0xff]
        %v2806 = vld [vmem:[#allocation3 + $0x40] sm:$0xf]
        %v2807 = vld [vmem:[#allocation3 + $0x44] sm:$0xf]
        %v2808 = vld [vmem:[#allocation3 + $0x48] sm:$0xf]
        %v2809 = vld [vmem:[#allocation3 + $0x4c] sm:$0xf]
        %v2810 = vld [vmem:[#allocation3 + $0x50] sm:$0xf]
        %v2811 = vld [vmem:[#allocation3 + $0x54] sm:$0xf]
        %v2812 = vld [vmem:[#allocation3 + $0x58] sm:$0xf]
        %v2813 = vld [vmem:[#allocation3 + $0x5c] sm:$0xf]
        %v2814 = vld [vmem:[#allocation3 + $0x60] sm:$0xf]
        %v2815 = vld [vmem:[#allocation3 + $0x64] sm:$0xf]
        %v2816 = vld [vmem:[#allocation3 + $0x68] sm:$0xf]
        %v2817 = vld [vmem:[#allocation3 + $0x6c] sm:$0xf]
        %v2818 = vld [vmem:[#allocation3 + $0x70] sm:$0xf]
        %v2819 = vld [vmem:[#allocation3 + $0x74] sm:$0xf]
        %v2820 = vld [vmem:[#allocation3 + $0x78] sm:$0xf]
        %v2821 = vld [vmem:[#allocation3 + $0x7c] sm:$0xf]
        %v2822 = vld [vmem:[#allocation3 + $0xc0] sm:$0xf]
        %v2823 = vld [vmem:[#allocation3 + $0xc4] sm:$0xf]
        %v2824 = vld [vmem:[#allocation3 + $0xc8] sm:$0xf]
        %v2825 = vld [vmem:[#allocation3 + $0xcc] sm:$0xf]
        %v2826 = vld [vmem:[#allocation3 + $0xd0] sm:$0xf]
        %v2827 = vld [vmem:[#allocation3 + $0xd4] sm:$0xf]
        %v2828 = vld [vmem:[#allocation3 + $0xd8] sm:$0xf]
        %v2829 = vld [vmem:[#allocation3 + $0xdc] sm:$0xf]
        %v2830 = vld [vmem:[#allocation3 + $0xe0] sm:$0xf]
        %v2831 = vld [vmem:[#allocation3 + $0xe4] sm:$0xf]
        %v2832 = vld [vmem:[#allocation3 + $0xe8] sm:$0xf]
        %v2833 = vld [vmem:[#allocation3 + $0xec] sm:$0xf]
        %v2834 = vld [vmem:[#allocation3 + $0xf0] sm:$0xf]
        %v2835 = vld [vmem:[#allocation3 + $0xf4] sm:$0xf]
        %v2836 = vld [vmem:[#allocation3 + $0xf8] sm:$0xf]
        %v2837 = vld [vmem:[#allocation3 + $0xfc] sm:$0xf]
        %v2854 = vunpack.c.l.b16 %v2822
        %v2855 = vunpack.c.l.b16 %v2823
        %v2856 = vunpack.c.l.b16 %v2824
        %v2857 = vunpack.c.l.b16 %v2825
        %v2858 = vunpack.c.l.b16 %v2826
        %v2859 = vunpack.c.l.b16 %v2827
        %v2860 = vunpack.c.l.b16 %v2828
        %v2861 = vunpack.c.l.b16 %v2829
        %v2862 = vunpack.c.l.b16 %v2830
        %v2863 = vunpack.c.l.b16 %v2831
        %v2864 = vunpack.c.l.b16 %v2832
        %v2865 = vunpack.c.l.b16 %v2833
        %v2866 = vunpack.c.l.b16 %v2834
        %v2867 = vunpack.c.l.b16 %v2835
        %v2868 = vunpack.c.l.b16 %v2836
        %v2869 = vunpack.c.l.b16 %v2837
        %v2870 = vpack.c.b16 %v2855, %v2854
        %v2871 = vpack.c.b16 %v2857, %v2856
        %v2872 = vpack.c.b16 %v2859, %v2858
        %v2873 = vpack.c.b16 %v2861, %v2860
        %v2874 = vpack.c.b16 %v2863, %v2862
        %v2875 = vpack.c.b16 %v2865, %v2864
        %v2876 = vpack.c.b16 %v2867, %v2866
        %v2877 = vpack.c.b16 %v2869, %v2868
        %2886 = vmatprep.subr.bf16.mxu0 0
        %2887 = vmatpush1.bf16.msra.mxu0 %v2877
        %2888 = vmatprep.subr.bf16.mxu0 0
        %2889 = vmatpush1.bf16.msra.mxu0 %v2876
        %2890 = vmatprep.subr.bf16.mxu0 0
        %2891 = vmatpush1.bf16.msra.mxu0 %v2875
        %2892 = vmatprep.subr.bf16.mxu0 0
        %2893 = vmatpush1.bf16.msra.mxu0 %v2874
        %2894 = vmatprep.subr.bf16.mxu0 0
        %2895 = vmatpush1.bf16.msra.mxu0 %v2873
        %2896 = vmatprep.subr.bf16.mxu0 0
        %2897 = vmatpush1.bf16.msra.mxu0 %v2872
        %2898 = vmatprep.subr.bf16.mxu0 0
        %2899 = vmatpush1.bf16.msra.mxu0 %v2871
        %2900 = vmatprep.subr.bf16.mxu0 0
        %2901 = vmatpush1.bf16.msra.mxu0 %v2870
        %2902 = vmatprep.subr.bf16.mxu0 0
        %2903 = vmatpush2.bf16.msra.mxu0 0
        %2904 = vmatprep.subr.bf16.mxu0 0
        %2905 = vmatpush2.bf16.msra.mxu0 0
        %2906 = vmatprep.subr.bf16.mxu0 0
        %2907 = vmatpush2.bf16.msra.mxu0 0
        %2908 = vmatprep.subr.bf16.mxu0 0
        %2909 = vmatpush2.bf16.msra.mxu0 0
        %2910 = vmatprep.subr.bf16.mxu0 0
        %2911 = vmatpush2.bf16.msra.mxu0 0
        %2912 = vmatprep.subr.bf16.mxu0 0
        %2913 = vmatpush2.bf16.msra.mxu0 0
        %2914 = vmatprep.subr.bf16.mxu0 0
        %2915 = vmatpush2.bf16.msra.mxu0 0
        %2916 = vmatprep.subr.bf16.mxu0 0
        %2917 = vmatpush2.bf16.msra.mxu0 0
        %2918 = vmatprep.mubr.bf16.mxu0 0
        %2919 = vmatmul.mubr.bf16.gmra.mxu0 %v2110
        %v2920 = vpop.f32.mrf.mxu0
        %v2921 = vadd.f32 0.0, %v2920
        %v2922 = vpop.f32.mrf.mxu0
        %v2923 = vpop.f32.mrf.mxu0
        %v2924 = vadd.f32 0.0, %v2923
        %v2925 = vpop.f32.mrf.mxu0
        %2926 = vdwg.mxu0
        %v2943 = vunpack.c.l.b16 %v2806
        %v2944 = vunpack.c.l.b16 %v2807
        %v2945 = vunpack.c.l.b16 %v2808
        %v2946 = vunpack.c.l.b16 %v2809
        %v2947 = vunpack.c.l.b16 %v2810
        %v2948 = vunpack.c.l.b16 %v2811
        %v2949 = vunpack.c.l.b16 %v2812
        %v2950 = vunpack.c.l.b16 %v2813
        %v2951 = vunpack.c.l.b16 %v2814
        %v2952 = vunpack.c.l.b16 %v2815
        %v2953 = vunpack.c.l.b16 %v2816
        %v2954 = vunpack.c.l.b16 %v2817
        %v2955 = vunpack.c.l.b16 %v2818
        %v2956 = vunpack.c.l.b16 %v2819
        %v2957 = vunpack.c.l.b16 %v2820
        %v2958 = vunpack.c.l.b16 %v2821
        %v2959 = vpack.c.b16 %v2944, %v2943
        %v2960 = vpack.c.b16 %v2946, %v2945
        %v2961 = vpack.c.b16 %v2948, %v2947
        %v2962 = vpack.c.b16 %v2950, %v2949
        %v2963 = vpack.c.b16 %v2952, %v2951
        %v2964 = vpack.c.b16 %v2954, %v2953
        %v2965 = vpack.c.b16 %v2956, %v2955
        %v2966 = vpack.c.b16 %v2958, %v2957
        %2975 = vmatprep.subr.bf16.mxu0 0
        %2976 = vmatpush1.bf16.msra.mxu0 %v2966
        %2977 = vmatprep.subr.bf16.mxu0 0
        %2978 = vmatpush1.bf16.msra.mxu0 %v2965
        %2979 = vmatprep.subr.bf16.mxu0 0
        %2980 = vmatpush1.bf16.msra.mxu0 %v2964
        %2981 = vmatprep.subr.bf16.mxu0 0
        %2982 = vmatpush1.bf16.msra.mxu0 %v2963
        %2983 = vmatprep.subr.bf16.mxu0 0
        %2984 = vmatpush1.bf16.msra.mxu0 %v2962
        %2985 = vmatprep.subr.bf16.mxu0 0
        %2986 = vmatpush1.bf16.msra.mxu0 %v2961
        %2987 = vmatprep.subr.bf16.mxu0 0
        %2988 = vmatpush1.bf16.msra.mxu0 %v2960
        %2989 = vmatprep.subr.bf16.mxu0 0
        %2990 = vmatpush1.bf16.msra.mxu0 %v2959
        %2991 = vmatprep.subr.bf16.mxu0 0
        %2992 = vmatpush2.bf16.msra.mxu0 0
        %2993 = vmatprep.subr.bf16.mxu0 0
        %2994 = vmatpush2.bf16.msra.mxu0 0
        %2995 = vmatprep.subr.bf16.mxu0 0
        %2996 = vmatpush2.bf16.msra.mxu0 0
        %2997 = vmatprep.subr.bf16.mxu0 0
        %2998 = vmatpush2.bf16.msra.mxu0 0
        %2999 = vmatprep.subr.bf16.mxu0 0
        %3000 = vmatpush2.bf16.msra.mxu0 0
        %3001 = vmatprep.subr.bf16.mxu0 0
        %3002 = vmatpush2.bf16.msra.mxu0 0
        %3003 = vmatprep.subr.bf16.mxu0 0
        %3004 = vmatpush2.bf16.msra.mxu0 0
        %3005 = vmatprep.subr.bf16.mxu0 0
        %3006 = vmatpush2.bf16.msra.mxu0 0
        %3007 = vmatprep.mubr.bf16.mxu0 0
        %3008 = vmatmul.mubr.bf16.gmra.mxu0 %v2091
        %v3009 = vpop.f32.mrf.mxu0
        %v3010 = vadd.f32 %v2921, %v3009
        %v3011 = vpop.f32.mrf.mxu0
        %v3012 = vpop.f32.mrf.mxu0
        %v3013 = vadd.f32 %v2924, %v3012
        %v3014 = vpop.f32.mrf.mxu0
        %3015 = vdwg.mxu0
        %v3016 = vld [vmem:[#allocation3 + $0x140] sm:$0xf]
        %v3017 = vld [vmem:[#allocation3 + $0x144] sm:$0xf]
        %v3018 = vld [vmem:[#allocation3 + $0x148] sm:$0xf]
        %v3019 = vld [vmem:[#allocation3 + $0x14c] sm:$0xf]
        %v3020 = vld [vmem:[#allocation3 + $0x150] sm:$0xf]
        %v3021 = vld [vmem:[#allocation3 + $0x154] sm:$0xf]
        %v3022 = vld [vmem:[#allocation3 + $0x158] sm:$0xf]
        %v3023 = vld [vmem:[#allocation3 + $0x15c] sm:$0xf]
        %v3024 = vld [vmem:[#allocation3 + $0x160] sm:$0xf]
        %v3025 = vld [vmem:[#allocation3 + $0x164] sm:$0xf]
        %v3026 = vld [vmem:[#allocation3 + $0x168] sm:$0xf]
        %v3027 = vld [vmem:[#allocation3 + $0x16c] sm:$0xf]
        %v3028 = vld [vmem:[#allocation3 + $0x170] sm:$0xf]
        %v3029 = vld [vmem:[#allocation3 + $0x174] sm:$0xf]
        %v3030 = vld [vmem:[#allocation3 + $0x178] sm:$0xf]
        %v3031 = vld [vmem:[#allocation3 + $0x17c] sm:$0xf]
        %v3048 = vunpack.c.l.b16 %v3016
        %v3049 = vunpack.c.l.b16 %v3017
        %v3050 = vunpack.c.l.b16 %v3018
        %v3051 = vunpack.c.l.b16 %v3019
        %v3052 = vunpack.c.l.b16 %v3020
        %v3053 = vunpack.c.l.b16 %v3021
        %v3054 = vunpack.c.l.b16 %v3022
        %v3055 = vunpack.c.l.b16 %v3023
        %v3056 = vunpack.c.l.b16 %v3024
        %v3057 = vunpack.c.l.b16 %v3025
        %v3058 = vunpack.c.l.b16 %v3026
        %v3059 = vunpack.c.l.b16 %v3027
        %v3060 = vunpack.c.l.b16 %v3028
        %v3061 = vunpack.c.l.b16 %v3029
        %v3062 = vunpack.c.l.b16 %v3030
        %v3063 = vunpack.c.l.b16 %v3031
        %v3064 = vpack.c.b16 %v3049, %v3048
        %v3065 = vpack.c.b16 %v3051, %v3050
        %v3066 = vpack.c.b16 %v3053, %v3052
        %v3067 = vpack.c.b16 %v3055, %v3054
        %v3068 = vpack.c.b16 %v3057, %v3056
        %v3069 = vpack.c.b16 %v3059, %v3058
        %v3070 = vpack.c.b16 %v3061, %v3060
        %v3071 = vpack.c.b16 %v3063, %v3062
        %3080 = vmatprep.subr.bf16.mxu0 0
        %3081 = vmatpush1.bf16.msra.mxu0 %v3071
        %3082 = vmatprep.subr.bf16.mxu0 0
        %3083 = vmatpush1.bf16.msra.mxu0 %v3070
        %3084 = vmatprep.subr.bf16.mxu0 0
        %3085 = vmatpush1.bf16.msra.mxu0 %v3069
        %3086 = vmatprep.subr.bf16.mxu0 0
        %3087 = vmatpush1.bf16.msra.mxu0 %v3068
        %3088 = vmatprep.subr.bf16.mxu0 0
        %3089 = vmatpush1.bf16.msra.mxu0 %v3067
        %3090 = vmatprep.subr.bf16.mxu0 0
        %3091 = vmatpush1.bf16.msra.mxu0 %v3066
        %3092 = vmatprep.subr.bf16.mxu0 0
        %3093 = vmatpush1.bf16.msra.mxu0 %v3065
        %3094 = vmatprep.subr.bf16.mxu0 0
        %3095 = vmatpush1.bf16.msra.mxu0 %v3064
        %3096 = vmatprep.subr.bf16.mxu0 0
        %3097 = vmatpush2.bf16.msra.mxu0 0
        %3098 = vmatprep.subr.bf16.mxu0 0
        %3099 = vmatpush2.bf16.msra.mxu0 0
        %3100 = vmatprep.subr.bf16.mxu0 0
        %3101 = vmatpush2.bf16.msra.mxu0 0
        %3102 = vmatprep.subr.bf16.mxu0 0
        %3103 = vmatpush2.bf16.msra.mxu0 0
        %3104 = vmatprep.subr.bf16.mxu0 0
        %3105 = vmatpush2.bf16.msra.mxu0 0
        %3106 = vmatprep.subr.bf16.mxu0 0
        %3107 = vmatpush2.bf16.msra.mxu0 0
        %3108 = vmatprep.subr.bf16.mxu0 0
        %3109 = vmatpush2.bf16.msra.mxu0 0
        %3110 = vmatprep.subr.bf16.mxu0 0
        %3111 = vmatpush2.bf16.msra.mxu0 0
        %3112 = vmatprep.mubr.bf16.mxu0 0
        %3113 = vmatmul.mubr.bf16.gmra.mxu0 %v2307
        %v3114 = vpop.f32.mrf.mxu0
        %v3115 = vadd.f32 0.0, %v3114
        %v3116 = vpop.f32.mrf.mxu0
        %v3117 = vpop.f32.mrf.mxu0
        %v3118 = vadd.f32 0.0, %v3117
        %v3119 = vpop.f32.mrf.mxu0
        %3120 = vdwg.mxu0
        %v3121 = vadd.f32 %v3010, %v3115
        %v3122 = vadd.f32 %v3013, %v3118
        %v3123 = vld [vmem:[#allocation3 + $0x1c0] sm:$0xf]
        %v3124 = vld [vmem:[#allocation3 + $0x1c4] sm:$0xf]
        %v3125 = vld [vmem:[#allocation3 + $0x1c8] sm:$0xf]
        %v3126 = vld [vmem:[#allocation3 + $0x1cc] sm:$0xf]
        %v3127 = vld [vmem:[#allocation3 + $0x1d0] sm:$0xf]
        %v3128 = vld [vmem:[#allocation3 + $0x1d4] sm:$0xf]
        %v3129 = vld [vmem:[#allocation3 + $0x1d8] sm:$0xf]
        %v3130 = vld [vmem:[#allocation3 + $0x1dc] sm:$0xf]
        %v3131 = vld [vmem:[#allocation3 + $0x1e0] sm:$0xf]
        %v3132 = vld [vmem:[#allocation3 + $0x1e4] sm:$0xf]
        %v3133 = vld [vmem:[#allocation3 + $0x1e8] sm:$0xf]
        %v3134 = vld [vmem:[#allocation3 + $0x1ec] sm:$0xf]
        %v3135 = vld [vmem:[#allocation3 + $0x1f0] sm:$0xf]
        %v3136 = vld [vmem:[#allocation3 + $0x1f4] sm:$0xf]
        %v3137 = vld [vmem:[#allocation3 + $0x1f8] sm:$0xf]
        %v3138 = vld [vmem:[#allocation3 + $0x1fc] sm:$0xf]
        %v3155 = vunpack.c.l.b16 %v3123
        %v3156 = vunpack.c.l.b16 %v3124
        %v3157 = vunpack.c.l.b16 %v3125
        %v3158 = vunpack.c.l.b16 %v3126
        %v3159 = vunpack.c.l.b16 %v3127
        %v3160 = vunpack.c.l.b16 %v3128
        %v3161 = vunpack.c.l.b16 %v3129
        %v3162 = vunpack.c.l.b16 %v3130
        %v3163 = vunpack.c.l.b16 %v3131
        %v3164 = vunpack.c.l.b16 %v3132
        %v3165 = vunpack.c.l.b16 %v3133
        %v3166 = vunpack.c.l.b16 %v3134
        %v3167 = vunpack.c.l.b16 %v3135
        %v3168 = vunpack.c.l.b16 %v3136
        %v3169 = vunpack.c.l.b16 %v3137
        %v3170 = vunpack.c.l.b16 %v3138
        %v3171 = vpack.c.b16 %v3156, %v3155
        %v3172 = vpack.c.b16 %v3158, %v3157
        %v3173 = vpack.c.b16 %v3160, %v3159
        %v3174 = vpack.c.b16 %v3162, %v3161
        %v3175 = vpack.c.b16 %v3164, %v3163
        %v3176 = vpack.c.b16 %v3166, %v3165
        %v3177 = vpack.c.b16 %v3168, %v3167
        %v3178 = vpack.c.b16 %v3170, %v3169
        %3187 = vmatprep.subr.bf16.mxu0 0
        %3188 = vmatpush1.bf16.msra.mxu0 %v3178
        %3189 = vmatprep.subr.bf16.mxu0 0
        %3190 = vmatpush1.bf16.msra.mxu0 %v3177
        %3191 = vmatprep.subr.bf16.mxu0 0
        %3192 = vmatpush1.bf16.msra.mxu0 %v3176
        %3193 = vmatprep.subr.bf16.mxu0 0
        %3194 = vmatpush1.bf16.msra.mxu0 %v3175
        %3195 = vmatprep.subr.bf16.mxu0 0
        %3196 = vmatpush1.bf16.msra.mxu0 %v3174
        %3197 = vmatprep.subr.bf16.mxu0 0
        %3198 = vmatpush1.bf16.msra.mxu0 %v3173
        %3199 = vmatprep.subr.bf16.mxu0 0
        %3200 = vmatpush1.bf16.msra.mxu0 %v3172
        %3201 = vmatprep.subr.bf16.mxu0 0
        %3202 = vmatpush1.bf16.msra.mxu0 %v3171
        %3203 = vmatprep.subr.bf16.mxu0 0
        %3204 = vmatpush2.bf16.msra.mxu0 0
        %3205 = vmatprep.subr.bf16.mxu0 0
        %3206 = vmatpush2.bf16.msra.mxu0 0
        %3207 = vmatprep.subr.bf16.mxu0 0
        %3208 = vmatpush2.bf16.msra.mxu0 0
        %3209 = vmatprep.subr.bf16.mxu0 0
        %3210 = vmatpush2.bf16.msra.mxu0 0
        %3211 = vmatprep.subr.bf16.mxu0 0
        %3212 = vmatpush2.bf16.msra.mxu0 0
        %3213 = vmatprep.subr.bf16.mxu0 0
        %3214 = vmatpush2.bf16.msra.mxu0 0
        %3215 = vmatprep.subr.bf16.mxu0 0
        %3216 = vmatpush2.bf16.msra.mxu0 0
        %3217 = vmatprep.subr.bf16.mxu0 0
        %3218 = vmatpush2.bf16.msra.mxu0 0
        %3219 = vmatprep.mubr.bf16.mxu0 0
        %3220 = vmatmul.mubr.bf16.gmra.mxu0 %v2417
        %v3221 = vpop.f32.mrf.mxu0
        %v3222 = vadd.f32 0.0, %v3221
        %v3223 = vpop.f32.mrf.mxu0
        %v3224 = vpop.f32.mrf.mxu0
        %v3225 = vadd.f32 0.0, %v3224
        %v3226 = vpop.f32.mrf.mxu0
        %3227 = vdwg.mxu0
        %v3228 = vadd.f32 %v3121, %v3222
        %v3229 = vadd.f32 %v3122, %v3225
        %v3230 = vld [vmem:[#allocation3 + $0x240] sm:$0xf]
        %v3231 = vld [vmem:[#allocation3 + $0x244] sm:$0xf]
        %v3232 = vld [vmem:[#allocation3 + $0x248] sm:$0xf]
        %v3233 = vld [vmem:[#allocation3 + $0x24c] sm:$0xf]
        %v3234 = vld [vmem:[#allocation3 + $0x250] sm:$0xf]
        %v3235 = vld [vmem:[#allocation3 + $0x254] sm:$0xf]
        %v3236 = vld [vmem:[#allocation3 + $0x258] sm:$0xf]
        %v3237 = vld [vmem:[#allocation3 + $0x25c] sm:$0xf]
        %v3238 = vld [vmem:[#allocation3 + $0x260] sm:$0xf]
        %v3239 = vld [vmem:[#allocation3 + $0x264] sm:$0xf]
        %v3240 = vld [vmem:[#allocation3 + $0x268] sm:$0xf]
        %v3241 = vld [vmem:[#allocation3 + $0x26c] sm:$0xf]
        %v3242 = vld [vmem:[#allocation3 + $0x270] sm:$0xf]
        %v3243 = vld [vmem:[#allocation3 + $0x274] sm:$0xf]
        %v3244 = vld [vmem:[#allocation3 + $0x278] sm:$0xf]
        %v3245 = vld [vmem:[#allocation3 + $0x27c] sm:$0xf]
        %v3262 = vunpack.c.l.b16 %v3230
        %v3263 = vunpack.c.l.b16 %v3231
        %v3264 = vunpack.c.l.b16 %v3232
        %v3265 = vunpack.c.l.b16 %v3233
        %v3266 = vunpack.c.l.b16 %v3234
        %v3267 = vunpack.c.l.b16 %v3235
        %v3268 = vunpack.c.l.b16 %v3236
        %v3269 = vunpack.c.l.b16 %v3237
        %v3270 = vunpack.c.l.b16 %v3238
        %v3271 = vunpack.c.l.b16 %v3239
        %v3272 = vunpack.c.l.b16 %v3240
        %v3273 = vunpack.c.l.b16 %v3241
        %v3274 = vunpack.c.l.b16 %v3242
        %v3275 = vunpack.c.l.b16 %v3243
        %v3276 = vunpack.c.l.b16 %v3244
        %v3277 = vunpack.c.l.b16 %v3245
        %v3278 = vpack.c.b16 %v3263, %v3262
        %v3279 = vpack.c.b16 %v3265, %v3264
        %v3280 = vpack.c.b16 %v3267, %v3266
        %v3281 = vpack.c.b16 %v3269, %v3268
        %v3282 = vpack.c.b16 %v3271, %v3270
        %v3283 = vpack.c.b16 %v3273, %v3272
        %v3284 = vpack.c.b16 %v3275, %v3274
        %v3285 = vpack.c.b16 %v3277, %v3276
        %3294 = vmatprep.subr.bf16.mxu0 0
        %3295 = vmatpush1.bf16.msra.mxu0 %v3285
        %3296 = vmatprep.subr.bf16.mxu0 0
        %3297 = vmatpush1.bf16.msra.mxu0 %v3284
        %3298 = vmatprep.subr.bf16.mxu0 0
        %3299 = vmatpush1.bf16.msra.mxu0 %v3283
        %3300 = vmatprep.subr.bf16.mxu0 0
        %3301 = vmatpush1.bf16.msra.mxu0 %v3282
        %3302 = vmatprep.subr.bf16.mxu0 0
        %3303 = vmatpush1.bf16.msra.mxu0 %v3281
        %3304 = vmatprep.subr.bf16.mxu0 0
        %3305 = vmatpush1.bf16.msra.mxu0 %v3280
        %3306 = vmatprep.subr.bf16.mxu0 0
        %3307 = vmatpush1.bf16.msra.mxu0 %v3279
        %3308 = vmatprep.subr.bf16.mxu0 0
        %3309 = vmatpush1.bf16.msra.mxu0 %v3278
        %3310 = vmatprep.subr.bf16.mxu0 0
        %3311 = vmatpush2.bf16.msra.mxu0 0
        %3312 = vmatprep.subr.bf16.mxu0 0
        %3313 = vmatpush2.bf16.msra.mxu0 0
        %3314 = vmatprep.subr.bf16.mxu0 0
        %3315 = vmatpush2.bf16.msra.mxu0 0
        %3316 = vmatprep.subr.bf16.mxu0 0
        %3317 = vmatpush2.bf16.msra.mxu0 0
        %3318 = vmatprep.subr.bf16.mxu0 0
        %3319 = vmatpush2.bf16.msra.mxu0 0
        %3320 = vmatprep.subr.bf16.mxu0 0
        %3321 = vmatpush2.bf16.msra.mxu0 0
        %3322 = vmatprep.subr.bf16.mxu0 0
        %3323 = vmatpush2.bf16.msra.mxu0 0
        %3324 = vmatprep.subr.bf16.mxu0 0
        %3325 = vmatpush2.bf16.msra.mxu0 0
        %3326 = vmatprep.mubr.bf16.mxu0 0
        %3327 = vmatmul.mubr.bf16.gmra.mxu0 %v2527
        %v3328 = vpop.f32.mrf.mxu0
        %v3329 = vadd.f32 0.0, %v3328
        %v3330 = vpop.f32.mrf.mxu0
        %v3331 = vpop.f32.mrf.mxu0
        %v3332 = vadd.f32 0.0, %v3331
        %v3333 = vpop.f32.mrf.mxu0
        %3334 = vdwg.mxu0
        %v3335 = vadd.f32 %v3228, %v3329
        %v3336 = vadd.f32 %v3229, %v3332
        %v3338 = vsel %vm2639, %v3336, 0
        %3340 = vmatprep.subr.mxu0 0.0
        %3341 = vmatpush1.msra.mxu0 0.0
        %3342 = vmatprep.subr.mxu0 0.0
        %3343 = vmatpush1.msra.mxu0 0.0
        %3344 = vmatprep.subr.mxu0 0.0
        %3345 = vmatpush1.msra.mxu0 0.0
        %3346 = vmatprep.subr.mxu0 0.0
        %3347 = vmatpush1.msra.mxu0 0.0
        %3348 = vmatprep.subr.mxu0 0.0
        %3349 = vmatpush1.msra.mxu0 0.0
        %3350 = vmatprep.subr.mxu0 0.0
        %3351 = vmatpush1.msra.mxu0 0.0
        %3352 = vmatprep.subr.mxu0 0.0
        %3353 = vmatpush1.msra.mxu0 0.0
        %3354 = vmatprep.subr.mxu0 0.0
        %3355 = vmatpush1.msra.mxu0 0.0
        %3356 = vmatprep.subr.mxu0 0.0
        %3357 = vmatpush1.msra.mxu0 0.0
        %3358 = vmatprep.subr.mxu0 0.0
        %3359 = vmatpush1.msra.mxu0 0.0
        %3360 = vmatprep.subr.mxu0 0.0
        %3361 = vmatpush1.msra.mxu0 0.0
        %3362 = vmatprep.subr.mxu0 0.0
        %3363 = vmatpush1.msra.mxu0 0.0
        %3364 = vmatprep.subr.mxu0 0.0
        %3365 = vmatpush1.msra.mxu0 0.0
        %3366 = vmatprep.subr.mxu0 0.0
        %3367 = vmatpush1.msra.mxu0 0.0
        %3368 = vmatprep.subr.mxu0 0.0
        %3369 = vmatpush1.msra.mxu0 %v3338
        %3370 = vmatprep.subr.mxu0 0.0
        %3371 = vmatpush1.msra.mxu0 %v3335
        %3372 = vmatprep.subr.mxu0 0.0
        %3373 = vmatpush2.msra.mxu0 0.0
        %3374 = vmatprep.subr.mxu0 0.0
        %3375 = vmatpush2.msra.mxu0 0.0
        %3376 = vmatprep.subr.mxu0 0.0
        %3377 = vmatpush2.msra.mxu0 0.0
        %3378 = vmatprep.subr.mxu0 0.0
        %3379 = vmatpush2.msra.mxu0 0.0
        %3380 = vmatprep.subr.mxu0 0.0
        %3381 = vmatpush2.msra.mxu0 0.0
        %3382 = vmatprep.subr.mxu0 0.0
        %3383 = vmatpush2.msra.mxu0 0.0
        %3384 = vmatprep.subr.mxu0 0.0
        %3385 = vmatpush2.msra.mxu0 0.0
        %3386 = vmatprep.subr.mxu0 0.0
        %3387 = vmatpush2.msra.mxu0 0.0
        %3388 = vmatprep.subr.mxu0 0.0
        %3389 = vmatpush2.msra.mxu0 0.0
        %3390 = vmatprep.subr.mxu0 0.0
        %3391 = vmatpush2.msra.mxu0 0.0
        %3392 = vmatprep.subr.mxu0 0.0
        %3393 = vmatpush2.msra.mxu0 0.0
        %3394 = vmatprep.subr.mxu0 0.0
        %3395 = vmatpush2.msra.mxu0 0.0
        %3396 = vmatprep.subr.mxu0 0.0
        %3397 = vmatpush2.msra.mxu0 0.0
        %3398 = vmatprep.subr.mxu0 0.0
        %3399 = vmatpush2.msra.mxu0 0.0
        %3400 = vmatprep.subr.mxu0 0.0
        %3401 = vmatpush2.msra.mxu0 0.0
        %3402 = vmatprep.subr.mxu0 0.0
        %3403 = vmatpush2.msra.mxu0 0.0
        %3404 = vmatprep.mubr.f32.mxu0 0.0
        %3405 = vmatmul.mubr.f32.gmra.mxu0 %v2637
        %v3406 = vpop.f32.mrf.mxu0
        %v3407 = vadd.f32 0.0, %v3406
        %v3408 = vpop.f32.mrf.mxu0
        %3409 = vdwg.mxu0
        %3410 = vmatprep.subr.mxu0 0.0
        %3411 = vmatpush1.msra.mxu0 0.0
        %3412 = vmatprep.subr.mxu0 0.0
        %3413 = vmatpush1.msra.mxu0 0.0
        %3414 = vmatprep.subr.mxu0 0.0
        %3415 = vmatpush1.msra.mxu0 0.0
        %3416 = vmatprep.subr.mxu0 0.0
        %3417 = vmatpush1.msra.mxu0 0.0
        %3418 = vmatprep.subr.mxu0 0.0
        %3419 = vmatpush1.msra.mxu0 0.0
        %3420 = vmatprep.subr.mxu0 0.0
        %3421 = vmatpush1.msra.mxu0 0.0
        %3422 = vmatprep.subr.mxu0 0.0
        %3423 = vmatpush1.msra.mxu0 0.0
        %3424 = vmatprep.subr.mxu0 0.0
        %3425 = vmatpush1.msra.mxu0 0.0
        %3426 = vmatprep.subr.mxu0 0.0
        %3427 = vmatpush1.msra.mxu0 0.0
        %3428 = vmatprep.subr.mxu0 0.0
        %3429 = vmatpush1.msra.mxu0 0.0
        %3430 = vmatprep.subr.mxu0 0.0
        %3431 = vmatpush1.msra.mxu0 0.0
        %3432 = vmatprep.subr.mxu0 0.0
        %3433 = vmatpush1.msra.mxu0 0.0
        %3434 = vmatprep.subr.mxu0 0.0
        %3435 = vmatpush1.msra.mxu0 0.0
        %3436 = vmatprep.subr.mxu0 0.0
        %3437 = vmatpush1.msra.mxu0 0.0
        %3438 = vmatprep.subr.mxu0 0.0
        %3439 = vmatpush1.msra.mxu0 %v3338
        %3440 = vmatprep.subr.mxu0 0.0
        %3441 = vmatpush1.msra.mxu0 %v3335
        %3442 = vmatprep.subr.mxu0 0.0
        %3443 = vmatpush2.msra.mxu0 0.0
        %3444 = vmatprep.subr.mxu0 0.0
        %3445 = vmatpush2.msra.mxu0 0.0
        %3446 = vmatprep.subr.mxu0 0.0
        %3447 = vmatpush2.msra.mxu0 0.0
        %3448 = vmatprep.subr.mxu0 0.0
        %3449 = vmatpush2.msra.mxu0 0.0
        %3450 = vmatprep.subr.mxu0 0.0
        %3451 = vmatpush2.msra.mxu0 0.0
        %3452 = vmatprep.subr.mxu0 0.0
        %3453 = vmatpush2.msra.mxu0 0.0
        %3454 = vmatprep.subr.mxu0 0.0
        %3455 = vmatpush2.msra.mxu0 0.0
        %3456 = vmatprep.subr.mxu0 0.0
        %3457 = vmatpush2.msra.mxu0 0.0
        %3458 = vmatprep.subr.mxu0 0.0
        %3459 = vmatpush2.msra.mxu0 0.0
        %3460 = vmatprep.subr.mxu0 0.0
        %3461 = vmatpush2.msra.mxu0 0.0
        %3462 = vmatprep.subr.mxu0 0.0
        %3463 = vmatpush2.msra.mxu0 0.0
        %3464 = vmatprep.subr.mxu0 0.0
        %3465 = vmatpush2.msra.mxu0 0.0
        %3466 = vmatprep.subr.mxu0 0.0
        %3467 = vmatpush2.msra.mxu0 0.0
        %3468 = vmatprep.subr.mxu0 0.0
        %3469 = vmatpush2.msra.mxu0 0.0
        %3470 = vmatprep.subr.mxu0 0.0
        %3471 = vmatpush2.msra.mxu0 0.0
        %3472 = vmatprep.subr.mxu0 0.0
        %3473 = vmatpush2.msra.mxu0 0.0
        %3474 = vmatprep.mubr.f32.mxu0 0.0
        %3475 = vmatmul.mubr.f32.gmra.mxu0 %v2714
        %v3476 = vpop.f32.mrf.mxu0
        %v3477 = vadd.f32 0.0, %v3476
        %v3478 = vpop.f32.mrf.mxu0
        %3479 = vdwg.mxu0
        %v3480 = vmax.f32 %v3407, %v3477
        %3481 = vrot.lane.b32.xlu0 %v3480, 112
        %v3482 = vpop.permute.xlu0 %3481
        %v3483 = vmax.f32 %v3480, %v3482
        %v3484 = vld [vmem:[#allocation8 + $0x1b0] sm:$0xff]
        %v3485 = vld [vmem:[#allocation8 + $0x1b8] sm:$0xff]
        %v3486 = vld [vmem:[#allocation8 + $0x1c0] sm:$0xff]
        %v3487 = vld [vmem:[#allocation8 + $0x1c8] sm:$0xff]
        %v3488 = vld [vmem:[#allocation8 + $0x1d0] sm:$0xff]
        %v3489 = vld [vmem:[#allocation8 + $0x1d8] sm:$0xff]
        %v3490 = vld [vmem:[#allocation8 + $0x1e0] sm:$0xff]
        %v3491 = vld [vmem:[#allocation8 + $0x1e8] sm:$0xff]
        %v3492 = vld [vmem:[#allocation8 + $0x1f0] sm:$0xff]
        %v3493 = vld [vmem:[#allocation8 + $0x1f8] sm:$0xff]
        %v3494 = vld [vmem:[#allocation8 + $0x200] sm:$0xff]
        %v3495 = vld [vmem:[#allocation8 + $0x208] sm:$0xff]
        %v3496 = vld [vmem:[#allocation8 + $0x210] sm:$0xff]
        %v3497 = vld [vmem:[#allocation8 + $0x218] sm:$0xff]
        %v3498 = vld [vmem:[#allocation8 + $0x220] sm:$0xff]
        %v3499 = vld [vmem:[#allocation8 + $0x228] sm:$0xff]
        %3500 = vmatprep.subr.mxu0 0.0
        %3501 = vmatpush1.msra.mxu0 %v3499
        %3502 = vmatprep.subr.mxu0 0.0
        %3503 = vmatpush1.msra.mxu0 %v3498
        %3504 = vmatprep.subr.mxu0 0.0
        %3505 = vmatpush1.msra.mxu0 %v3497
        %3506 = vmatprep.subr.mxu0 0.0
        %3507 = vmatpush1.msra.mxu0 %v3496
        %3508 = vmatprep.subr.mxu0 0.0
        %3509 = vmatpush1.msra.mxu0 %v3495
        %3510 = vmatprep.subr.mxu0 0.0
        %3511 = vmatpush1.msra.mxu0 %v3494
        %3512 = vmatprep.subr.mxu0 0.0
        %3513 = vmatpush1.msra.mxu0 %v3493
        %3514 = vmatprep.subr.mxu0 0.0
        %3515 = vmatpush1.msra.mxu0 %v3492
        %3516 = vmatprep.subr.mxu0 0.0
        %3517 = vmatpush1.msra.mxu0 %v3491
        %3518 = vmatprep.subr.mxu0 0.0
        %3519 = vmatpush1.msra.mxu0 %v3490
        %3520 = vmatprep.subr.mxu0 0.0
        %3521 = vmatpush1.msra.mxu0 %v3489
        %3522 = vmatprep.subr.mxu0 0.0
        %3523 = vmatpush1.msra.mxu0 %v3488
        %3524 = vmatprep.subr.mxu0 0.0
        %3525 = vmatpush1.msra.mxu0 %v3487
        %3526 = vmatprep.subr.mxu0 0.0
        %3527 = vmatpush1.msra.mxu0 %v3486
        %3528 = vmatprep.subr.mxu0 0.0
        %3529 = vmatpush1.msra.mxu0 %v3485
        %3530 = vmatprep.subr.mxu0 0.0
        %3531 = vmatpush1.msra.mxu0 %v3484
        %3532 = vmatprep.subr.mxu0 0.0
        %3533 = vmatpush2.msra.mxu0 0.0
        %3534 = vmatprep.subr.mxu0 0.0
        %3535 = vmatpush2.msra.mxu0 0.0
        %3536 = vmatprep.subr.mxu0 0.0
        %3537 = vmatpush2.msra.mxu0 0.0
        %3538 = vmatprep.subr.mxu0 0.0
        %3539 = vmatpush2.msra.mxu0 0.0
        %3540 = vmatprep.subr.mxu0 0.0
        %3541 = vmatpush2.msra.mxu0 0.0
        %3542 = vmatprep.subr.mxu0 0.0
        %3543 = vmatpush2.msra.mxu0 0.0
        %3544 = vmatprep.subr.mxu0 0.0
        %3545 = vmatpush2.msra.mxu0 0.0
        %3546 = vmatprep.subr.mxu0 0.0
        %3547 = vmatpush2.msra.mxu0 0.0
        %3548 = vmatprep.subr.mxu0 0.0
        %3549 = vmatpush2.msra.mxu0 0.0
        %3550 = vmatprep.subr.mxu0 0.0
        %3551 = vmatpush2.msra.mxu0 0.0
        %3552 = vmatprep.subr.mxu0 0.0
        %3553 = vmatpush2.msra.mxu0 0.0
        %3554 = vmatprep.subr.mxu0 0.0
        %3555 = vmatpush2.msra.mxu0 0.0
        %3556 = vmatprep.subr.mxu0 0.0
        %3557 = vmatpush2.msra.mxu0 0.0
        %3558 = vmatprep.subr.mxu0 0.0
        %3559 = vmatpush2.msra.mxu0 0.0
        %3560 = vmatprep.subr.mxu0 0.0
        %3561 = vmatpush2.msra.mxu0 0.0
        %3562 = vmatprep.subr.mxu0 0.0
        %3563 = vmatpush2.msra.mxu0 0.0
        %3564 = vmatprep.mubr.f32.mxu0 0.0
        %3565 = vmatmul.mubr.f32.gmra.mxu0 %v3483
        %v3566 = vpop.f32.mrf.mxu0
        %v3567 = vadd.f32 0.0, %v3566
        %v3568 = vpop.f32.mrf.mxu0
        %3569 = vdwg.mxu0
        %3570 = vmatprep.subr.mxu0 0.0
        %3571 = vmatpush1.msra.mxu0 %v2805
        %3572 = vmatprep.subr.mxu0 0.0
        %3573 = vmatpush1.msra.mxu0 %v2804
        %3574 = vmatprep.subr.mxu0 0.0
        %3575 = vmatpush1.msra.mxu0 %v2803
        %3576 = vmatprep.subr.mxu0 0.0
        %3577 = vmatpush1.msra.mxu0 %v2802
        %3578 = vmatprep.subr.mxu0 0.0
        %3579 = vmatpush1.msra.mxu0 %v2801
        %3580 = vmatprep.subr.mxu0 0.0
        %3581 = vmatpush1.msra.mxu0 %v2800
        %3582 = vmatprep.subr.mxu0 0.0
        %3583 = vmatpush1.msra.mxu0 %v2799
        %3584 = vmatprep.subr.mxu0 0.0
        %3585 = vmatpush1.msra.mxu0 %v2798
        %3586 = vmatprep.subr.mxu0 0.0
        %3587 = vmatpush1.msra.mxu0 %v2797
        %3588 = vmatprep.subr.mxu0 0.0
        %3589 = vmatpush1.msra.mxu0 %v2796
        %3590 = vmatprep.subr.mxu0 0.0
        %3591 = vmatpush1.msra.mxu0 %v2795
        %3592 = vmatprep.subr.mxu0 0.0
        %3593 = vmatpush1.msra.mxu0 %v2794
        %3594 = vmatprep.subr.mxu0 0.0
        %3595 = vmatpush1.msra.mxu0 %v2793
        %3596 = vmatprep.subr.mxu0 0.0
        %3597 = vmatpush1.msra.mxu0 %v2792
        %3598 = vmatprep.subr.mxu0 0.0
        %3599 = vmatpush1.msra.mxu0 %v2791
        %3600 = vmatprep.subr.mxu0 0.0
        %3601 = vmatpush1.msra.mxu0 %v2790
        %3602 = vmatprep.subr.mxu0 0.0
        %3603 = vmatpush2.msra.mxu0 0.0
        %3604 = vmatprep.subr.mxu0 0.0
        %3605 = vmatpush2.msra.mxu0 0.0
        %3606 = vmatprep.subr.mxu0 0.0
        %3607 = vmatpush2.msra.mxu0 0.0
        %3608 = vmatprep.subr.mxu0 0.0
        %3609 = vmatpush2.msra.mxu0 0.0
        %3610 = vmatprep.subr.mxu0 0.0
        %3611 = vmatpush2.msra.mxu0 0.0
        %3612 = vmatprep.subr.mxu0 0.0
        %3613 = vmatpush2.msra.mxu0 0.0
        %3614 = vmatprep.subr.mxu0 0.0
        %3615 = vmatpush2.msra.mxu0 0.0
        %3616 = vmatprep.subr.mxu0 0.0
        %3617 = vmatpush2.msra.mxu0 0.0
        %3618 = vmatprep.subr.mxu0 0.0
        %3619 = vmatpush2.msra.mxu0 0.0
        %3620 = vmatprep.subr.mxu0 0.0
        %3621 = vmatpush2.msra.mxu0 0.0
        %3622 = vmatprep.subr.mxu0 0.0
        %3623 = vmatpush2.msra.mxu0 0.0
        %3624 = vmatprep.subr.mxu0 0.0
        %3625 = vmatpush2.msra.mxu0 0.0
        %3626 = vmatprep.subr.mxu0 0.0
        %3627 = vmatpush2.msra.mxu0 0.0
        %3628 = vmatprep.subr.mxu0 0.0
        %3629 = vmatpush2.msra.mxu0 0.0
        %3630 = vmatprep.subr.mxu0 0.0
        %3631 = vmatpush2.msra.mxu0 0.0
        %3632 = vmatprep.subr.mxu0 0.0
        %3633 = vmatpush2.msra.mxu0 0.0
        %3634 = vmatprep.mubr.f32.mxu0 0.0
        %3635 = vmatmul.mubr.f32.gmra.mxu0 %v2789
        %v3636 = vpop.f32.mrf.mxu0
        %v3637 = vadd.f32 %v3567, %v3636
        %v3638 = vpop.f32.mrf.mxu0
        %3639 = vdwg.mxu0
        %v3640 = vlaneseq
        %v3641 = vshrl.u32 %v3640, 7
        %v3642 = vsub.s32 0, %v3641
        %v3643 = vrot.slane %v373, %v3642
        %v3644 = vadd.f32 %v3637, %v3643
        %v3645 = vmax.f32 %v3644, 0.0
        %v3646 = vpack.c.bf16 %v3645, %v3645
        %v3647 = vld [vmem:[%s3] sm:$0xf]
        %v3648 = vld [vmem:[%s3 + $0x4] sm:$0xf]
        %v3649 = vld [vmem:[%s3 + $0x8] sm:$0xf]
        %v3650 = vld [vmem:[%s3 + $0xc] sm:$0xf]
        %v3651 = vld [vmem:[%s3 + $0x10] sm:$0xf]
        %v3652 = vld [vmem:[%s3 + $0x14] sm:$0xf]
        %v3653 = vld [vmem:[%s3 + $0x18] sm:$0xf]
        %v3654 = vld [vmem:[%s3 + $0x1c] sm:$0xf]
        %v3655 = vld [vmem:[%s3 + $0x20] sm:$0xf]
        %v3656 = vld [vmem:[%s3 + $0x24] sm:$0xf]
        %v3657 = vld [vmem:[%s3 + $0x28] sm:$0xf]
        %v3658 = vld [vmem:[%s3 + $0x2c] sm:$0xf]
        %v3659 = vld [vmem:[%s3 + $0x30] sm:$0xf]
        %v3660 = vld [vmem:[%s3 + $0x34] sm:$0xf]
        %v3661 = vld [vmem:[%s3 + $0x38] sm:$0xf]
        %v3662 = vld [vmem:[%s3 + $0x3c] sm:$0xf]
        %v3663 = vld [vmem:[%s3 + $0x40] sm:$0xf]
        %v3664 = vld [vmem:[%s3 + $0x44] sm:$0xf]
        %v3665 = vld [vmem:[%s3 + $0x48] sm:$0xf]
        %v3666 = vld [vmem:[%s3 + $0x4c] sm:$0xf]
        %v3667 = vld [vmem:[%s3 + $0x50] sm:$0xf]
        %v3668 = vld [vmem:[%s3 + $0x54] sm:$0xf]
        %v3669 = vld [vmem:[%s3 + $0x58] sm:$0xf]
        %v3670 = vld [vmem:[%s3 + $0x5c] sm:$0xf]
        %v3671 = vld [vmem:[%s3 + $0x60] sm:$0xf]
        %v3672 = vld [vmem:[%s3 + $0x64] sm:$0xf]
        %v3673 = vld [vmem:[%s3 + $0x68] sm:$0xf]
        %v3674 = vld [vmem:[%s3 + $0x6c] sm:$0xf]
        %v3675 = vld [vmem:[%s3 + $0x70] sm:$0xf]
        %v3676 = vld [vmem:[%s3 + $0x74] sm:$0xf]
        %v3677 = vld [vmem:[%s3 + $0x78] sm:$0xf]
        %v3678 = vld [vmem:[%s3 + $0x7c] sm:$0xf]
        %v3680 = vshrl.u32 %v3646, 16
        %v3699 = vunpack.c.l.b16 %v3663
        %v3700 = vunpack.c.l.b16 %v3664
        %v3701 = vunpack.c.l.b16 %v3665
        %v3702 = vunpack.c.l.b16 %v3666
        %v3703 = vunpack.c.l.b16 %v3667
        %v3704 = vunpack.c.l.b16 %v3668
        %v3705 = vunpack.c.l.b16 %v3669
        %v3706 = vunpack.c.l.b16 %v3670
        %v3707 = vunpack.c.l.b16 %v3671
        %v3708 = vunpack.c.l.b16 %v3672
        %v3709 = vunpack.c.l.b16 %v3673
        %v3710 = vunpack.c.l.b16 %v3674
        %v3711 = vunpack.c.l.b16 %v3675
        %v3712 = vunpack.c.l.b16 %v3676
        %v3713 = vunpack.c.l.b16 %v3677
        %v3714 = vunpack.c.l.b16 %v3678
        %v3715 = vpack.c.b16 %v3700, %v3699
        %v3716 = vpack.c.b16 %v3702, %v3701
        %v3717 = vpack.c.b16 %v3704, %v3703
        %v3718 = vpack.c.b16 %v3706, %v3705
        %v3719 = vpack.c.b16 %v3708, %v3707
        %v3720 = vpack.c.b16 %v3710, %v3709
        %v3721 = vpack.c.b16 %v3712, %v3711
        %v3722 = vpack.c.b16 %v3714, %v3713
        %3731 = vmatprep.subr.bf16.mxu0 0
        %3732 = vmatpush1.bf16.msra.mxu0 %v3722
        %3733 = vmatprep.subr.bf16.mxu0 0
        %3734 = vmatpush1.bf16.msra.mxu0 %v3721
        %3735 = vmatprep.subr.bf16.mxu0 0
        %3736 = vmatpush1.bf16.msra.mxu0 %v3720
        %3737 = vmatprep.subr.bf16.mxu0 0
        %3738 = vmatpush1.bf16.msra.mxu0 %v3719
        %3739 = vmatprep.subr.bf16.mxu0 0
        %3740 = vmatpush1.bf16.msra.mxu0 %v3718
        %3741 = vmatprep.subr.bf16.mxu0 0
        %3742 = vmatpush1.bf16.msra.mxu0 %v3717
        %3743 = vmatprep.subr.bf16.mxu0 0
        %3744 = vmatpush1.bf16.msra.mxu0 %v3716
        %3745 = vmatprep.subr.bf16.mxu0 0
        %3746 = vmatpush1.bf16.msra.mxu0 %v3715
        %3747 = vmatprep.subr.bf16.mxu0 0
        %3748 = vmatpush2.bf16.msra.mxu0 0
        %3749 = vmatprep.subr.bf16.mxu0 0
        %3750 = vmatpush2.bf16.msra.mxu0 0
        %3751 = vmatprep.subr.bf16.mxu0 0
        %3752 = vmatpush2.bf16.msra.mxu0 0
        %3753 = vmatprep.subr.bf16.mxu0 0
        %3754 = vmatpush2.bf16.msra.mxu0 0
        %3755 = vmatprep.subr.bf16.mxu0 0
        %3756 = vmatpush2.bf16.msra.mxu0 0
        %3757 = vmatprep.subr.bf16.mxu0 0
        %3758 = vmatpush2.bf16.msra.mxu0 0
        %3759 = vmatprep.subr.bf16.mxu0 0
        %3760 = vmatpush2.bf16.msra.mxu0 0
        %3761 = vmatprep.subr.bf16.mxu0 0
        %3762 = vmatpush2.bf16.msra.mxu0 0
        %3763 = vmatprep.mubr.bf16.mxu0 0
        %3764 = vmatmul.mubr.bf16.gmra.mxu0 %v3680
        %v3765 = vpop.f32.mrf.mxu0
        %v3766 = vadd.f32 0.0, %v3765
        %v3767 = vpop.f32.mrf.mxu0
        %v3768 = vpop.f32.mrf.mxu0
        %v3769 = vpop.f32.mrf.mxu0
        %3770 = vdwg.mxu0
        %v3787 = vunpack.c.l.b16 %v3647
        %v3788 = vunpack.c.l.b16 %v3648
        %v3789 = vunpack.c.l.b16 %v3649
        %v3790 = vunpack.c.l.b16 %v3650
        %v3791 = vunpack.c.l.b16 %v3651
        %v3792 = vunpack.c.l.b16 %v3652
        %v3793 = vunpack.c.l.b16 %v3653
        %v3794 = vunpack.c.l.b16 %v3654
        %v3795 = vunpack.c.l.b16 %v3655
        %v3796 = vunpack.c.l.b16 %v3656
        %v3797 = vunpack.c.l.b16 %v3657
        %v3798 = vunpack.c.l.b16 %v3658
        %v3799 = vunpack.c.l.b16 %v3659
        %v3800 = vunpack.c.l.b16 %v3660
        %v3801 = vunpack.c.l.b16 %v3661
        %v3802 = vunpack.c.l.b16 %v3662
        %v3803 = vpack.c.b16 %v3788, %v3787
        %v3804 = vpack.c.b16 %v3790, %v3789
        %v3805 = vpack.c.b16 %v3792, %v3791
        %v3806 = vpack.c.b16 %v3794, %v3793
        %v3807 = vpack.c.b16 %v3796, %v3795
        %v3808 = vpack.c.b16 %v3798, %v3797
        %v3809 = vpack.c.b16 %v3800, %v3799
        %v3810 = vpack.c.b16 %v3802, %v3801
        %3819 = vmatprep.subr.bf16.mxu0 0
        %3820 = vmatpush1.bf16.msra.mxu0 %v3810
        %3821 = vmatprep.subr.bf16.mxu0 0
        %3822 = vmatpush1.bf16.msra.mxu0 %v3809
        %3823 = vmatprep.subr.bf16.mxu0 0
        %3824 = vmatpush1.bf16.msra.mxu0 %v3808
        %3825 = vmatprep.subr.bf16.mxu0 0
        %3826 = vmatpush1.bf16.msra.mxu0 %v3807
        %3827 = vmatprep.subr.bf16.mxu0 0
        %3828 = vmatpush1.bf16.msra.mxu0 %v3806
        %3829 = vmatprep.subr.bf16.mxu0 0
        %3830 = vmatpush1.bf16.msra.mxu0 %v3805
        %3831 = vmatprep.subr.bf16.mxu0 0
        %3832 = vmatpush1.bf16.msra.mxu0 %v3804
        %3833 = vmatprep.subr.bf16.mxu0 0
        %3834 = vmatpush1.bf16.msra.mxu0 %v3803
        %3835 = vmatprep.subr.bf16.mxu0 0
        %3836 = vmatpush2.bf16.msra.mxu0 0
        %3837 = vmatprep.subr.bf16.mxu0 0
        %3838 = vmatpush2.bf16.msra.mxu0 0
        %3839 = vmatprep.subr.bf16.mxu0 0
        %3840 = vmatpush2.bf16.msra.mxu0 0
        %3841 = vmatprep.subr.bf16.mxu0 0
        %3842 = vmatpush2.bf16.msra.mxu0 0
        %3843 = vmatprep.subr.bf16.mxu0 0
        %3844 = vmatpush2.bf16.msra.mxu0 0
        %3845 = vmatprep.subr.bf16.mxu0 0
        %3846 = vmatpush2.bf16.msra.mxu0 0
        %3847 = vmatprep.subr.bf16.mxu0 0
        %3848 = vmatpush2.bf16.msra.mxu0 0
        %3849 = vmatprep.subr.bf16.mxu0 0
        %3850 = vmatpush2.bf16.msra.mxu0 0
        %3851 = vmatprep.mubr.bf16.mxu0 0
        %3852 = vmatmul.mubr.bf16.gmra.mxu0 %v3646
        %v3853 = vpop.f32.mrf.mxu0
        %v3854 = vadd.f32 %v3766, %v3853
        %v3855 = vpop.f32.mrf.mxu0
        %v3856 = vpop.f32.mrf.mxu0
        %v3857 = vpop.f32.mrf.mxu0
        %3858 = vdwg.mxu0
        %v3859 = vld [vmem:[%s3 + $0x80] sm:$0xf]
        %v3860 = vld [vmem:[%s3 + $0x84] sm:$0xf]
        %v3861 = vld [vmem:[%s3 + $0x88] sm:$0xf]
        %v3862 = vld [vmem:[%s3 + $0x8c] sm:$0xf]
        %v3863 = vld [vmem:[%s3 + $0x90] sm:$0xf]
        %v3864 = vld [vmem:[%s3 + $0x94] sm:$0xf]
        %v3865 = vld [vmem:[%s3 + $0x98] sm:$0xf]
        %v3866 = vld [vmem:[%s3 + $0x9c] sm:$0xf]
        %v3867 = vld [vmem:[%s3 + $0xa0] sm:$0xf]
        %v3868 = vld [vmem:[%s3 + $0xa4] sm:$0xf]
        %v3869 = vld [vmem:[%s3 + $0xa8] sm:$0xf]
        %v3870 = vld [vmem:[%s3 + $0xac] sm:$0xf]
        %v3871 = vld [vmem:[%s3 + $0xb0] sm:$0xf]
        %v3872 = vld [vmem:[%s3 + $0xb4] sm:$0xf]
        %v3873 = vld [vmem:[%s3 + $0xb8] sm:$0xf]
        %v3874 = vld [vmem:[%s3 + $0xbc] sm:$0xf]
        %v3876 = vrot.slane %v3646, 1
        %v3894 = vunpack.c.l.b16 %v3859
        %v3895 = vunpack.c.l.b16 %v3860
        %v3896 = vunpack.c.l.b16 %v3861
        %v3897 = vunpack.c.l.b16 %v3862
        %v3898 = vunpack.c.l.b16 %v3863
        %v3899 = vunpack.c.l.b16 %v3864
        %v3900 = vunpack.c.l.b16 %v3865
        %v3901 = vunpack.c.l.b16 %v3866
        %v3902 = vunpack.c.l.b16 %v3867
        %v3903 = vunpack.c.l.b16 %v3868
        %v3904 = vunpack.c.l.b16 %v3869
        %v3905 = vunpack.c.l.b16 %v3870
        %v3906 = vunpack.c.l.b16 %v3871
        %v3907 = vunpack.c.l.b16 %v3872
        %v3908 = vunpack.c.l.b16 %v3873
        %v3909 = vunpack.c.l.b16 %v3874
        %v3910 = vpack.c.b16 %v3895, %v3894
        %v3911 = vpack.c.b16 %v3897, %v3896
        %v3912 = vpack.c.b16 %v3899, %v3898
        %v3913 = vpack.c.b16 %v3901, %v3900
        %v3914 = vpack.c.b16 %v3903, %v3902
        %v3915 = vpack.c.b16 %v3905, %v3904
        %v3916 = vpack.c.b16 %v3907, %v3906
        %v3917 = vpack.c.b16 %v3909, %v3908
        %3926 = vmatprep.subr.bf16.mxu0 0
        %3927 = vmatpush1.bf16.msra.mxu0 %v3917
        %3928 = vmatprep.subr.bf16.mxu0 0
        %3929 = vmatpush1.bf16.msra.mxu0 %v3916
        %3930 = vmatprep.subr.bf16.mxu0 0
        %3931 = vmatpush1.bf16.msra.mxu0 %v3915
        %3932 = vmatprep.subr.bf16.mxu0 0
        %3933 = vmatpush1.bf16.msra.mxu0 %v3914
        %3934 = vmatprep.subr.bf16.mxu0 0
        %3935 = vmatpush1.bf16.msra.mxu0 %v3913
        %3936 = vmatprep.subr.bf16.mxu0 0
        %3937 = vmatpush1.bf16.msra.mxu0 %v3912
        %3938 = vmatprep.subr.bf16.mxu0 0
        %3939 = vmatpush1.bf16.msra.mxu0 %v3911
        %3940 = vmatprep.subr.bf16.mxu0 0
        %3941 = vmatpush1.bf16.msra.mxu0 %v3910
        %3942 = vmatprep.subr.bf16.mxu0 0
        %3943 = vmatpush2.bf16.msra.mxu0 0
        %3944 = vmatprep.subr.bf16.mxu0 0
        %3945 = vmatpush2.bf16.msra.mxu0 0
        %3946 = vmatprep.subr.bf16.mxu0 0
        %3947 = vmatpush2.bf16.msra.mxu0 0
        %3948 = vmatprep.subr.bf16.mxu0 0
        %3949 = vmatpush2.bf16.msra.mxu0 0
        %3950 = vmatprep.subr.bf16.mxu0 0
        %3951 = vmatpush2.bf16.msra.mxu0 0
        %3952 = vmatprep.subr.bf16.mxu0 0
        %3953 = vmatpush2.bf16.msra.mxu0 0
        %3954 = vmatprep.subr.bf16.mxu0 0
        %3955 = vmatpush2.bf16.msra.mxu0 0
        %3956 = vmatprep.subr.bf16.mxu0 0
        %3957 = vmatpush2.bf16.msra.mxu0 0
        %3958 = vmatprep.mubr.bf16.mxu0 0
        %3959 = vmatmul.mubr.bf16.gmra.mxu0 %v3876
        %v3960 = vpop.f32.mrf.mxu0
        %v3961 = vadd.f32 0.0, %v3960
        %v3962 = vpop.f32.mrf.mxu0
        %v3963 = vpop.f32.mrf.mxu0
        %v3964 = vpop.f32.mrf.mxu0
        %3965 = vdwg.mxu0
        %v3966 = vadd.f32 %v3854, %v3961
        %v3967 = vld [vmem:[%s3 + $0xc0] sm:$0xf]
        %v3968 = vld [vmem:[%s3 + $0xc4] sm:$0xf]
        %v3969 = vld [vmem:[%s3 + $0xc8] sm:$0xf]
        %v3970 = vld [vmem:[%s3 + $0xcc] sm:$0xf]
        %v3971 = vld [vmem:[%s3 + $0xd0] sm:$0xf]
        %v3972 = vld [vmem:[%s3 + $0xd4] sm:$0xf]
        %v3973 = vld [vmem:[%s3 + $0xd8] sm:$0xf]
        %v3974 = vld [vmem:[%s3 + $0xdc] sm:$0xf]
        %v3975 = vld [vmem:[%s3 + $0xe0] sm:$0xf]
        %v3976 = vld [vmem:[%s3 + $0xe4] sm:$0xf]
        %v3977 = vld [vmem:[%s3 + $0xe8] sm:$0xf]
        %v3978 = vld [vmem:[%s3 + $0xec] sm:$0xf]
        %v3979 = vld [vmem:[%s3 + $0xf0] sm:$0xf]
        %v3980 = vld [vmem:[%s3 + $0xf4] sm:$0xf]
        %v3981 = vld [vmem:[%s3 + $0xf8] sm:$0xf]
        %v3982 = vld [vmem:[%s3 + $0xfc] sm:$0xf]
        %v3983 = vrot.slane %v3680, 1
        %v4001 = vunpack.c.l.b16 %v3967
        %v4002 = vunpack.c.l.b16 %v3968
        %v4003 = vunpack.c.l.b16 %v3969
        %v4004 = vunpack.c.l.b16 %v3970
        %v4005 = vunpack.c.l.b16 %v3971
        %v4006 = vunpack.c.l.b16 %v3972
        %v4007 = vunpack.c.l.b16 %v3973
        %v4008 = vunpack.c.l.b16 %v3974
        %v4009 = vunpack.c.l.b16 %v3975
        %v4010 = vunpack.c.l.b16 %v3976
        %v4011 = vunpack.c.l.b16 %v3977
        %v4012 = vunpack.c.l.b16 %v3978
        %v4013 = vunpack.c.l.b16 %v3979
        %v4014 = vunpack.c.l.b16 %v3980
        %v4015 = vunpack.c.l.b16 %v3981
        %v4016 = vunpack.c.l.b16 %v3982
        %v4017 = vpack.c.b16 %v4002, %v4001
        %v4018 = vpack.c.b16 %v4004, %v4003
        %v4019 = vpack.c.b16 %v4006, %v4005
        %v4020 = vpack.c.b16 %v4008, %v4007
        %v4021 = vpack.c.b16 %v4010, %v4009
        %v4022 = vpack.c.b16 %v4012, %v4011
        %v4023 = vpack.c.b16 %v4014, %v4013
        %v4024 = vpack.c.b16 %v4016, %v4015
        %4033 = vmatprep.subr.bf16.mxu0 0
        %4034 = vmatpush1.bf16.msra.mxu0 %v4024
        %4035 = vmatprep.subr.bf16.mxu0 0
        %4036 = vmatpush1.bf16.msra.mxu0 %v4023
        %4037 = vmatprep.subr.bf16.mxu0 0
        %4038 = vmatpush1.bf16.msra.mxu0 %v4022
        %4039 = vmatprep.subr.bf16.mxu0 0
        %4040 = vmatpush1.bf16.msra.mxu0 %v4021
        %4041 = vmatprep.subr.bf16.mxu0 0
        %4042 = vmatpush1.bf16.msra.mxu0 %v4020
        %4043 = vmatprep.subr.bf16.mxu0 0
        %4044 = vmatpush1.bf16.msra.mxu0 %v4019
        %4045 = vmatprep.subr.bf16.mxu0 0
        %4046 = vmatpush1.bf16.msra.mxu0 %v4018
        %4047 = vmatprep.subr.bf16.mxu0 0
        %4048 = vmatpush1.bf16.msra.mxu0 %v4017
        %4049 = vmatprep.subr.bf16.mxu0 0
        %4050 = vmatpush2.bf16.msra.mxu0 0
        %4051 = vmatprep.subr.bf16.mxu0 0
        %4052 = vmatpush2.bf16.msra.mxu0 0
        %4053 = vmatprep.subr.bf16.mxu0 0
        %4054 = vmatpush2.bf16.msra.mxu0 0
        %4055 = vmatprep.subr.bf16.mxu0 0
        %4056 = vmatpush2.bf16.msra.mxu0 0
        %4057 = vmatprep.subr.bf16.mxu0 0
        %4058 = vmatpush2.bf16.msra.mxu0 0
        %4059 = vmatprep.subr.bf16.mxu0 0
        %4060 = vmatpush2.bf16.msra.mxu0 0
        %4061 = vmatprep.subr.bf16.mxu0 0
        %4062 = vmatpush2.bf16.msra.mxu0 0
        %4063 = vmatprep.subr.bf16.mxu0 0
        %4064 = vmatpush2.bf16.msra.mxu0 0
        %4065 = vmatprep.mubr.bf16.mxu0 0
        %4066 = vmatmul.mubr.bf16.gmra.mxu0 %v3983
        %v4067 = vpop.f32.mrf.mxu0
        %v4068 = vadd.f32 0.0, %v4067
        %v4069 = vpop.f32.mrf.mxu0
        %v4070 = vpop.f32.mrf.mxu0
        %v4071 = vpop.f32.mrf.mxu0
        %4072 = vdwg.mxu0
        %v4073 = vadd.f32 %v3966, %v4068
        %v4074 = vld [vmem:[%s3 + $0x100] sm:$0xf]
        %v4075 = vld [vmem:[%s3 + $0x104] sm:$0xf]
        %v4076 = vld [vmem:[%s3 + $0x108] sm:$0xf]
        %v4077 = vld [vmem:[%s3 + $0x10c] sm:$0xf]
        %v4078 = vld [vmem:[%s3 + $0x110] sm:$0xf]
        %v4079 = vld [vmem:[%s3 + $0x114] sm:$0xf]
        %v4080 = vld [vmem:[%s3 + $0x118] sm:$0xf]
        %v4081 = vld [vmem:[%s3 + $0x11c] sm:$0xf]
        %v4082 = vld [vmem:[%s3 + $0x120] sm:$0xf]
        %v4083 = vld [vmem:[%s3 + $0x124] sm:$0xf]
        %v4084 = vld [vmem:[%s3 + $0x128] sm:$0xf]
        %v4085 = vld [vmem:[%s3 + $0x12c] sm:$0xf]
        %v4086 = vld [vmem:[%s3 + $0x130] sm:$0xf]
        %v4087 = vld [vmem:[%s3 + $0x134] sm:$0xf]
        %v4088 = vld [vmem:[%s3 + $0x138] sm:$0xf]
        %v4089 = vld [vmem:[%s3 + $0x13c] sm:$0xf]
        %v4090 = vrot.slane %v3646, 2
        %v4108 = vunpack.c.l.b16 %v4074
        %v4109 = vunpack.c.l.b16 %v4075
        %v4110 = vunpack.c.l.b16 %v4076
        %v4111 = vunpack.c.l.b16 %v4077
        %v4112 = vunpack.c.l.b16 %v4078
        %v4113 = vunpack.c.l.b16 %v4079
        %v4114 = vunpack.c.l.b16 %v4080
        %v4115 = vunpack.c.l.b16 %v4081
        %v4116 = vunpack.c.l.b16 %v4082
        %v4117 = vunpack.c.l.b16 %v4083
        %v4118 = vunpack.c.l.b16 %v4084
        %v4119 = vunpack.c.l.b16 %v4085
        %v4120 = vunpack.c.l.b16 %v4086
        %v4121 = vunpack.c.l.b16 %v4087
        %v4122 = vunpack.c.l.b16 %v4088
        %v4123 = vunpack.c.l.b16 %v4089
        %v4124 = vpack.c.b16 %v4109, %v4108
        %v4125 = vpack.c.b16 %v4111, %v4110
        %v4126 = vpack.c.b16 %v4113, %v4112
        %v4127 = vpack.c.b16 %v4115, %v4114
        %v4128 = vpack.c.b16 %v4117, %v4116
        %v4129 = vpack.c.b16 %v4119, %v4118
        %v4130 = vpack.c.b16 %v4121, %v4120
        %v4131 = vpack.c.b16 %v4123, %v4122
        %4140 = vmatprep.subr.bf16.mxu0 0
        %4141 = vmatpush1.bf16.msra.mxu0 %v4131
        %4142 = vmatprep.subr.bf16.mxu0 0
        %4143 = vmatpush1.bf16.msra.mxu0 %v4130
        %4144 = vmatprep.subr.bf16.mxu0 0
        %4145 = vmatpush1.bf16.msra.mxu0 %v4129
        %4146 = vmatprep.subr.bf16.mxu0 0
        %4147 = vmatpush1.bf16.msra.mxu0 %v4128
        %4148 = vmatprep.subr.bf16.mxu0 0
        %4149 = vmatpush1.bf16.msra.mxu0 %v4127
        %4150 = vmatprep.subr.bf16.mxu0 0
        %4151 = vmatpush1.bf16.msra.mxu0 %v4126
        %4152 = vmatprep.subr.bf16.mxu0 0
        %4153 = vmatpush1.bf16.msra.mxu0 %v4125
        %4154 = vmatprep.subr.bf16.mxu0 0
        %4155 = vmatpush1.bf16.msra.mxu0 %v4124
        %4156 = vmatprep.subr.bf16.mxu0 0
        %4157 = vmatpush2.bf16.msra.mxu0 0
        %4158 = vmatprep.subr.bf16.mxu0 0
        %4159 = vmatpush2.bf16.msra.mxu0 0
        %4160 = vmatprep.subr.bf16.mxu0 0
        %4161 = vmatpush2.bf16.msra.mxu0 0
        %4162 = vmatprep.subr.bf16.mxu0 0
        %4163 = vmatpush2.bf16.msra.mxu0 0
        %4164 = vmatprep.subr.bf16.mxu0 0
        %4165 = vmatpush2.bf16.msra.mxu0 0
        %4166 = vmatprep.subr.bf16.mxu0 0
        %4167 = vmatpush2.bf16.msra.mxu0 0
        %4168 = vmatprep.subr.bf16.mxu0 0
        %4169 = vmatpush2.bf16.msra.mxu0 0
        %4170 = vmatprep.subr.bf16.mxu0 0
        %4171 = vmatpush2.bf16.msra.mxu0 0
        %4172 = vmatprep.mubr.bf16.mxu0 0
        %4173 = vmatmul.mubr.bf16.gmra.mxu0 %v4090
        %v4174 = vpop.f32.mrf.mxu0
        %v4175 = vadd.f32 0.0, %v4174
        %v4176 = vpop.f32.mrf.mxu0
        %v4177 = vpop.f32.mrf.mxu0
        %v4178 = vpop.f32.mrf.mxu0
        %4179 = vdwg.mxu0
        %v4180 = vadd.f32 %v4073, %v4175
        %v4181 = vadd.f32 %v4180, %v374
        %v4182 = vmax.f32 %v4181, 0.0
        %v4183 = vpack.c.bf16 %v4182, %v4182
        %v4184 = vld [vmem:[#allocation5] sm:$0xf]
        %v4185 = vld [vmem:[#allocation5 + $0x4] sm:$0xf]
        %v4186 = vld [vmem:[#allocation5 + $0x8] sm:$0xf]
        %v4187 = vld [vmem:[#allocation5 + $0xc] sm:$0xf]
        %v4188 = vld [vmem:[#allocation5 + $0x10] sm:$0xf]
        %v4189 = vld [vmem:[#allocation5 + $0x14] sm:$0xf]
        %v4190 = vld [vmem:[#allocation5 + $0x18] sm:$0xf]
        %v4191 = vld [vmem:[#allocation5 + $0x1c] sm:$0xf]
        %v4192 = vld [vmem:[#allocation5 + $0x20] sm:$0xf]
        %v4193 = vld [vmem:[#allocation5 + $0x24] sm:$0xf]
        %v4194 = vld [vmem:[#allocation5 + $0x28] sm:$0xf]
        %v4195 = vld [vmem:[#allocation5 + $0x2c] sm:$0xf]
        %v4196 = vld [vmem:[#allocation5 + $0x30] sm:$0xf]
        %v4197 = vld [vmem:[#allocation5 + $0x34] sm:$0xf]
        %v4198 = vld [vmem:[#allocation5 + $0x38] sm:$0xf]
        %v4199 = vld [vmem:[#allocation5 + $0x3c] sm:$0xf]
        %v4216 = vunpack.c.l.b16 %v4184
        %v4217 = vunpack.c.l.b16 %v4185
        %v4218 = vunpack.c.l.b16 %v4186
        %v4219 = vunpack.c.l.b16 %v4187
        %v4220 = vunpack.c.l.b16 %v4188
        %v4221 = vunpack.c.l.b16 %v4189
        %v4222 = vunpack.c.l.b16 %v4190
        %v4223 = vunpack.c.l.b16 %v4191
        %v4224 = vunpack.c.l.b16 %v4192
        %v4225 = vunpack.c.l.b16 %v4193
        %v4226 = vunpack.c.l.b16 %v4194
        %v4227 = vunpack.c.l.b16 %v4195
        %v4228 = vunpack.c.l.b16 %v4196
        %v4229 = vunpack.c.l.b16 %v4197
        %v4230 = vunpack.c.l.b16 %v4198
        %v4231 = vunpack.c.l.b16 %v4199
        %v4232 = vpack.c.b16 %v4217, %v4216
        %v4233 = vpack.c.b16 %v4219, %v4218
        %v4234 = vpack.c.b16 %v4221, %v4220
        %v4235 = vpack.c.b16 %v4223, %v4222
        %v4236 = vpack.c.b16 %v4225, %v4224
        %v4237 = vpack.c.b16 %v4227, %v4226
        %v4238 = vpack.c.b16 %v4229, %v4228
        %v4239 = vpack.c.b16 %v4231, %v4230
        %4248 = vmatprep.subr.bf16.mxu0 0
        %4249 = vmatpush1.bf16.msra.mxu0 %v4239
        %4250 = vmatprep.subr.bf16.mxu0 0
        %4251 = vmatpush1.bf16.msra.mxu0 %v4238
        %4252 = vmatprep.subr.bf16.mxu0 0
        %4253 = vmatpush1.bf16.msra.mxu0 %v4237
        %4254 = vmatprep.subr.bf16.mxu0 0
        %4255 = vmatpush1.bf16.msra.mxu0 %v4236
        %4256 = vmatprep.subr.bf16.mxu0 0
        %4257 = vmatpush1.bf16.msra.mxu0 %v4235
        %4258 = vmatprep.subr.bf16.mxu0 0
        %4259 = vmatpush1.bf16.msra.mxu0 %v4234
        %4260 = vmatprep.subr.bf16.mxu0 0
        %4261 = vmatpush1.bf16.msra.mxu0 %v4233
        %4262 = vmatprep.subr.bf16.mxu0 0
        %4263 = vmatpush1.bf16.msra.mxu0 %v4232
        %4264 = vmatprep.subr.bf16.mxu0 0
        %4265 = vmatpush2.bf16.msra.mxu0 0
        %4266 = vmatprep.subr.bf16.mxu0 0
        %4267 = vmatpush2.bf16.msra.mxu0 0
        %4268 = vmatprep.subr.bf16.mxu0 0
        %4269 = vmatpush2.bf16.msra.mxu0 0
        %4270 = vmatprep.subr.bf16.mxu0 0
        %4271 = vmatpush2.bf16.msra.mxu0 0
        %4272 = vmatprep.subr.bf16.mxu0 0
        %4273 = vmatpush2.bf16.msra.mxu0 0
        %4274 = vmatprep.subr.bf16.mxu0 0
        %4275 = vmatpush2.bf16.msra.mxu0 0
        %4276 = vmatprep.subr.bf16.mxu0 0
        %4277 = vmatpush2.bf16.msra.mxu0 0
        %4278 = vmatprep.subr.bf16.mxu0 0
        %4279 = vmatpush2.bf16.msra.mxu0 0
        %4280 = vmatprep.mubr.bf16.mxu0 0
        %4281 = vmatmul.mubr.bf16.gmra.mxu0 %v4183
        %v4282 = vpop.f32.mrf.mxu0
        %v4283 = vadd.f32 %v375, %v4282
        %v4284 = vpop.f32.mrf.mxu0
        %v4285 = vpop.f32.mrf.mxu0
        %v4286 = vpop.f32.mrf.mxu0
        %4287 = vdwg.mxu0
        %v4288 = vmax.f32 %v4283, 0.0
        %v4289 = vpack.c.bf16 %v4288, %v4288
        %v4290 = vld [vmem:[#allocation7] sm:$0xf]
        %v4291 = vld [vmem:[#allocation7 + $0x4] sm:$0xf]
        %v4292 = vld [vmem:[#allocation7 + $0x8] sm:$0xf]
        %v4293 = vld [vmem:[#allocation7 + $0xc] sm:$0xf]
        %v4294 = vld [vmem:[#allocation7 + $0x10] sm:$0xf]
        %v4295 = vld [vmem:[#allocation7 + $0x14] sm:$0xf]
        %v4296 = vld [vmem:[#allocation7 + $0x18] sm:$0xf]
        %v4297 = vld [vmem:[#allocation7 + $0x1c] sm:$0xf]
        %v4298 = vld [vmem:[#allocation7 + $0x20] sm:$0xf]
        %v4299 = vld [vmem:[#allocation7 + $0x24] sm:$0xf]
        %v4300 = vld [vmem:[#allocation7 + $0x28] sm:$0xf]
        %v4301 = vld [vmem:[#allocation7 + $0x2c] sm:$0xf]
        %v4302 = vld [vmem:[#allocation7 + $0x30] sm:$0xf]
        %v4303 = vld [vmem:[#allocation7 + $0x34] sm:$0xf]
        %v4304 = vld [vmem:[#allocation7 + $0x38] sm:$0xf]
        %v4305 = vld [vmem:[#allocation7 + $0x3c] sm:$0xf]
        %v4322 = vunpack.c.l.b16 %v4290
        %v4323 = vunpack.c.l.b16 %v4291
        %v4324 = vunpack.c.l.b16 %v4292
        %v4325 = vunpack.c.l.b16 %v4293
        %v4326 = vunpack.c.l.b16 %v4294
        %v4327 = vunpack.c.l.b16 %v4295
        %v4328 = vunpack.c.l.b16 %v4296
        %v4329 = vunpack.c.l.b16 %v4297
        %v4330 = vunpack.c.l.b16 %v4298
        %v4331 = vunpack.c.l.b16 %v4299
        %v4332 = vunpack.c.l.b16 %v4300
        %v4333 = vunpack.c.l.b16 %v4301
        %v4334 = vunpack.c.l.b16 %v4302
        %v4335 = vunpack.c.l.b16 %v4303
        %v4336 = vunpack.c.l.b16 %v4304
        %v4337 = vunpack.c.l.b16 %v4305
        %v4338 = vpack.c.b16 %v4323, %v4322
        %v4339 = vpack.c.b16 %v4325, %v4324
        %v4340 = vpack.c.b16 %v4327, %v4326
        %v4341 = vpack.c.b16 %v4329, %v4328
        %v4342 = vpack.c.b16 %v4331, %v4330
        %v4343 = vpack.c.b16 %v4333, %v4332
        %v4344 = vpack.c.b16 %v4335, %v4334
        %v4345 = vpack.c.b16 %v4337, %v4336
        %4354 = vmatprep.subr.bf16.mxu0 0
        %4355 = vmatpush1.bf16.msra.mxu0 %v4345
        %4356 = vmatprep.subr.bf16.mxu0 0
        %4357 = vmatpush1.bf16.msra.mxu0 %v4344
        %4358 = vmatprep.subr.bf16.mxu0 0
        %4359 = vmatpush1.bf16.msra.mxu0 %v4343
        %4360 = vmatprep.subr.bf16.mxu0 0
        %4361 = vmatpush1.bf16.msra.mxu0 %v4342
        %4362 = vmatprep.subr.bf16.mxu0 0
        %4363 = vmatpush1.bf16.msra.mxu0 %v4341
        %4364 = vmatprep.subr.bf16.mxu0 0
        %4365 = vmatpush1.bf16.msra.mxu0 %v4340
        %4366 = vmatprep.subr.bf16.mxu0 0
        %4367 = vmatpush1.bf16.msra.mxu0 %v4339
        %4368 = vmatprep.subr.bf16.mxu0 0
        %4369 = vmatpush1.bf16.msra.mxu0 %v4338
        %4370 = vmatprep.subr.bf16.mxu0 0
        %4371 = vmatpush2.bf16.msra.mxu0 0
        %4372 = vmatprep.subr.bf16.mxu0 0
        %4373 = vmatpush2.bf16.msra.mxu0 0
        %4374 = vmatprep.subr.bf16.mxu0 0
        %4375 = vmatpush2.bf16.msra.mxu0 0
        %4376 = vmatprep.subr.bf16.mxu0 0
        %4377 = vmatpush2.bf16.msra.mxu0 0
        %4378 = vmatprep.subr.bf16.mxu0 0
        %4379 = vmatpush2.bf16.msra.mxu0 0
        %4380 = vmatprep.subr.bf16.mxu0 0
        %4381 = vmatpush2.bf16.msra.mxu0 0
        %4382 = vmatprep.subr.bf16.mxu0 0
        %4383 = vmatpush2.bf16.msra.mxu0 0
        %4384 = vmatprep.subr.bf16.mxu0 0
        %4385 = vmatpush2.bf16.msra.mxu0 0
        %4386 = vmatprep.mubr.bf16.mxu0 0
        %4387 = vmatmul.mubr.bf16.gmra.mxu0 %v4289
        %v4388 = vpop.f32.mrf.mxu0
        %v4389 = vadd.f32 %v376, %v4388
        %v4390 = vpop.f32.mrf.mxu0
        %v4391 = vpop.f32.mrf.mxu0
        %v4392 = vpop.f32.mrf.mxu0
        %4393 = vdwg.mxu0
        %v4394 = vlaneseq
        %v4395 = vshrl.u32 %v4394, 7
        %v4396 = vsub.s32 0, %v4395
        %v4397 = vrot.slane %v4389, %v4396
        %4398 = vst [vmem:[%s364] sm:$0xff] %v4397
        %p4399 = scmp.lt.s32.totalorder %s22, 1
        %s4400 = scalar_select %p4399, %s22, 1
        %s4401 = smul.addr %s4400, 8
        %s4402 = scalar_lea.vmem %s8, %s4401
        // Predicated region
        $region69: #{net_forward.1} parent=51 // pred_check
          %p4403 = pneg %p213
        $region70: #{net_forward.1} parent=51 // pred_check_branch
          %4405 = sbr.rel (%p4403) target = $region72
        $region71: #{net_forward.1} parent=51 // pred_region
          _
        $region72: #{net_forward.1} parent=51 // pred_fallthru
          _
      $region52: #{net_forward.1} parent=5 // pred_fallthru
        _
      %p4406 = scmp.le.s32.totalorder 2, %s17
      // Predicated region
      $region73: #{net_forward.1} parent=5 // pred_check
        %p4407 = pneg %p4406
      $region74: #{net_forward.1} parent=5 // pred_check_branch
        %4409 = sbr.rel (%p4407) target = $region76
      $region75: #{net_forward.1} parent=5 // pred_region
        %s4410 = ssub.s32 %s17, 2
        // Predicated region
        $region77: #{net_forward.1} parent=75 // pred_check
          %p4411 = pneg %p219
        $region78: #{net_forward.1} parent=75 // pred_check_branch
          %4413 = sbr.rel (%p4411) target = $region80
        $region79: #{net_forward.1} parent=75 // pred_region
          %p4414 = scmp.lt.s32.totalorder %s23, 1
          %s4415 = scalar_select %p4414, %s23, 1
          %s4416 = smul.addr %s4415, 8
          %s4417 = scalar_lea.vmem %s8, %s4416
        $region80: #{net_forward.1} parent=75 // pred_fallthru
          _
      $region76: #{net_forward.1} parent=5 // pred_fallthru
        _
    $region6: #{net_forward.1} parent=1 // loop_footer
      %s21 = sadd.s32 1, %s17
    $region7: #{net_forward.1} parent=1 // loop_footer_branch
      %16 = sbr.rel target = $region3
    $region8: #{net_forward.1} parent=1 // loop_exit
      _
    %4418 = vsyncpa [#allocation4], 1
    %s4419 = scalar_lea.sflag [#allocation4], 1
    %4420 = vsyncpa %s4419, 1
    %4421 = vsyncpa [#allocation6], 1
    %4422 = vsyncpa [#allocation9], 1

</llo_original>
